<compile_context>
chip_gen: v7x
topology: tpu7x:2x2x1
jax: 0.10.0
libtpu: 0.0.40
codegen_flags: <defaults>
</compile_context>

<pallas_src>
import jax
import jax.numpy as jnp
import numpy as np
from jax.experimental import pallas as pl

# ------------------------- model hyper-parameters ---------------------------
B = 2          # batch
S = 8          # sequence length
D_IN = 16      # input features per timestep
D_MODEL = 32   # transformer width
H = 4          # attention heads
DH = D_MODEL // H
D_FF = 64      # FFN hidden
D_OUT = 4      # predicted formants per timestep
NB = 2 * B          # original + reconstruction stacked along the batch axis
N_ROWS = NB * S     # all token rows processed in one fused pass (= 32)
AVG_WEIGHT = 0.0
EPS = 1e-5

# Packed-vector layout: one (10, 3*D_MODEL) array, one bias/LN vector per row.
_VEC_W = 3 * D_MODEL
(_B_EMB, _B_QKV, _B_O, _LN1_G, _LN1_B,
 _B_1, _B_2, _LN2_G, _LN2_B, _B_HEAD) = range(10)


# ------------------------------ shared helpers -------------------------------
def _layernorm(x, g, b):
    mu = jnp.mean(x, axis=-1, keepdims=True)
    var = jnp.mean((x - mu) * (x - mu), axis=-1, keepdims=True)
    return (x - mu) * jax.lax.rsqrt(var + EPS) * g + b


# ------------------------------- Pallas kernel --------------------------------
def _loss_kernel(x_ref, pe_ref, w_emb_ref, wqkv_ref, wo_ref, w1_ref, w2_ref,
                 w_head_ref, vec_ref, out_ref):
    # x_ref: (N_ROWS, D_IN) row-stacked tokens: [orig b0..bB-1 ; recon b0..bB-1]
    x = x_ref[...]
    vp = vec_ref[...]                                  # (10, 3*D_MODEL)

    def vec(i, w):                                     # (1, w) bias / LN row
        return vp[i:i + 1, 0:w]

    # ---- embed + positional encoding (all 2*B*S rows at once) ----
    h = (jnp.dot(x, w_emb_ref[...], preferred_element_type=jnp.float32)
         + vec(_B_EMB, D_MODEL) + pe_ref[...])         # (N_ROWS, D_MODEL)

    # ---- fused QKV projection ----
    qkv = (jnp.dot(h, wqkv_ref[...], preferred_element_type=jnp.float32)
           + vec(_B_QKV, 3 * D_MODEL))                 # (N_ROWS, 3*D_MODEL)
    q = qkv[:, 0:D_MODEL].reshape(NB, S, D_MODEL)
    k = qkv[:, D_MODEL:2 * D_MODEL].reshape(NB, S, D_MODEL)
    v = qkv[:, 2 * D_MODEL:3 * D_MODEL].reshape(NB, S, D_MODEL)

    # ---- multi-head self-attention, batched over the NB stacked sequences ----
    # (per-sequence S x S blocks: original/reconstruction/batch never mix)
    scale = 1.0 / float(DH) ** 0.5
    heads = []
    for hh in range(H):                                # unrolled, H=4
        sl = slice(hh * DH, (hh + 1) * DH)
        qh, kh, vh = q[:, :, sl], k[:, :, sl], v[:, :, sl]
        s = jnp.einsum("bsd,btd->bst", qh, kh,
                       preferred_element_type=jnp.float32) * scale
        s = s - jnp.max(s, axis=-1, keepdims=True)
        e = jnp.exp(s)
        denom = jnp.sum(e, axis=-1, keepdims=True)
        # EUP approximate reciprocal + one Newton step (f32-accurate, no divide).
        inv = pl.reciprocal(denom, approx=True)
        inv = inv * (2.0 - denom * inv)
        a = e * inv
        heads.append(jnp.einsum("bst,btd->bsd", a, vh,
                                preferred_element_type=jnp.float32))
    attn = jnp.concatenate(heads, axis=-1).reshape(N_ROWS, D_MODEL)
    attn = (jnp.dot(attn, wo_ref[...], preferred_element_type=jnp.float32)
            + vec(_B_O, D_MODEL))
    h = _layernorm(h + attn, vec(_LN1_G, D_MODEL), vec(_LN1_B, D_MODEL))

    # ---- feed-forward ----
    ff = jnp.maximum(
        jnp.dot(h, w1_ref[...], preferred_element_type=jnp.float32)
        + vec(_B_1, D_FF), 0.0)
    ff = (jnp.dot(ff, w2_ref[...], preferred_element_type=jnp.float32)
          + vec(_B_2, D_MODEL))
    h = _layernorm(h + ff, vec(_LN2_G, D_MODEL), vec(_LN2_B, D_MODEL))

    # ---- formant head ----
    pred = (jnp.dot(h, w_head_ref[...], preferred_element_type=jnp.float32)
            + vec(_B_HEAD, D_OUT))                     # (N_ROWS, D_OUT)

    # ---- 1/(avg_weight+1) * MSE(model(original), model(reconstruction)) ----
    d = pred[0:B * S, :] - pred[B * S:N_ROWS, :]
    ss = jnp.sum(jnp.sum(d * d, axis=1, keepdims=True), axis=0, keepdims=True)
    out_ref[...] = ss * jnp.float32((1.0 / (AVG_WEIGHT + 1.0)) / (B * S * D_OUT))


# ------------------------------- host wrapper ---------------------------------
def pack_transformer_params(p):
    """Fuse QKV weights and pack all (1, ·) bias/LN vectors into one array."""
    def row(vv):
        return jnp.pad(vv, ((0, 0), (0, _VEC_W - vv.shape[1])))

    vec = jnp.concatenate([
        row(p["b_emb"]),
        row(jnp.concatenate([p["bq"], p["bk"], p["bv"]], axis=1)),
        row(p["bo"]),
        row(p["ln1_g"]), row(p["ln1_b"]),
        row(p["b1"]), row(p["b2"]),
        row(p["ln2_g"]), row(p["ln2_b"]),
        row(p["b_head"]),
    ], axis=0)                                          # (10, 3*D_MODEL)
    return {
        "w_emb": p["w_emb"],
        "wqkv": jnp.concatenate([p["wq"], p["wk"], p["wv"]], axis=1),
        "wo": p["wo"],
        "w1": p["w1"],
        "w2": p["w2"],
        "w_head": p["w_head"],
        "vec": vec,
    }


@jax.jit
def transformer_formant_mse_loss(original, reconstruction, pe, packed):
    """original, reconstruction: (B, S, D_IN) float32 -> scalar float32."""
    # Layout plumbing only: stack original/reconstruction and the batch into a
    # single sublane-dense (2*B*S, D_IN) operand; single kernel invocation.
    x = jnp.concatenate([original, reconstruction], axis=0).reshape(N_ROWS, D_IN)
    pe_rep = jnp.tile(pe, (NB, 1))                      # (N_ROWS, D_MODEL)
    out = pl.pallas_call(
        _loss_kernel,
        out_shape=jax.ShapeDtypeStruct((1, 1), jnp.float32),
    )(x, pe_rep, packed["w_emb"], packed["wqkv"], packed["wo"],
      packed["w1"], packed["w2"], packed["w_head"], packed["vec"])
    # TODO(synk): if B ever grows beyond toy size, shard the batch over a
    # "parallel" grid axis with per-batch partial sums (v7x: 2 TensorCores).
    return out[0, 0]


# --------------------------- deterministic params -----------------------------
def _make_params(key):
    ks = jax.random.split(key, 16)
    rnd = lambda k, shape, s=0.1: (s * jax.random.normal(k, shape)).astype(jnp.float32)
    return {
        "w_emb": rnd(ks[0], (D_IN, D_MODEL)),
        "b_emb": rnd(ks[1], (1, D_MODEL)),
        "wq": rnd(ks[2], (D_MODEL, D_MODEL)),
        "bq": rnd(ks[3], (1, D_MODEL)),
        "wk": rnd(ks[4], (D_MODEL, D_MODEL)),
        "bk": rnd(ks[5], (1, D_MODEL)),
        "wv": rnd(ks[6], (D_MODEL, D_MODEL)),
        "bv": rnd(ks[7], (1, D_MODEL)),
        "wo": rnd(ks[8], (D_MODEL, D_MODEL)),
        "bo": rnd(ks[9], (1, D_MODEL)),
        "ln1_g": jnp.ones((1, D_MODEL), jnp.float32),
        "ln1_b": jnp.zeros((1, D_MODEL), jnp.float32),
        "w1": rnd(ks[10], (D_MODEL, D_FF)),
        "b1": rnd(ks[11], (1, D_FF)),
        "w2": rnd(ks[12], (D_FF, D_MODEL)),
        "b2": rnd(ks[13], (1, D_MODEL)),
        "ln2_g": jnp.ones((1, D_MODEL), jnp.float32),
        "ln2_b": jnp.zeros((1, D_MODEL), jnp.float32),
        "w_head": rnd(ks[14], (D_MODEL, D_OUT)),
        "b_head": rnd(ks[15], (1, D_OUT)),
    }


def _sinusoidal_pe(seq_len, d_model):
    pos = np.arange(seq_len)[:, None].astype(np.float32)
    div = np.exp(np.arange(0, d_model, 2).astype(np.float32) *
                 (-np.log(10000.0) / d_model))
    pe = np.zeros((seq_len, d_model), np.float32)
    pe[:, 0::2] = np.sin(pos * div)
    pe[:, 1::2] = np.cos(pos * div)
    return jnp.asarray(pe)


# --------------------------------- reference ----------------------------------
def _reference_forward(x, pe, p):
    h = x @ p["w_emb"] + p["b_emb"] + pe
    q = h @ p["wq"] + p["bq"]
    k = h @ p["wk"] + p["bk"]
    v = h @ p["wv"] + p["bv"]
    scale = 1.0 / float(DH) ** 0.5
    heads = []
    for hh in range(H):
        sl = slice(hh * DH, (hh + 1) * DH)
        s = (q[:, sl] @ k[:, sl].T) * scale
        s = s - jnp.max(s, axis=-1, keepdims=True)
        e = jnp.exp(s)
        a = e / jnp.sum(e, axis=-1, keepdims=True)
        heads.append(a @ v[:, sl])
    attn = jnp.concatenate(heads, axis=-1) @ p["wo"] + p["bo"]
    h = _layernorm(h + attn, p["ln1_g"], p["ln1_b"])
    ff = jnp.maximum(h @ p["w1"] + p["b1"], 0.0)
    ff = ff @ p["w2"] + p["b2"]
    h = _layernorm(h + ff, p["ln2_g"], p["ln2_b"])
    return h @ p["w_head"] + p["b_head"]


def _reference_loss(original, reconstruction, pe, params):
    fwd = jax.vmap(lambda xx: _reference_forward(xx, pe, params))
    pred_o = fwd(original)
    pred_r = fwd(reconstruction)
    return (1.0 / (AVG_WEIGHT + 1.0)) * jnp.mean((pred_o - pred_r) ** 2)


if __name__ == "__main__":
    key = jax.random.PRNGKey(0)
    k_par, k_orig, k_rec = jax.random.split(key, 3)

    params = _make_params(k_par)
    packed = pack_transformer_params(params)
    pe = _sinusoidal_pe(S, D_MODEL)

    original = jax.random.normal(k_orig, (B, S, D_IN), jnp.float32)
    reconstruction = original + 0.25 * jax.random.normal(
        k_rec, (B, S, D_IN), jnp.float32)

    loss = transformer_formant_mse_loss(original, reconstruction, pe, packed)
    loss = jax.block_until_ready(loss)

    ref = jax.block_until_ready(
        _reference_loss(original, reconstruction, pe, params))
    np.testing.assert_allclose(np.asarray(loss), np.asarray(ref),
                               rtol=5e-3, atol=1e-6)

    print("KERNEL_OK")
</pallas_src>

<mosaic_0001>
module attributes {stable_mosaic.version = 11 : i64} {
  func.func @_loss_kernel(%arg0: memref<32x16xf32, #tpu.memory_space<vmem>>, %arg1: memref<32x32xf32, #tpu.memory_space<vmem>>, %arg2: memref<16x32xf32, #tpu.memory_space<vmem>>, %arg3: memref<32x96xf32, #tpu.memory_space<vmem>>, %arg4: memref<32x32xf32, #tpu.memory_space<vmem>>, %arg5: memref<32x64xf32, #tpu.memory_space<vmem>>, %arg6: memref<64x32xf32, #tpu.memory_space<vmem>>, %arg7: memref<32x4xf32, #tpu.memory_space<vmem>>, %arg8: memref<10x96xf32, #tpu.memory_space<vmem>>, %arg9: memref<1x1xf32, #tpu.memory_space<vmem>>) attributes {dimension_semantics = [], scalar_prefetch = 0 : i64, scratch_operands = 0 : i64, tpu.core_type = #tpu.core_type<tc>} {
    %c0 = arith.constant 0 : index
    %c0_0 = arith.constant 0 : index
    %0 = vector.load %arg0[%c0, %c0_0] : memref<32x16xf32, #tpu.memory_space<vmem>>, vector<32x16xf32>
    %c0_1 = arith.constant 0 : index
    %c0_2 = arith.constant 0 : index
    %1 = vector.load %arg8[%c0_1, %c0_2] : memref<10x96xf32, #tpu.memory_space<vmem>>, vector<10x96xf32>
    %c0_3 = arith.constant 0 : index
    %c0_4 = arith.constant 0 : index
    %2 = vector.load %arg2[%c0_3, %c0_4] : memref<16x32xf32, #tpu.memory_space<vmem>>, vector<16x32xf32>
    %cst = arith.constant dense<0.000000e+00> : vector<32x32xf32>
    %3 = tpu.matmul %0, %2, %cst {dimension_numbers = #tpu.dot_dimension_numbers<[1], [0], [0], [1], [0, 0, 1, 1], [], []>} : vector<32x16xf32>, vector<16x32xf32>, vector<32x32xf32> -> vector<32x32xf32>
    %4 = vector.extract_strided_slice %1 {offsets = [0, 0], sizes = [1, 32], strides = [1, 1]} : vector<10x96xf32> to vector<1x32xf32>
    %5 = vector.broadcast %4 : vector<1x32xf32> to vector<32x32xf32>
    %6 = arith.addf %3, %5 : vector<32x32xf32>
    %c0_5 = arith.constant 0 : index
    %c0_6 = arith.constant 0 : index
    %7 = vector.load %arg1[%c0_5, %c0_6] : memref<32x32xf32, #tpu.memory_space<vmem>>, vector<32x32xf32>
    %8 = arith.addf %6, %7 : vector<32x32xf32>
    %c0_7 = arith.constant 0 : index
    %c0_8 = arith.constant 0 : index
    %9 = vector.load %arg3[%c0_7, %c0_8] : memref<32x96xf32, #tpu.memory_space<vmem>>, vector<32x96xf32>
    %cst_9 = arith.constant dense<0.000000e+00> : vector<32x96xf32>
    %10 = tpu.matmul %8, %9, %cst_9 {dimension_numbers = #tpu.dot_dimension_numbers<[1], [0], [0], [1], [0, 0, 1, 1], [], []>} : vector<32x32xf32>, vector<32x96xf32>, vector<32x96xf32> -> vector<32x96xf32>
    %11 = vector.extract_strided_slice %1 {offsets = [1, 0], sizes = [1, 96], strides = [1, 1]} : vector<10x96xf32> to vector<1x96xf32>
    %12 = vector.broadcast %11 : vector<1x96xf32> to vector<32x96xf32>
    %13 = arith.addf %10, %12 : vector<32x96xf32>
    %14 = vector.extract_strided_slice %13 {offsets = [0, 0], sizes = [32, 32], strides = [1, 1]} : vector<32x96xf32> to vector<32x32xf32>
    %15 = vector.shape_cast %14 : vector<32x32xf32> to vector<4x8x32xf32>
    %16 = vector.extract_strided_slice %13 {offsets = [0, 32], sizes = [32, 32], strides = [1, 1]} : vector<32x96xf32> to vector<32x32xf32>
    %17 = vector.shape_cast %16 : vector<32x32xf32> to vector<4x8x32xf32>
    %18 = vector.extract_strided_slice %13 {offsets = [0, 64], sizes = [32, 32], strides = [1, 1]} : vector<32x96xf32> to vector<32x32xf32>
    %19 = vector.shape_cast %18 : vector<32x32xf32> to vector<4x8x32xf32>
    %20 = vector.extract_strided_slice %15 {offsets = [0, 0, 0], sizes = [4, 8, 8], strides = [1, 1, 1]} : vector<4x8x32xf32> to vector<4x8x8xf32>
    %21 = vector.extract_strided_slice %17 {offsets = [0, 0, 0], sizes = [4, 8, 8], strides = [1, 1, 1]} : vector<4x8x32xf32> to vector<4x8x8xf32>
    %22 = vector.extract_strided_slice %19 {offsets = [0, 0, 0], sizes = [4, 8, 8], strides = [1, 1, 1]} : vector<4x8x32xf32> to vector<4x8x8xf32>
    "tpu.trace_start"() <{level = 10 : i32, message = "bsd,btd->bst"}> : () -> ()
    %cst_10 = arith.constant dense<0.000000e+00> : vector<4x8x8xf32>
    %23 = tpu.matmul %20, %21, %cst_10 {dimension_numbers = #tpu.dot_dimension_numbers<[2], [2], [1], [1], [0, 0, 0, 1, 1, 1], [0], [0]>} : vector<4x8x8xf32>, vector<4x8x8xf32>, vector<4x8x8xf32> -> vector<4x8x8xf32>
    "tpu.trace_stop"() : () -> ()
    %cst_11 = arith.constant 0.353553385 : f32
    %24 = vector.broadcast %cst_11 : f32 to vector<4x8x8xf32>
    %25 = arith.mulf %23, %24 : vector<4x8x8xf32>
    %cst_12 = arith.constant dense<0xFF800000> : vector<4x8xf32>
    %26 = vector.multi_reduction <maximumf>, %25, %cst_12 [2] : vector<4x8x8xf32> to vector<4x8xf32>
    %27 = vector.shape_cast %26 : vector<4x8xf32> to vector<4x8x1xf32>
    %28 = vector.broadcast %27 : vector<4x8x1xf32> to vector<4x8x8xf32>
    %29 = arith.subf %25, %28 : vector<4x8x8xf32>
    %30 = math.exp %29 : vector<4x8x8xf32>
    %cst_13 = arith.constant dense<0.000000e+00> : vector<4x8xf32>
    %31 = vector.multi_reduction <add>, %30, %cst_13 [2] : vector<4x8x8xf32> to vector<4x8xf32>
    %32 = vector.shape_cast %31 : vector<4x8xf32> to vector<4x8x1xf32>
    %33 = tpu.reciprocal %32 {approx = true} : vector<4x8x1xf32> -> vector<4x8x1xf32>
    %34 = arith.mulf %32, %33 : vector<4x8x1xf32>
    %cst_14 = arith.constant 2.000000e+00 : f32
    %35 = vector.broadcast %cst_14 : f32 to vector<4x8x1xf32>
    %36 = arith.subf %35, %34 : vector<4x8x1xf32>
    %37 = arith.mulf %33, %36 : vector<4x8x1xf32>
    %38 = vector.broadcast %37 : vector<4x8x1xf32> to vector<4x8x8xf32>
    %39 = arith.mulf %30, %38 : vector<4x8x8xf32>
    "tpu.trace_start"() <{level = 10 : i32, message = "bst,btd->bsd"}> : () -> ()
    %cst_15 = arith.constant dense<0.000000e+00> : vector<4x8x8xf32>
    %40 = tpu.matmul %39, %22, %cst_15 {dimension_numbers = #tpu.dot_dimension_numbers<[2], [1], [1], [2], [0, 0, 0, 1, 1, 2], [0], [0]>} : vector<4x8x8xf32>, vector<4x8x8xf32>, vector<4x8x8xf32> -> vector<4x8x8xf32>
    "tpu.trace_stop"() : () -> ()
    %41 = vector.extract_strided_slice %15 {offsets = [0, 0, 8], sizes = [4, 8, 8], strides = [1, 1, 1]} : vector<4x8x32xf32> to vector<4x8x8xf32>
    %42 = vector.extract_strided_slice %17 {offsets = [0, 0, 8], sizes = [4, 8, 8], strides = [1, 1, 1]} : vector<4x8x32xf32> to vector<4x8x8xf32>
    %43 = vector.extract_strided_slice %19 {offsets = [0, 0, 8], sizes = [4, 8, 8], strides = [1, 1, 1]} : vector<4x8x32xf32> to vector<4x8x8xf32>
    "tpu.trace_start"() <{level = 10 : i32, message = "bsd,btd->bst"}> : () -> ()
    %cst_16 = arith.constant dense<0.000000e+00> : vector<4x8x8xf32>
    %44 = tpu.matmul %41, %42, %cst_16 {dimension_numbers = #tpu.dot_dimension_numbers<[2], [2], [1], [1], [0, 0, 0, 1, 1, 1], [0], [0]>} : vector<4x8x8xf32>, vector<4x8x8xf32>, vector<4x8x8xf32> -> vector<4x8x8xf32>
    "tpu.trace_stop"() : () -> ()
    %cst_17 = arith.constant 0.353553385 : f32
    %45 = vector.broadcast %cst_17 : f32 to vector<4x8x8xf32>
    %46 = arith.mulf %44, %45 : vector<4x8x8xf32>
    %cst_18 = arith.constant dense<0xFF800000> : vector<4x8xf32>
    %47 = vector.multi_reduction <maximumf>, %46, %cst_18 [2] : vector<4x8x8xf32> to vector<4x8xf32>
    %48 = vector.shape_cast %47 : vector<4x8xf32> to vector<4x8x1xf32>
    %49 = vector.broadcast %48 : vector<4x8x1xf32> to vector<4x8x8xf32>
    %50 = arith.subf %46, %49 : vector<4x8x8xf32>
    %51 = math.exp %50 : vector<4x8x8xf32>
    %cst_19 = arith.constant dense<0.000000e+00> : vector<4x8xf32>
    %52 = vector.multi_reduction <add>, %51, %cst_19 [2] : vector<4x8x8xf32> to vector<4x8xf32>
    %53 = vector.shape_cast %52 : vector<4x8xf32> to vector<4x8x1xf32>
    %54 = tpu.reciprocal %53 {approx = true} : vector<4x8x1xf32> -> vector<4x8x1xf32>
    %55 = arith.mulf %53, %54 : vector<4x8x1xf32>
    %cst_20 = arith.constant 2.000000e+00 : f32
    %56 = vector.broadcast %cst_20 : f32 to vector<4x8x1xf32>
    %57 = arith.subf %56, %55 : vector<4x8x1xf32>
    %58 = arith.mulf %54, %57 : vector<4x8x1xf32>
    %59 = vector.broadcast %58 : vector<4x8x1xf32> to vector<4x8x8xf32>
    %60 = arith.mulf %51, %59 : vector<4x8x8xf32>
    "tpu.trace_start"() <{level = 10 : i32, message = "bst,btd->bsd"}> : () -> ()
    %cst_21 = arith.constant dense<0.000000e+00> : vector<4x8x8xf32>
    %61 = tpu.matmul %60, %43, %cst_21 {dimension_numbers = #tpu.dot_dimension_numbers<[2], [1], [1], [2], [0, 0, 0, 1, 1, 2], [0], [0]>} : vector<4x8x8xf32>, vector<4x8x8xf32>, vector<4x8x8xf32> -> vector<4x8x8xf32>
    "tpu.trace_stop"() : () -> ()
    %62 = vector.extract_strided_slice %15 {offsets = [0, 0, 16], sizes = [4, 8, 8], strides = [1, 1, 1]} : vector<4x8x32xf32> to vector<4x8x8xf32>
    %63 = vector.extract_strided_slice %17 {offsets = [0, 0, 16], sizes = [4, 8, 8], strides = [1, 1, 1]} : vector<4x8x32xf32> to vector<4x8x8xf32>
    %64 = vector.extract_strided_slice %19 {offsets = [0, 0, 16], sizes = [4, 8, 8], strides = [1, 1, 1]} : vector<4x8x32xf32> to vector<4x8x8xf32>
    "tpu.trace_start"() <{level = 10 : i32, message = "bsd,btd->bst"}> : () -> ()
    %cst_22 = arith.constant dense<0.000000e+00> : vector<4x8x8xf32>
    %65 = tpu.matmul %62, %63, %cst_22 {dimension_numbers = #tpu.dot_dimension_numbers<[2], [2], [1], [1], [0, 0, 0, 1, 1, 1], [0], [0]>} : vector<4x8x8xf32>, vector<4x8x8xf32>, vector<4x8x8xf32> -> vector<4x8x8xf32>
    "tpu.trace_stop"() : () -> ()
    %cst_23 = arith.constant 0.353553385 : f32
    %66 = vector.broadcast %cst_23 : f32 to vector<4x8x8xf32>
    %67 = arith.mulf %65, %66 : vector<4x8x8xf32>
    %cst_24 = arith.constant dense<0xFF800000> : vector<4x8xf32>
    %68 = vector.multi_reduction <maximumf>, %67, %cst_24 [2] : vector<4x8x8xf32> to vector<4x8xf32>
    %69 = vector.shape_cast %68 : vector<4x8xf32> to vector<4x8x1xf32>
    %70 = vector.broadcast %69 : vector<4x8x1xf32> to vector<4x8x8xf32>
    %71 = arith.subf %67, %70 : vector<4x8x8xf32>
    %72 = math.exp %71 : vector<4x8x8xf32>
    %cst_25 = arith.constant dense<0.000000e+00> : vector<4x8xf32>
    %73 = vector.multi_reduction <add>, %72, %cst_25 [2] : vector<4x8x8xf32> to vector<4x8xf32>
    %74 = vector.shape_cast %73 : vector<4x8xf32> to vector<4x8x1xf32>
    %75 = tpu.reciprocal %74 {approx = true} : vector<4x8x1xf32> -> vector<4x8x1xf32>
    %76 = arith.mulf %74, %75 : vector<4x8x1xf32>
    %cst_26 = arith.constant 2.000000e+00 : f32
    %77 = vector.broadcast %cst_26 : f32 to vector<4x8x1xf32>
    %78 = arith.subf %77, %76 : vector<4x8x1xf32>
    %79 = arith.mulf %75, %78 : vector<4x8x1xf32>
    %80 = vector.broadcast %79 : vector<4x8x1xf32> to vector<4x8x8xf32>
    %81 = arith.mulf %72, %80 : vector<4x8x8xf32>
    "tpu.trace_start"() <{level = 10 : i32, message = "bst,btd->bsd"}> : () -> ()
    %cst_27 = arith.constant dense<0.000000e+00> : vector<4x8x8xf32>
    %82 = tpu.matmul %81, %64, %cst_27 {dimension_numbers = #tpu.dot_dimension_numbers<[2], [1], [1], [2], [0, 0, 0, 1, 1, 2], [0], [0]>} : vector<4x8x8xf32>, vector<4x8x8xf32>, vector<4x8x8xf32> -> vector<4x8x8xf32>
    "tpu.trace_stop"() : () -> ()
    %83 = vector.extract_strided_slice %15 {offsets = [0, 0, 24], sizes = [4, 8, 8], strides = [1, 1, 1]} : vector<4x8x32xf32> to vector<4x8x8xf32>
    %84 = vector.extract_strided_slice %17 {offsets = [0, 0, 24], sizes = [4, 8, 8], strides = [1, 1, 1]} : vector<4x8x32xf32> to vector<4x8x8xf32>
    %85 = vector.extract_strided_slice %19 {offsets = [0, 0, 24], sizes = [4, 8, 8], strides = [1, 1, 1]} : vector<4x8x32xf32> to vector<4x8x8xf32>
    "tpu.trace_start"() <{level = 10 : i32, message = "bsd,btd->bst"}> : () -> ()
    %cst_28 = arith.constant dense<0.000000e+00> : vector<4x8x8xf32>
    %86 = tpu.matmul %83, %84, %cst_28 {dimension_numbers = #tpu.dot_dimension_numbers<[2], [2], [1], [1], [0, 0, 0, 1, 1, 1], [0], [0]>} : vector<4x8x8xf32>, vector<4x8x8xf32>, vector<4x8x8xf32> -> vector<4x8x8xf32>
    "tpu.trace_stop"() : () -> ()
    %cst_29 = arith.constant 0.353553385 : f32
    %87 = vector.broadcast %cst_29 : f32 to vector<4x8x8xf32>
    %88 = arith.mulf %86, %87 : vector<4x8x8xf32>
    %cst_30 = arith.constant dense<0xFF800000> : vector<4x8xf32>
    %89 = vector.multi_reduction <maximumf>, %88, %cst_30 [2] : vector<4x8x8xf32> to vector<4x8xf32>
    %90 = vector.shape_cast %89 : vector<4x8xf32> to vector<4x8x1xf32>
    %91 = vector.broadcast %90 : vector<4x8x1xf32> to vector<4x8x8xf32>
    %92 = arith.subf %88, %91 : vector<4x8x8xf32>
    %93 = math.exp %92 : vector<4x8x8xf32>
    %cst_31 = arith.constant dense<0.000000e+00> : vector<4x8xf32>
    %94 = vector.multi_reduction <add>, %93, %cst_31 [2] : vector<4x8x8xf32> to vector<4x8xf32>
    %95 = vector.shape_cast %94 : vector<4x8xf32> to vector<4x8x1xf32>
    %96 = tpu.reciprocal %95 {approx = true} : vector<4x8x1xf32> -> vector<4x8x1xf32>
    %97 = arith.mulf %95, %96 : vector<4x8x1xf32>
    %cst_32 = arith.constant 2.000000e+00 : f32
    %98 = vector.broadcast %cst_32 : f32 to vector<4x8x1xf32>
    %99 = arith.subf %98, %97 : vector<4x8x1xf32>
    %100 = arith.mulf %96, %99 : vector<4x8x1xf32>
    %101 = vector.broadcast %100 : vector<4x8x1xf32> to vector<4x8x8xf32>
    %102 = arith.mulf %93, %101 : vector<4x8x8xf32>
    "tpu.trace_start"() <{level = 10 : i32, message = "bst,btd->bsd"}> : () -> ()
    %cst_33 = arith.constant dense<0.000000e+00> : vector<4x8x8xf32>
    %103 = tpu.matmul %102, %85, %cst_33 {dimension_numbers = #tpu.dot_dimension_numbers<[2], [1], [1], [2], [0, 0, 0, 1, 1, 2], [0], [0]>} : vector<4x8x8xf32>, vector<4x8x8xf32>, vector<4x8x8xf32> -> vector<4x8x8xf32>
    "tpu.trace_stop"() : () -> ()
    %104 = tpu.concatenate %40, %61, %82, %103 in 2 : vector<4x8x8xf32>, vector<4x8x8xf32>, vector<4x8x8xf32>, vector<4x8x8xf32> -> vector<4x8x32xf32>
    %105 = vector.shape_cast %104 : vector<4x8x32xf32> to vector<32x32xf32>
    %c0_34 = arith.constant 0 : index
    %c0_35 = arith.constant 0 : index
    %106 = vector.load %arg4[%c0_34, %c0_35] : memref<32x32xf32, #tpu.memory_space<vmem>>, vector<32x32xf32>
    %cst_36 = arith.constant dense<0.000000e+00> : vector<32x32xf32>
    %107 = tpu.matmul %105, %106, %cst_36 {dimension_numbers = #tpu.dot_dimension_numbers<[1], [0], [0], [1], [0, 0, 1, 1], [], []>} : vector<32x32xf32>, vector<32x32xf32>, vector<32x32xf32> -> vector<32x32xf32>
    %108 = vector.extract_strided_slice %1 {offsets = [2, 0], sizes = [1, 32], strides = [1, 1]} : vector<10x96xf32> to vector<1x32xf32>
    %109 = vector.broadcast %108 : vector<1x32xf32> to vector<32x32xf32>
    %110 = arith.addf %107, %109 : vector<32x32xf32>
    %111 = arith.addf %8, %110 : vector<32x32xf32>
    %112 = vector.extract_strided_slice %1 {offsets = [3, 0], sizes = [1, 32], strides = [1, 1]} : vector<10x96xf32> to vector<1x32xf32>
    %113 = vector.extract_strided_slice %1 {offsets = [4, 0], sizes = [1, 32], strides = [1, 1]} : vector<10x96xf32> to vector<1x32xf32>
    %cst_37 = arith.constant dense<0.000000e+00> : vector<32xf32>
    %114 = vector.multi_reduction <add>, %111, %cst_37 [1] : vector<32x32xf32> to vector<32xf32>
    %115 = vector.shape_cast %114 : vector<32xf32> to vector<32x1xf32>
    %cst_38 = arith.constant 3.200000e+01 : f32
    %116 = vector.broadcast %cst_38 : f32 to vector<32x1xf32>
    %117 = arith.divf %115, %116 : vector<32x1xf32>
    %118 = vector.broadcast %117 : vector<32x1xf32> to vector<32x32xf32>
    %119 = arith.subf %111, %118 : vector<32x32xf32>
    %120 = vector.broadcast %117 : vector<32x1xf32> to vector<32x32xf32>
    %121 = arith.subf %111, %120 : vector<32x32xf32>
    %122 = arith.mulf %119, %121 : vector<32x32xf32>
    %cst_39 = arith.constant dense<0.000000e+00> : vector<32xf32>
    %123 = vector.multi_reduction <add>, %122, %cst_39 [1] : vector<32x32xf32> to vector<32xf32>
    %124 = vector.shape_cast %123 : vector<32xf32> to vector<32x1xf32>
    %cst_40 = arith.constant 3.200000e+01 : f32
    %125 = vector.broadcast %cst_40 : f32 to vector<32x1xf32>
    %126 = arith.divf %124, %125 : vector<32x1xf32>
    %127 = vector.broadcast %117 : vector<32x1xf32> to vector<32x32xf32>
    %128 = arith.subf %111, %127 : vector<32x32xf32>
    %cst_41 = arith.constant 9.99999974E-6 : f32
    %129 = vector.broadcast %cst_41 : f32 to vector<32x1xf32>
    %130 = arith.addf %126, %129 : vector<32x1xf32>
    %131 = math.rsqrt %130 : vector<32x1xf32>
    %132 = vector.broadcast %131 : vector<32x1xf32> to vector<32x32xf32>
    %133 = arith.mulf %128, %132 : vector<32x32xf32>
    %134 = vector.broadcast %112 : vector<1x32xf32> to vector<32x32xf32>
    %135 = arith.mulf %133, %134 : vector<32x32xf32>
    %136 = vector.broadcast %113 : vector<1x32xf32> to vector<32x32xf32>
    %137 = arith.addf %135, %136 : vector<32x32xf32>
    %c0_42 = arith.constant 0 : index
    %c0_43 = arith.constant 0 : index
    %138 = vector.load %arg5[%c0_42, %c0_43] : memref<32x64xf32, #tpu.memory_space<vmem>>, vector<32x64xf32>
    %cst_44 = arith.constant dense<0.000000e+00> : vector<32x64xf32>
    %139 = tpu.matmul %137, %138, %cst_44 {dimension_numbers = #tpu.dot_dimension_numbers<[1], [0], [0], [1], [0, 0, 1, 1], [], []>} : vector<32x32xf32>, vector<32x64xf32>, vector<32x64xf32> -> vector<32x64xf32>
    %140 = vector.extract_strided_slice %1 {offsets = [5, 0], sizes = [1, 64], strides = [1, 1]} : vector<10x96xf32> to vector<1x64xf32>
    %141 = vector.broadcast %140 : vector<1x64xf32> to vector<32x64xf32>
    %142 = arith.addf %139, %141 : vector<32x64xf32>
    %cst_45 = arith.constant 0.000000e+00 : f32
    %143 = vector.broadcast %cst_45 : f32 to vector<32x64xf32>
    %144 = arith.maximumf %142, %143 : vector<32x64xf32>
    %c0_46 = arith.constant 0 : index
    %c0_47 = arith.constant 0 : index
    %145 = vector.load %arg6[%c0_46, %c0_47] : memref<64x32xf32, #tpu.memory_space<vmem>>, vector<64x32xf32>
    %cst_48 = arith.constant dense<0.000000e+00> : vector<32x32xf32>
    %146 = tpu.matmul %144, %145, %cst_48 {dimension_numbers = #tpu.dot_dimension_numbers<[1], [0], [0], [1], [0, 0, 1, 1], [], []>} : vector<32x64xf32>, vector<64x32xf32>, vector<32x32xf32> -> vector<32x32xf32>
    %147 = vector.extract_strided_slice %1 {offsets = [6, 0], sizes = [1, 32], strides = [1, 1]} : vector<10x96xf32> to vector<1x32xf32>
    %148 = vector.broadcast %147 : vector<1x32xf32> to vector<32x32xf32>
    %149 = arith.addf %146, %148 : vector<32x32xf32>
    %150 = arith.addf %137, %149 : vector<32x32xf32>
    %151 = vector.extract_strided_slice %1 {offsets = [7, 0], sizes = [1, 32], strides = [1, 1]} : vector<10x96xf32> to vector<1x32xf32>
    %152 = vector.extract_strided_slice %1 {offsets = [8, 0], sizes = [1, 32], strides = [1, 1]} : vector<10x96xf32> to vector<1x32xf32>
    %cst_49 = arith.constant dense<0.000000e+00> : vector<32xf32>
    %153 = vector.multi_reduction <add>, %150, %cst_49 [1] : vector<32x32xf32> to vector<32xf32>
    %154 = vector.shape_cast %153 : vector<32xf32> to vector<32x1xf32>
    %cst_50 = arith.constant 3.200000e+01 : f32
    %155 = vector.broadcast %cst_50 : f32 to vector<32x1xf32>
    %156 = arith.divf %154, %155 : vector<32x1xf32>
    %157 = vector.broadcast %156 : vector<32x1xf32> to vector<32x32xf32>
    %158 = arith.subf %150, %157 : vector<32x32xf32>
    %159 = vector.broadcast %156 : vector<32x1xf32> to vector<32x32xf32>
    %160 = arith.subf %150, %159 : vector<32x32xf32>
    %161 = arith.mulf %158, %160 : vector<32x32xf32>
    %cst_51 = arith.constant dense<0.000000e+00> : vector<32xf32>
    %162 = vector.multi_reduction <add>, %161, %cst_51 [1] : vector<32x32xf32> to vector<32xf32>
    %163 = vector.shape_cast %162 : vector<32xf32> to vector<32x1xf32>
    %cst_52 = arith.constant 3.200000e+01 : f32
    %164 = vector.broadcast %cst_52 : f32 to vector<32x1xf32>
    %165 = arith.divf %163, %164 : vector<32x1xf32>
    %166 = vector.broadcast %156 : vector<32x1xf32> to vector<32x32xf32>
    %167 = arith.subf %150, %166 : vector<32x32xf32>
    %cst_53 = arith.constant 9.99999974E-6 : f32
    %168 = vector.broadcast %cst_53 : f32 to vector<32x1xf32>
    %169 = arith.addf %165, %168 : vector<32x1xf32>
    %170 = math.rsqrt %169 : vector<32x1xf32>
    %171 = vector.broadcast %170 : vector<32x1xf32> to vector<32x32xf32>
    %172 = arith.mulf %167, %171 : vector<32x32xf32>
    %173 = vector.broadcast %151 : vector<1x32xf32> to vector<32x32xf32>
    %174 = arith.mulf %172, %173 : vector<32x32xf32>
    %175 = vector.broadcast %152 : vector<1x32xf32> to vector<32x32xf32>
    %176 = arith.addf %174, %175 : vector<32x32xf32>
    %c0_54 = arith.constant 0 : index
    %c0_55 = arith.constant 0 : index
    %177 = vector.load %arg7[%c0_54, %c0_55] : memref<32x4xf32, #tpu.memory_space<vmem>>, vector<32x4xf32>
    %cst_56 = arith.constant dense<0.000000e+00> : vector<32x4xf32>
    %178 = tpu.matmul %176, %177, %cst_56 {dimension_numbers = #tpu.dot_dimension_numbers<[1], [0], [0], [1], [0, 0, 1, 1], [], []>} : vector<32x32xf32>, vector<32x4xf32>, vector<32x4xf32> -> vector<32x4xf32>
    %179 = vector.extract_strided_slice %1 {offsets = [9, 0], sizes = [1, 4], strides = [1, 1]} : vector<10x96xf32> to vector<1x4xf32>
    %180 = vector.broadcast %179 : vector<1x4xf32> to vector<32x4xf32>
    %181 = arith.addf %178, %180 : vector<32x4xf32>
    %182 = vector.extract_strided_slice %181 {offsets = [0, 0], sizes = [16, 4], strides = [1, 1]} : vector<32x4xf32> to vector<16x4xf32>
    %183 = vector.extract_strided_slice %181 {offsets = [16, 0], sizes = [16, 4], strides = [1, 1]} : vector<32x4xf32> to vector<16x4xf32>
    %184 = arith.subf %182, %183 : vector<16x4xf32>
    %185 = arith.mulf %184, %184 : vector<16x4xf32>
    %cst_57 = arith.constant dense<0.000000e+00> : vector<16xf32>
    %186 = vector.multi_reduction <add>, %185, %cst_57 [1] : vector<16x4xf32> to vector<16xf32>
    %187 = vector.shape_cast %186 : vector<16xf32> to vector<16x1xf32>
    %cst_58 = arith.constant dense<0.000000e+00> : vector<1xf32>
    %188 = vector.multi_reduction <add>, %187, %cst_58 [0] : vector<16x1xf32> to vector<1xf32>
    %189 = vector.shape_cast %188 : vector<1xf32> to vector<1x1xf32>
    %cst_59 = arith.constant 1.562500e-02 : f32
    %190 = vector.broadcast %cst_59 : f32 to vector<1x1xf32>
    %191 = arith.mulf %189, %190 : vector<1x1xf32>
    %c0_60 = arith.constant 0 : index
    %c0_61 = arith.constant 0 : index
    %192 = vector.load %arg9[%c0_60, %c0_61] : memref<1x1xf32, #tpu.memory_space<vmem>>, vector<1x1xf32>
    tpu.vector_store %arg9[%c0_60, %c0_61], %191 {strides = array<i32>} : memref<1x1xf32, #tpu.memory_space<vmem>>, vector<1x1xf32>,
    return
  }
}

</mosaic_0001>

<llo_original>
// kernel: transformer_formant_mse_loss.1
$region0: #{transformer_formant_mse_loss.1}
  #allocation0 [shape = 'u32[]', space=smem, size = 0x4, offset = 0x4, fixed_abs, tag = 'smem constant byte address 0x4 - core index']
  #allocation1 [shape = 'u32[144,128]{1,0:T(1,128)}', space=vmem, size = 0x12000, scoped, tag = 'internal scratch']
  %s0 = inlined_call_operand.vmem [shape: f32[32,16], index: 0, kind: input, shape index: {}]
  %s1 = inlined_call_operand.vmem [shape: f32[32,32], index: 1, kind: input, shape index: {}]
  %s2 = inlined_call_operand.vmem [shape: f32[16,32], index: 2, kind: input, shape index: {}]
  %s3 = inlined_call_operand.vmem [shape: f32[32,96], index: 3, kind: input, shape index: {}]
  %s4 = inlined_call_operand.vmem [shape: f32[32,32], index: 4, kind: input, shape index: {}]
  %s5 = inlined_call_operand.vmem [shape: f32[32,64], index: 5, kind: input, shape index: {}]
  %s6 = inlined_call_operand.vmem [shape: f32[64,32], index: 6, kind: input, shape index: {}]
  %s7 = inlined_call_operand.vmem [shape: f32[32,4], index: 7, kind: input, shape index: {}]
  %s8 = inlined_call_operand.vmem [shape: f32[10,96], index: 8, kind: input, shape index: {}]
  %s9 = inlined_call_operand.hbm [shape: f32[1,1], index: 9, kind: output, shape index: {}]
  %s10 = sld [smem:[#allocation0]]
  $region46: #{transformer_formant_mse_loss.1} parent=0
    _
  %s12 = ssub.s32 1, %s10
  %s13 = scalar_select 0, %s12, %s10
  $region1: #{transformer_formant_mse_loss.1} parent=0
    #allocation2 [shape = 'u8[512]{0}', space=vmem, size = 0x400, scoped, tag = 'output window, operand 0, single buffered']
    #allocation3 [shape = 's32[1]{0}', space=sflag, size = 0x4, scoped, tag = 'scoped memory for transformer_formant_mse_loss.1']
    %14 = vsyncpa [#allocation3], 0
    // Predicated region
    $region2: #{transformer_formant_mse_loss.1} parent=1 // pred_check
      _
    $region3: #{transformer_formant_mse_loss.1} parent=1 // pred_check_branch
      %16 = sbr.rel (0) target = $region5
    $region4: #{transformer_formant_mse_loss.1} parent=1 // pred_region
      _
    $region5: #{transformer_formant_mse_loss.1} parent=1 // pred_fallthru
      _
    // Predicated region
    $region6: #{transformer_formant_mse_loss.1} parent=1 // pred_check
      _
    $region7: #{transformer_formant_mse_loss.1} parent=1 // pred_check_branch
      %18 = sbr.rel (0) target = $region9
    $region8: #{transformer_formant_mse_loss.1} parent=1 // pred_region
      _
    $region9: #{transformer_formant_mse_loss.1} parent=1 // pred_fallthru
      _
    // Predicated region
    $region10: #{transformer_formant_mse_loss.1} parent=1 // pred_check
      _
    $region11: #{transformer_formant_mse_loss.1} parent=1 // pred_check_branch
      %20 = sbr.rel (0) target = $region13
    $region12: #{transformer_formant_mse_loss.1} parent=1 // pred_region
      _
    $region13: #{transformer_formant_mse_loss.1} parent=1 // pred_fallthru
      _
    // Predicated region
    $region14: #{transformer_formant_mse_loss.1} parent=1 // pred_check
      _
    $region15: #{transformer_formant_mse_loss.1} parent=1 // pred_check_branch
      %22 = sbr.rel (0) target = $region17
    $region16: #{transformer_formant_mse_loss.1} parent=1 // pred_region
      _
    $region17: #{transformer_formant_mse_loss.1} parent=1 // pred_fallthru
      _
    // Predicated region
    $region18: #{transformer_formant_mse_loss.1} parent=1 // pred_check
      _
    $region19: #{transformer_formant_mse_loss.1} parent=1 // pred_check_branch
      %24 = sbr.rel (0) target = $region21
    $region20: #{transformer_formant_mse_loss.1} parent=1 // pred_region
      _
    $region21: #{transformer_formant_mse_loss.1} parent=1 // pred_fallthru
      _
    // Predicated region
    $region22: #{transformer_formant_mse_loss.1} parent=1 // pred_check
      _
    $region23: #{transformer_formant_mse_loss.1} parent=1 // pred_check_branch
      %26 = sbr.rel (0) target = $region25
    $region24: #{transformer_formant_mse_loss.1} parent=1 // pred_region
      _
    $region25: #{transformer_formant_mse_loss.1} parent=1 // pred_fallthru
      _
    // Predicated region
    $region26: #{transformer_formant_mse_loss.1} parent=1 // pred_check
      _
    $region27: #{transformer_formant_mse_loss.1} parent=1 // pred_check_branch
      %28 = sbr.rel (0) target = $region29
    $region28: #{transformer_formant_mse_loss.1} parent=1 // pred_region
      _
    $region29: #{transformer_formant_mse_loss.1} parent=1 // pred_fallthru
      _
    // Predicated region
    $region30: #{transformer_formant_mse_loss.1} parent=1 // pred_check
      _
    $region31: #{transformer_formant_mse_loss.1} parent=1 // pred_check_branch
      %30 = sbr.rel (0) target = $region33
    $region32: #{transformer_formant_mse_loss.1} parent=1 // pred_region
      _
    $region33: #{transformer_formant_mse_loss.1} parent=1 // pred_fallthru
      _
    // Predicated region
    $region34: #{transformer_formant_mse_loss.1} parent=1 // pred_check
      _
    $region35: #{transformer_formant_mse_loss.1} parent=1 // pred_check_branch
      %32 = sbr.rel (0) target = $region37
    $region36: #{transformer_formant_mse_loss.1} parent=1 // pred_region
      _
    $region37: #{transformer_formant_mse_loss.1} parent=1 // pred_fallthru
      _
    %v33 = vld [vmem:[%s0] sm:$0xff]
    %v34 = vld [vmem:[%s0 + $0x8] sm:$0xff]
    %v35 = vld [vmem:[%s0 + $0x10] sm:$0xff]
    %v36 = vld [vmem:[%s0 + $0x18] sm:$0xff]
    %v37 = vld [vmem:[%s8] sm:$0xff]
    %v38 = vld [vmem:[%s8 + $0x8] sm:$0x3]
    %v39 = vld [vmem:[%s2] sm:$0xff]
    %v40 = vld [vmem:[%s2 + $0x8] sm:$0xff]
    %v41 = vlaneseq
    %v42 = vshrl.u32 %v41, 7
    %v43 = vsub.s32 0, %v42
    %v44 = vrot.slane %v37, %v43
    %vm45 = vcmask 130048
    %v47 = vsel %vm45, %v33, 0
    %v50 = vsel %vm45, %v34, 0
    %v53 = vsel %vm45, %v35, 0
    %v56 = vsel %vm45, %v36, 0
    %58 = vmatprep.subr.mxu0 0.0
    %59 = vmatpush1.msra.mxu0 %v39
    %60 = vmatprep.subr.mxu0 0.0
    %61 = vmatpush1.msra.mxu0 %v40
    %62 = vmatprep.subr.mxu0 0.0
    %63 = vmatpush1.msra.mxu0 0.0
    %64 = vmatprep.subr.mxu0 0.0
    %65 = vmatpush1.msra.mxu0 0.0
    %66 = vmatprep.subr.mxu0 0.0
    %67 = vmatpush1.msra.mxu0 0.0
    %68 = vmatprep.subr.mxu0 0.0
    %69 = vmatpush1.msra.mxu0 0.0
    %70 = vmatprep.subr.mxu0 0.0
    %71 = vmatpush1.msra.mxu0 0.0
    %72 = vmatprep.subr.mxu0 0.0
    %73 = vmatpush1.msra.mxu0 0.0
    %74 = vmatprep.subr.mxu0 0.0
    %75 = vmatpush1.msra.mxu0 0.0
    %76 = vmatprep.subr.mxu0 0.0
    %77 = vmatpush1.msra.mxu0 0.0
    %78 = vmatprep.subr.mxu0 0.0
    %79 = vmatpush1.msra.mxu0 0.0
    %80 = vmatprep.subr.mxu0 0.0
    %81 = vmatpush1.msra.mxu0 0.0
    %82 = vmatprep.subr.mxu0 0.0
    %83 = vmatpush1.msra.mxu0 0.0
    %84 = vmatprep.subr.mxu0 0.0
    %85 = vmatpush1.msra.mxu0 0.0
    %86 = vmatprep.subr.mxu0 0.0
    %87 = vmatpush1.msra.mxu0 0.0
    %88 = vmatprep.subr.mxu0 0.0
    %89 = vmatpush1.msra.mxu0 0.0
    %90 = vmatprep.subr.mxu0 0.0
    %91 = vmatpush1.msra.mxu0 0.0
    %92 = vmatprep.subr.mxu0 0.0
    %93 = vmatpush1.msra.mxu0 0.0
    %94 = vmatprep.subr.mxu0 0.0
    %95 = vmatpush1.msra.mxu0 0.0
    %96 = vmatprep.subr.mxu0 0.0
    %97 = vmatpush1.msra.mxu0 0.0
    %98 = vmatprep.subr.mxu0 0.0
    %99 = vmatpush1.msra.mxu0 0.0
    %100 = vmatprep.subr.mxu0 0.0
    %101 = vmatpush1.msra.mxu0 0.0
    %102 = vmatprep.subr.mxu0 0.0
    %103 = vmatpush1.msra.mxu0 0.0
    %104 = vmatprep.subr.mxu0 0.0
    %105 = vmatpush1.msra.mxu0 0.0
    %106 = vmatprep.subr.mxu0 0.0
    %107 = vmatpush1.msra.mxu0 0.0
    %108 = vmatprep.subr.mxu0 0.0
    %109 = vmatpush1.msra.mxu0 0.0
    %110 = vmatprep.subr.mxu0 0.0
    %111 = vmatpush1.msra.mxu0 0.0
    %112 = vmatprep.subr.mxu0 0.0
    %113 = vmatpush1.msra.mxu0 0.0
    %114 = vmatprep.subr.mxu0 0.0
    %115 = vmatpush1.msra.mxu0 0.0
    %116 = vmatprep.subr.mxu0 0.0
    %117 = vmatpush1.msra.mxu0 0.0
    %118 = vmatprep.subr.mxu0 0.0
    %119 = vmatpush1.msra.mxu0 0.0
    %120 = vmatprep.subr.mxu0 0.0
    %121 = vmatpush1.msra.mxu0 0.0
    %122 = vmatprep.mubr.f32.mxu0 0.0
    %123 = vmatmul.mubr.f32.gmra.mrb[0].mxu0 %v47
    %v124 = vpop.f32.mrb[0].mxu0
    %v125 = vadd.f32 %v44, %v124
    %v126 = vpop.f32.mrb[0].mxu0
    %127 = vmatprep.mubr.f32.mxu0 0.0
    %128 = vmatmul.mubr.f32.gmra.mrb[0].mxu0 %v50
    %v129 = vpop.f32.mrb[0].mxu0
    %v130 = vadd.f32 %v44, %v129
    %v131 = vpop.f32.mrb[0].mxu0
    %132 = vmatprep.mubr.f32.mxu0 0.0
    %133 = vmatmul.mubr.f32.gmra.mrb[0].mxu0 %v53
    %v134 = vpop.f32.mrb[0].mxu0
    %v135 = vadd.f32 %v44, %v134
    %v136 = vpop.f32.mrb[0].mxu0
    %137 = vmatprep.mubr.f32.mxu0 0.0
    %138 = vmatmul.mubr.f32.gmra.mrb[0].mxu0 %v56
    %v139 = vpop.f32.mrb[0].mxu0
    %v140 = vadd.f32 %v44, %v139
    %v141 = vpop.f32.mrb[0].mxu0
    %142 = vdwg.mxu0
    %v143 = vld [vmem:[%s1] sm:$0xff]
    %v144 = vld [vmem:[%s1 + $0x8] sm:$0xff]
    %v145 = vld [vmem:[%s1 + $0x10] sm:$0xff]
    %v146 = vld [vmem:[%s1 + $0x18] sm:$0xff]
    %v147 = vadd.f32 %v125, %v143
    %v148 = vadd.f32 %v130, %v144
    %v149 = vadd.f32 %v135, %v145
    %v150 = vadd.f32 %v140, %v146
    %v151 = vld [vmem:[%s3] sm:$0xff]
    %v152 = vld [vmem:[%s3 + $0x8] sm:$0xff]
    %v153 = vld [vmem:[%s3 + $0x10] sm:$0xff]
    %v154 = vld [vmem:[%s3 + $0x18] sm:$0xff]
    %v155 = vlaneseq
    %v156 = vshrl.u32 %v155, 7
    %v157 = vsub.s32 1, %v156
    %v158 = vrot.slane %v37, %v157
    %vm159 = vcmask 261120
    %v161 = vsel %vm159, %v147, 0
    %v164 = vsel %vm159, %v148, 0
    %v167 = vsel %vm159, %v149, 0
    %v170 = vsel %vm159, %v150, 0
    %172 = vmatprep.subr.mxu0 0.0
    %173 = vmatpush1.msra.mxu0 %v151
    %174 = vmatprep.subr.mxu0 0.0
    %175 = vmatpush1.msra.mxu0 %v152
    %176 = vmatprep.subr.mxu0 0.0
    %177 = vmatpush1.msra.mxu0 %v153
    %178 = vmatprep.subr.mxu0 0.0
    %179 = vmatpush1.msra.mxu0 %v154
    %180 = vmatprep.subr.mxu0 0.0
    %181 = vmatpush1.msra.mxu0 0.0
    %182 = vmatprep.subr.mxu0 0.0
    %183 = vmatpush1.msra.mxu0 0.0
    %184 = vmatprep.subr.mxu0 0.0
    %185 = vmatpush1.msra.mxu0 0.0
    %186 = vmatprep.subr.mxu0 0.0
    %187 = vmatpush1.msra.mxu0 0.0
    %188 = vmatprep.subr.mxu0 0.0
    %189 = vmatpush1.msra.mxu0 0.0
    %190 = vmatprep.subr.mxu0 0.0
    %191 = vmatpush1.msra.mxu0 0.0
    %192 = vmatprep.subr.mxu0 0.0
    %193 = vmatpush1.msra.mxu0 0.0
    %194 = vmatprep.subr.mxu0 0.0
    %195 = vmatpush1.msra.mxu0 0.0
    %196 = vmatprep.subr.mxu0 0.0
    %197 = vmatpush1.msra.mxu0 0.0
    %198 = vmatprep.subr.mxu0 0.0
    %199 = vmatpush1.msra.mxu0 0.0
    %200 = vmatprep.subr.mxu0 0.0
    %201 = vmatpush1.msra.mxu0 0.0
    %202 = vmatprep.subr.mxu0 0.0
    %203 = vmatpush1.msra.mxu0 0.0
    %204 = vmatprep.subr.mxu0 0.0
    %205 = vmatpush1.msra.mxu0 0.0
    %206 = vmatprep.subr.mxu0 0.0
    %207 = vmatpush1.msra.mxu0 0.0
    %208 = vmatprep.subr.mxu0 0.0
    %209 = vmatpush1.msra.mxu0 0.0
    %210 = vmatprep.subr.mxu0 0.0
    %211 = vmatpush1.msra.mxu0 0.0
    %212 = vmatprep.subr.mxu0 0.0
    %213 = vmatpush1.msra.mxu0 0.0
    %214 = vmatprep.subr.mxu0 0.0
    %215 = vmatpush1.msra.mxu0 0.0
    %216 = vmatprep.subr.mxu0 0.0
    %217 = vmatpush1.msra.mxu0 0.0
    %218 = vmatprep.subr.mxu0 0.0
    %219 = vmatpush1.msra.mxu0 0.0
    %220 = vmatprep.subr.mxu0 0.0
    %221 = vmatpush1.msra.mxu0 0.0
    %222 = vmatprep.subr.mxu0 0.0
    %223 = vmatpush1.msra.mxu0 0.0
    %224 = vmatprep.subr.mxu0 0.0
    %225 = vmatpush1.msra.mxu0 0.0
    %226 = vmatprep.subr.mxu0 0.0
    %227 = vmatpush1.msra.mxu0 0.0
    %228 = vmatprep.subr.mxu0 0.0
    %229 = vmatpush1.msra.mxu0 0.0
    %230 = vmatprep.subr.mxu0 0.0
    %231 = vmatpush1.msra.mxu0 0.0
    %232 = vmatprep.subr.mxu0 0.0
    %233 = vmatpush1.msra.mxu0 0.0
    %234 = vmatprep.subr.mxu0 0.0
    %235 = vmatpush1.msra.mxu0 0.0
    %236 = vmatprep.mubr.f32.mxu0 0.0
    %237 = vmatmul.mubr.f32.gmra.mrb[0].mxu0 %v161
    %v238 = vpop.f32.mrb[0].mxu0
    %v239 = vadd.f32 %v158, %v238
    %v240 = vpop.f32.mrb[0].mxu0
    %241 = vmatprep.mubr.f32.mxu0 0.0
    %242 = vmatmul.mubr.f32.gmra.mrb[0].mxu0 %v164
    %v243 = vpop.f32.mrb[0].mxu0
    %v244 = vadd.f32 %v158, %v243
    %v245 = vpop.f32.mrb[0].mxu0
    %246 = vmatprep.mubr.f32.mxu0 0.0
    %247 = vmatmul.mubr.f32.gmra.mrb[0].mxu0 %v167
    %v248 = vpop.f32.mrb[0].mxu0
    %v249 = vadd.f32 %v158, %v248
    %v250 = vpop.f32.mrb[0].mxu0
    %251 = vmatprep.mubr.f32.mxu0 0.0
    %252 = vmatmul.mubr.f32.gmra.mrb[0].mxu0 %v170
    %v253 = vpop.f32.mrb[0].mxu0
    %v254 = vadd.f32 %v158, %v253
    %v255 = vpop.f32.mrb[0].mxu0
    %256 = vdwg.mxu0
    %258 = vrot.lane.b32.xlu0 %v239, 96
    %v259 = vpop.permute.xlu0 %258
    %vm260 = vcmask 64512
    %v261 = vsel %vm260, %v239, 0
    %v263 = vsel %vm260, %v259, 0
    %265 = vmatprep.subr.mxu0 0.0
    %266 = vmatpush1.xpose.msra.mxu0 %v263
    %267 = vmatprep.subr.mxu0 0.0
    %268 = vmatpush1.xpose.msra.mxu0 0.0
    %269 = vmatprep.subr.mxu0 0.0
    %270 = vmatpush1.xpose.msra.mxu0 0.0
    %271 = vmatprep.subr.mxu0 0.0
    %272 = vmatpush1.xpose.msra.mxu0 0.0
    %273 = vmatprep.subr.mxu0 0.0
    %274 = vmatpush1.xpose.msra.mxu0 0.0
    %275 = vmatprep.subr.mxu0 0.0
    %276 = vmatpush1.xpose.msra.mxu0 0.0
    %277 = vmatprep.subr.mxu0 0.0
    %278 = vmatpush1.xpose.msra.mxu0 0.0
    %279 = vmatprep.subr.mxu0 0.0
    %280 = vmatpush1.xpose.msra.mxu0 0.0
    %281 = vmatprep.subr.mxu0 0.0
    %282 = vmatpush1.xpose.msra.mxu0 0.0
    %283 = vmatprep.subr.mxu0 0.0
    %284 = vmatpush1.xpose.msra.mxu0 0.0
    %285 = vmatprep.subr.mxu0 0.0
    %286 = vmatpush1.xpose.msra.mxu0 0.0
    %287 = vmatprep.subr.mxu0 0.0
    %288 = vmatpush1.xpose.msra.mxu0 0.0
    %289 = vmatprep.subr.mxu0 0.0
    %290 = vmatpush1.xpose.msra.mxu0 0.0
    %291 = vmatprep.subr.mxu0 0.0
    %292 = vmatpush1.xpose.msra.mxu0 0.0
    %293 = vmatprep.subr.mxu0 0.0
    %294 = vmatpush1.xpose.msra.mxu0 0.0
    %295 = vmatprep.subr.mxu0 0.0
    %296 = vmatpush1.xpose.msra.mxu0 0.0
    %297 = vmatprep.subr.mxu0 0.0
    %298 = vmatpush1.xpose.msra.mxu0 0.0
    %299 = vmatprep.subr.mxu0 0.0
    %300 = vmatpush1.xpose.msra.mxu0 0.0
    %301 = vmatprep.subr.mxu0 0.0
    %302 = vmatpush1.xpose.msra.mxu0 0.0
    %303 = vmatprep.subr.mxu0 0.0
    %304 = vmatpush1.xpose.msra.mxu0 0.0
    %305 = vmatprep.subr.mxu0 0.0
    %306 = vmatpush1.xpose.msra.mxu0 0.0
    %307 = vmatprep.subr.mxu0 0.0
    %308 = vmatpush1.xpose.msra.mxu0 0.0
    %309 = vmatprep.subr.mxu0 0.0
    %310 = vmatpush1.xpose.msra.mxu0 0.0
    %311 = vmatprep.subr.mxu0 0.0
    %312 = vmatpush1.xpose.msra.mxu0 0.0
    %313 = vmatprep.subr.mxu0 0.0
    %314 = vmatpush1.xpose.msra.mxu0 0.0
    %315 = vmatprep.subr.mxu0 0.0
    %316 = vmatpush1.xpose.msra.mxu0 0.0
    %317 = vmatprep.subr.mxu0 0.0
    %318 = vmatpush1.xpose.msra.mxu0 0.0
    %319 = vmatprep.subr.mxu0 0.0
    %320 = vmatpush1.xpose.msra.mxu0 0.0
    %321 = vmatprep.subr.mxu0 0.0
    %322 = vmatpush1.xpose.msra.mxu0 0.0
    %323 = vmatprep.subr.mxu0 0.0
    %324 = vmatpush1.xpose.msra.mxu0 0.0
    %325 = vmatprep.subr.mxu0 0.0
    %326 = vmatpush1.xpose.msra.mxu0 0.0
    %327 = vmatprep.subr.mxu0 0.0
    %328 = vmatpush1.xpose.msra.mxu0 0.0
    %329 = vmatprep.mubr.f32.mxu0 0.0
    %330 = vmatmul.mubr.f32.gmra.mrb[0].mxu0 %v261
    %v331 = vpop.f32.mrb[0].mxu0
    %v332 = vadd.f32 0.0, %v331
    %v333 = vpop.f32.mrb[0].mxu0
    %334 = vdwg.mxu0
    %336 = vrot.lane.b32.xlu0 %v244, 96
    %v337 = vpop.permute.xlu0 %336
    %v338 = vsel %vm260, %v244, 0
    %v340 = vsel %vm260, %v337, 0
    %342 = vmatprep.subr.mxu0 0.0
    %343 = vmatpush1.xpose.msra.mxu0 %v340
    %344 = vmatprep.subr.mxu0 0.0
    %345 = vmatpush1.xpose.msra.mxu0 0.0
    %346 = vmatprep.subr.mxu0 0.0
    %347 = vmatpush1.xpose.msra.mxu0 0.0
    %348 = vmatprep.subr.mxu0 0.0
    %349 = vmatpush1.xpose.msra.mxu0 0.0
    %350 = vmatprep.subr.mxu0 0.0
    %351 = vmatpush1.xpose.msra.mxu0 0.0
    %352 = vmatprep.subr.mxu0 0.0
    %353 = vmatpush1.xpose.msra.mxu0 0.0
    %354 = vmatprep.subr.mxu0 0.0
    %355 = vmatpush1.xpose.msra.mxu0 0.0
    %356 = vmatprep.subr.mxu0 0.0
    %357 = vmatpush1.xpose.msra.mxu0 0.0
    %358 = vmatprep.subr.mxu0 0.0
    %359 = vmatpush1.xpose.msra.mxu0 0.0
    %360 = vmatprep.subr.mxu0 0.0
    %361 = vmatpush1.xpose.msra.mxu0 0.0
    %362 = vmatprep.subr.mxu0 0.0
    %363 = vmatpush1.xpose.msra.mxu0 0.0
    %364 = vmatprep.subr.mxu0 0.0
    %365 = vmatpush1.xpose.msra.mxu0 0.0
    %366 = vmatprep.subr.mxu0 0.0
    %367 = vmatpush1.xpose.msra.mxu0 0.0
    %368 = vmatprep.subr.mxu0 0.0
    %369 = vmatpush1.xpose.msra.mxu0 0.0
    %370 = vmatprep.subr.mxu0 0.0
    %371 = vmatpush1.xpose.msra.mxu0 0.0
    %372 = vmatprep.subr.mxu0 0.0
    %373 = vmatpush1.xpose.msra.mxu0 0.0
    %374 = vmatprep.subr.mxu0 0.0
    %375 = vmatpush1.xpose.msra.mxu0 0.0
    %376 = vmatprep.subr.mxu0 0.0
    %377 = vmatpush1.xpose.msra.mxu0 0.0
    %378 = vmatprep.subr.mxu0 0.0
    %379 = vmatpush1.xpose.msra.mxu0 0.0
    %380 = vmatprep.subr.mxu0 0.0
    %381 = vmatpush1.xpose.msra.mxu0 0.0
    %382 = vmatprep.subr.mxu0 0.0
    %383 = vmatpush1.xpose.msra.mxu0 0.0
    %384 = vmatprep.subr.mxu0 0.0
    %385 = vmatpush1.xpose.msra.mxu0 0.0
    %386 = vmatprep.subr.mxu0 0.0
    %387 = vmatpush1.xpose.msra.mxu0 0.0
    %388 = vmatprep.subr.mxu0 0.0
    %389 = vmatpush1.xpose.msra.mxu0 0.0
    %390 = vmatprep.subr.mxu0 0.0
    %391 = vmatpush1.xpose.msra.mxu0 0.0
    %392 = vmatprep.subr.mxu0 0.0
    %393 = vmatpush1.xpose.msra.mxu0 0.0
    %394 = vmatprep.subr.mxu0 0.0
    %395 = vmatpush1.xpose.msra.mxu0 0.0
    %396 = vmatprep.subr.mxu0 0.0
    %397 = vmatpush1.xpose.msra.mxu0 0.0
    %398 = vmatprep.subr.mxu0 0.0
    %399 = vmatpush1.xpose.msra.mxu0 0.0
    %400 = vmatprep.subr.mxu0 0.0
    %401 = vmatpush1.xpose.msra.mxu0 0.0
    %402 = vmatprep.subr.mxu0 0.0
    %403 = vmatpush1.xpose.msra.mxu0 0.0
    %404 = vmatprep.subr.mxu0 0.0
    %405 = vmatpush1.xpose.msra.mxu0 0.0
    %406 = vmatprep.mubr.f32.mxu0 0.0
    %407 = vmatmul.mubr.f32.gmra.mrb[0].mxu0 %v338
    %v408 = vpop.f32.mrb[0].mxu0
    %v409 = vadd.f32 0.0, %v408
    %v410 = vpop.f32.mrb[0].mxu0
    %411 = vdwg.mxu0
    %413 = vrot.lane.b32.xlu0 %v249, 96
    %v414 = vpop.permute.xlu0 %413
    %v415 = vsel %vm260, %v249, 0
    %v417 = vsel %vm260, %v414, 0
    %419 = vmatprep.subr.mxu0 0.0
    %420 = vmatpush1.xpose.msra.mxu0 %v417
    %421 = vmatprep.subr.mxu0 0.0
    %422 = vmatpush1.xpose.msra.mxu0 0.0
    %423 = vmatprep.subr.mxu0 0.0
    %424 = vmatpush1.xpose.msra.mxu0 0.0
    %425 = vmatprep.subr.mxu0 0.0
    %426 = vmatpush1.xpose.msra.mxu0 0.0
    %427 = vmatprep.subr.mxu0 0.0
    %428 = vmatpush1.xpose.msra.mxu0 0.0
    %429 = vmatprep.subr.mxu0 0.0
    %430 = vmatpush1.xpose.msra.mxu0 0.0
    %431 = vmatprep.subr.mxu0 0.0
    %432 = vmatpush1.xpose.msra.mxu0 0.0
    %433 = vmatprep.subr.mxu0 0.0
    %434 = vmatpush1.xpose.msra.mxu0 0.0
    %435 = vmatprep.subr.mxu0 0.0
    %436 = vmatpush1.xpose.msra.mxu0 0.0
    %437 = vmatprep.subr.mxu0 0.0
    %438 = vmatpush1.xpose.msra.mxu0 0.0
    %439 = vmatprep.subr.mxu0 0.0
    %440 = vmatpush1.xpose.msra.mxu0 0.0
    %441 = vmatprep.subr.mxu0 0.0
    %442 = vmatpush1.xpose.msra.mxu0 0.0
    %443 = vmatprep.subr.mxu0 0.0
    %444 = vmatpush1.xpose.msra.mxu0 0.0
    %445 = vmatprep.subr.mxu0 0.0
    %446 = vmatpush1.xpose.msra.mxu0 0.0
    %447 = vmatprep.subr.mxu0 0.0
    %448 = vmatpush1.xpose.msra.mxu0 0.0
    %449 = vmatprep.subr.mxu0 0.0
    %450 = vmatpush1.xpose.msra.mxu0 0.0
    %451 = vmatprep.subr.mxu0 0.0
    %452 = vmatpush1.xpose.msra.mxu0 0.0
    %453 = vmatprep.subr.mxu0 0.0
    %454 = vmatpush1.xpose.msra.mxu0 0.0
    %455 = vmatprep.subr.mxu0 0.0
    %456 = vmatpush1.xpose.msra.mxu0 0.0
    %457 = vmatprep.subr.mxu0 0.0
    %458 = vmatpush1.xpose.msra.mxu0 0.0
    %459 = vmatprep.subr.mxu0 0.0
    %460 = vmatpush1.xpose.msra.mxu0 0.0
    %461 = vmatprep.subr.mxu0 0.0
    %462 = vmatpush1.xpose.msra.mxu0 0.0
    %463 = vmatprep.subr.mxu0 0.0
    %464 = vmatpush1.xpose.msra.mxu0 0.0
    %465 = vmatprep.subr.mxu0 0.0
    %466 = vmatpush1.xpose.msra.mxu0 0.0
    %467 = vmatprep.subr.mxu0 0.0
    %468 = vmatpush1.xpose.msra.mxu0 0.0
    %469 = vmatprep.subr.mxu0 0.0
    %470 = vmatpush1.xpose.msra.mxu0 0.0
    %471 = vmatprep.subr.mxu0 0.0
    %472 = vmatpush1.xpose.msra.mxu0 0.0
    %473 = vmatprep.subr.mxu0 0.0
    %474 = vmatpush1.xpose.msra.mxu0 0.0
    %475 = vmatprep.subr.mxu0 0.0
    %476 = vmatpush1.xpose.msra.mxu0 0.0
    %477 = vmatprep.subr.mxu0 0.0
    %478 = vmatpush1.xpose.msra.mxu0 0.0
    %479 = vmatprep.subr.mxu0 0.0
    %480 = vmatpush1.xpose.msra.mxu0 0.0
    %481 = vmatprep.subr.mxu0 0.0
    %482 = vmatpush1.xpose.msra.mxu0 0.0
    %483 = vmatprep.mubr.f32.mxu0 0.0
    %484 = vmatmul.mubr.f32.gmra.mrb[0].mxu0 %v415
    %v485 = vpop.f32.mrb[0].mxu0
    %v486 = vadd.f32 0.0, %v485
    %v487 = vpop.f32.mrb[0].mxu0
    %488 = vdwg.mxu0
    %490 = vrot.lane.b32.xlu0 %v254, 96
    %v491 = vpop.permute.xlu0 %490
    %v492 = vsel %vm260, %v254, 0
    %v494 = vsel %vm260, %v491, 0
    %496 = vmatprep.subr.mxu0 0.0
    %497 = vmatpush1.xpose.msra.mxu0 %v494
    %498 = vmatprep.subr.mxu0 0.0
    %499 = vmatpush1.xpose.msra.mxu0 0.0
    %500 = vmatprep.subr.mxu0 0.0
    %501 = vmatpush1.xpose.msra.mxu0 0.0
    %502 = vmatprep.subr.mxu0 0.0
    %503 = vmatpush1.xpose.msra.mxu0 0.0
    %504 = vmatprep.subr.mxu0 0.0
    %505 = vmatpush1.xpose.msra.mxu0 0.0
    %506 = vmatprep.subr.mxu0 0.0
    %507 = vmatpush1.xpose.msra.mxu0 0.0
    %508 = vmatprep.subr.mxu0 0.0
    %509 = vmatpush1.xpose.msra.mxu0 0.0
    %510 = vmatprep.subr.mxu0 0.0
    %511 = vmatpush1.xpose.msra.mxu0 0.0
    %512 = vmatprep.subr.mxu0 0.0
    %513 = vmatpush1.xpose.msra.mxu0 0.0
    %514 = vmatprep.subr.mxu0 0.0
    %515 = vmatpush1.xpose.msra.mxu0 0.0
    %516 = vmatprep.subr.mxu0 0.0
    %517 = vmatpush1.xpose.msra.mxu0 0.0
    %518 = vmatprep.subr.mxu0 0.0
    %519 = vmatpush1.xpose.msra.mxu0 0.0
    %520 = vmatprep.subr.mxu0 0.0
    %521 = vmatpush1.xpose.msra.mxu0 0.0
    %522 = vmatprep.subr.mxu0 0.0
    %523 = vmatpush1.xpose.msra.mxu0 0.0
    %524 = vmatprep.subr.mxu0 0.0
    %525 = vmatpush1.xpose.msra.mxu0 0.0
    %526 = vmatprep.subr.mxu0 0.0
    %527 = vmatpush1.xpose.msra.mxu0 0.0
    %528 = vmatprep.subr.mxu0 0.0
    %529 = vmatpush1.xpose.msra.mxu0 0.0
    %530 = vmatprep.subr.mxu0 0.0
    %531 = vmatpush1.xpose.msra.mxu0 0.0
    %532 = vmatprep.subr.mxu0 0.0
    %533 = vmatpush1.xpose.msra.mxu0 0.0
    %534 = vmatprep.subr.mxu0 0.0
    %535 = vmatpush1.xpose.msra.mxu0 0.0
    %536 = vmatprep.subr.mxu0 0.0
    %537 = vmatpush1.xpose.msra.mxu0 0.0
    %538 = vmatprep.subr.mxu0 0.0
    %539 = vmatpush1.xpose.msra.mxu0 0.0
    %540 = vmatprep.subr.mxu0 0.0
    %541 = vmatpush1.xpose.msra.mxu0 0.0
    %542 = vmatprep.subr.mxu0 0.0
    %543 = vmatpush1.xpose.msra.mxu0 0.0
    %544 = vmatprep.subr.mxu0 0.0
    %545 = vmatpush1.xpose.msra.mxu0 0.0
    %546 = vmatprep.subr.mxu0 0.0
    %547 = vmatpush1.xpose.msra.mxu0 0.0
    %548 = vmatprep.subr.mxu0 0.0
    %549 = vmatpush1.xpose.msra.mxu0 0.0
    %550 = vmatprep.subr.mxu0 0.0
    %551 = vmatpush1.xpose.msra.mxu0 0.0
    %552 = vmatprep.subr.mxu0 0.0
    %553 = vmatpush1.xpose.msra.mxu0 0.0
    %554 = vmatprep.subr.mxu0 0.0
    %555 = vmatpush1.xpose.msra.mxu0 0.0
    %556 = vmatprep.subr.mxu0 0.0
    %557 = vmatpush1.xpose.msra.mxu0 0.0
    %558 = vmatprep.subr.mxu0 0.0
    %559 = vmatpush1.xpose.msra.mxu0 0.0
    %560 = vmatprep.mubr.f32.mxu0 0.0
    %561 = vmatmul.mubr.f32.gmra.mrb[0].mxu0 %v492
    %v562 = vpop.f32.mrb[0].mxu0
    %v563 = vadd.f32 0.0, %v562
    %v564 = vpop.f32.mrb[0].mxu0
    %565 = vdwg.mxu0
    %v566 = vmul.f32 %v332, 0.35355338
    %v567 = vmul.f32 %v409, 0.35355338
    %v568 = vmul.f32 %v486, 0.35355338
    %v569 = vmul.f32 %v563, 0.35355338
    %v570 = vsel %vm260, %v566, -inf
    %571 = vmax.xlane.f32.xlu0 %v570
    %v572 = vpop.xlane.xlu0 %571
    %v573 = vsel %vm260, %v567, -inf
    %574 = vmax.xlane.f32.xlu0 %v573
    %v575 = vpop.xlane.xlu0 %574
    %v576 = vsel %vm260, %v568, -inf
    %577 = vmax.xlane.f32.xlu0 %v576
    %v578 = vpop.xlane.xlu0 %577
    %v579 = vsel %vm260, %v569, -inf
    %580 = vmax.xlane.f32.xlu0 %v579
    %v581 = vpop.xlane.xlu0 %580
    %v582 = vsub.f32 %v566, %v572
    %v583 = vsub.f32 %v567, %v575
    %v584 = vsub.f32 %v568, %v578
    %v585 = vsub.f32 %v569, %v581
    %v586 = vmul.f32 %v582, 1.442695
    %v587 = vpow.pop %v586
    %v588 = vmul.f32 %v583, 1.442695
    %v589 = vpow.pop %v588
    %v590 = vmul.f32 %v584, 1.442695
    %v591 = vpow.pop %v590
    %v592 = vmul.f32 %v585, 1.442695
    %v593 = vpow.pop %v592
    %v594 = vsel %vm260, %v587, 0.0
    %595 = vadd.xlane.f32.xlu0 %v594
    %v596 = vpop.xlane.xlu0 %595
    %v597 = vsel %vm260, %v589, 0.0
    %598 = vadd.xlane.f32.xlu0 %v597
    %v599 = vpop.xlane.xlu0 %598
    %v600 = vsel %vm260, %v591, 0.0
    %601 = vadd.xlane.f32.xlu0 %v600
    %v602 = vpop.xlane.xlu0 %601
    %v603 = vsel %vm260, %v593, 0.0
    %604 = vadd.xlane.f32.xlu0 %v603
    %v605 = vpop.xlane.xlu0 %604
    %v606 = vrcp.pop %v596
    %v607 = vrcp.pop %v599
    %v608 = vrcp.pop %v602
    %v609 = vrcp.pop %v605
    %v610 = vmul.f32 %v596, %v606
    %v611 = vmul.f32 %v599, %v607
    %v612 = vmul.f32 %v602, %v608
    %v613 = vmul.f32 %v605, %v609
    %v614 = vsub.f32 2.0, %v610
    %v615 = vsub.f32 2.0, %v611
    %v616 = vsub.f32 2.0, %v612
    %v617 = vsub.f32 2.0, %v613
    %v618 = vmul.f32 %v606, %v614
    %v619 = vmul.f32 %v607, %v615
    %v620 = vmul.f32 %v608, %v616
    %v621 = vmul.f32 %v609, %v617
    %v622 = vmul.f32 %v587, %v618
    %v623 = vmul.f32 %v589, %v619
    %v624 = vmul.f32 %v591, %v620
    %v625 = vmul.f32 %v593, %v621
    %626 = vrot.lane.b32.xlu0 %v239, 64
    %v627 = vpop.permute.xlu0 %626
    %v630 = vsel %vm260, %v622, 0
    %632 = vmatprep.subr.mxu0 0.0
    %633 = vmatpush1.msra.mxu0 %v627
    %634 = vmatprep.subr.mxu0 0.0
    %635 = vmatpush1.msra.mxu0 0.0
    %636 = vmatprep.subr.mxu0 0.0
    %637 = vmatpush1.msra.mxu0 0.0
    %638 = vmatprep.subr.mxu0 0.0
    %639 = vmatpush1.msra.mxu0 0.0
    %640 = vmatprep.subr.mxu0 0.0
    %641 = vmatpush1.msra.mxu0 0.0
    %642 = vmatprep.subr.mxu0 0.0
    %643 = vmatpush1.msra.mxu0 0.0
    %644 = vmatprep.subr.mxu0 0.0
    %645 = vmatpush1.msra.mxu0 0.0
    %646 = vmatprep.subr.mxu0 0.0
    %647 = vmatpush1.msra.mxu0 0.0
    %648 = vmatprep.subr.mxu0 0.0
    %649 = vmatpush1.msra.mxu0 0.0
    %650 = vmatprep.subr.mxu0 0.0
    %651 = vmatpush1.msra.mxu0 0.0
    %652 = vmatprep.subr.mxu0 0.0
    %653 = vmatpush1.msra.mxu0 0.0
    %654 = vmatprep.subr.mxu0 0.0
    %655 = vmatpush1.msra.mxu0 0.0
    %656 = vmatprep.subr.mxu0 0.0
    %657 = vmatpush1.msra.mxu0 0.0
    %658 = vmatprep.subr.mxu0 0.0
    %659 = vmatpush1.msra.mxu0 0.0
    %660 = vmatprep.subr.mxu0 0.0
    %661 = vmatpush1.msra.mxu0 0.0
    %662 = vmatprep.subr.mxu0 0.0
    %663 = vmatpush1.msra.mxu0 0.0
    %664 = vmatprep.subr.mxu0 0.0
    %665 = vmatpush1.msra.mxu0 0.0
    %666 = vmatprep.subr.mxu0 0.0
    %667 = vmatpush1.msra.mxu0 0.0
    %668 = vmatprep.subr.mxu0 0.0
    %669 = vmatpush1.msra.mxu0 0.0
    %670 = vmatprep.subr.mxu0 0.0
    %671 = vmatpush1.msra.mxu0 0.0
    %672 = vmatprep.subr.mxu0 0.0
    %673 = vmatpush1.msra.mxu0 0.0
    %674 = vmatprep.subr.mxu0 0.0
    %675 = vmatpush1.msra.mxu0 0.0
    %676 = vmatprep.subr.mxu0 0.0
    %677 = vmatpush1.msra.mxu0 0.0
    %678 = vmatprep.subr.mxu0 0.0
    %679 = vmatpush1.msra.mxu0 0.0
    %680 = vmatprep.subr.mxu0 0.0
    %681 = vmatpush1.msra.mxu0 0.0
    %682 = vmatprep.subr.mxu0 0.0
    %683 = vmatpush1.msra.mxu0 0.0
    %684 = vmatprep.subr.mxu0 0.0
    %685 = vmatpush1.msra.mxu0 0.0
    %686 = vmatprep.subr.mxu0 0.0
    %687 = vmatpush1.msra.mxu0 0.0
    %688 = vmatprep.subr.mxu0 0.0
    %689 = vmatpush1.msra.mxu0 0.0
    %690 = vmatprep.subr.mxu0 0.0
    %691 = vmatpush1.msra.mxu0 0.0
    %692 = vmatprep.subr.mxu0 0.0
    %693 = vmatpush1.msra.mxu0 0.0
    %694 = vmatprep.subr.mxu0 0.0
    %695 = vmatpush1.msra.mxu0 0.0
    %696 = vmatprep.mubr.f32.mxu0 0.0
    %697 = vmatmul.mubr.f32.gmra.mrb[0].mxu0 %v630
    %v698 = vpop.f32.mrb[0].mxu0
    %v699 = vadd.f32 0.0, %v698
    %v700 = vpop.f32.mrb[0].mxu0
    %701 = vdwg.mxu0
    %702 = vrot.lane.b32.xlu0 %v244, 64
    %v703 = vpop.permute.xlu0 %702
    %v706 = vsel %vm260, %v623, 0
    %708 = vmatprep.subr.mxu0 0.0
    %709 = vmatpush1.msra.mxu0 %v703
    %710 = vmatprep.subr.mxu0 0.0
    %711 = vmatpush1.msra.mxu0 0.0
    %712 = vmatprep.subr.mxu0 0.0
    %713 = vmatpush1.msra.mxu0 0.0
    %714 = vmatprep.subr.mxu0 0.0
    %715 = vmatpush1.msra.mxu0 0.0
    %716 = vmatprep.subr.mxu0 0.0
    %717 = vmatpush1.msra.mxu0 0.0
    %718 = vmatprep.subr.mxu0 0.0
    %719 = vmatpush1.msra.mxu0 0.0
    %720 = vmatprep.subr.mxu0 0.0
    %721 = vmatpush1.msra.mxu0 0.0
    %722 = vmatprep.subr.mxu0 0.0
    %723 = vmatpush1.msra.mxu0 0.0
    %724 = vmatprep.subr.mxu0 0.0
    %725 = vmatpush1.msra.mxu0 0.0
    %726 = vmatprep.subr.mxu0 0.0
    %727 = vmatpush1.msra.mxu0 0.0
    %728 = vmatprep.subr.mxu0 0.0
    %729 = vmatpush1.msra.mxu0 0.0
    %730 = vmatprep.subr.mxu0 0.0
    %731 = vmatpush1.msra.mxu0 0.0
    %732 = vmatprep.subr.mxu0 0.0
    %733 = vmatpush1.msra.mxu0 0.0
    %734 = vmatprep.subr.mxu0 0.0
    %735 = vmatpush1.msra.mxu0 0.0
    %736 = vmatprep.subr.mxu0 0.0
    %737 = vmatpush1.msra.mxu0 0.0
    %738 = vmatprep.subr.mxu0 0.0
    %739 = vmatpush1.msra.mxu0 0.0
    %740 = vmatprep.subr.mxu0 0.0
    %741 = vmatpush1.msra.mxu0 0.0
    %742 = vmatprep.subr.mxu0 0.0
    %743 = vmatpush1.msra.mxu0 0.0
    %744 = vmatprep.subr.mxu0 0.0
    %745 = vmatpush1.msra.mxu0 0.0
    %746 = vmatprep.subr.mxu0 0.0
    %747 = vmatpush1.msra.mxu0 0.0
    %748 = vmatprep.subr.mxu0 0.0
    %749 = vmatpush1.msra.mxu0 0.0
    %750 = vmatprep.subr.mxu0 0.0
    %751 = vmatpush1.msra.mxu0 0.0
    %752 = vmatprep.subr.mxu0 0.0
    %753 = vmatpush1.msra.mxu0 0.0
    %754 = vmatprep.subr.mxu0 0.0
    %755 = vmatpush1.msra.mxu0 0.0
    %756 = vmatprep.subr.mxu0 0.0
    %757 = vmatpush1.msra.mxu0 0.0
    %758 = vmatprep.subr.mxu0 0.0
    %759 = vmatpush1.msra.mxu0 0.0
    %760 = vmatprep.subr.mxu0 0.0
    %761 = vmatpush1.msra.mxu0 0.0
    %762 = vmatprep.subr.mxu0 0.0
    %763 = vmatpush1.msra.mxu0 0.0
    %764 = vmatprep.subr.mxu0 0.0
    %765 = vmatpush1.msra.mxu0 0.0
    %766 = vmatprep.subr.mxu0 0.0
    %767 = vmatpush1.msra.mxu0 0.0
    %768 = vmatprep.subr.mxu0 0.0
    %769 = vmatpush1.msra.mxu0 0.0
    %770 = vmatprep.subr.mxu0 0.0
    %771 = vmatpush1.msra.mxu0 0.0
    %772 = vmatprep.mubr.f32.mxu0 0.0
    %773 = vmatmul.mubr.f32.gmra.mrb[0].mxu0 %v706
    %v774 = vpop.f32.mrb[0].mxu0
    %v775 = vadd.f32 0.0, %v774
    %v776 = vpop.f32.mrb[0].mxu0
    %777 = vdwg.mxu0
    %778 = vrot.lane.b32.xlu0 %v249, 64
    %v779 = vpop.permute.xlu0 %778
    %v782 = vsel %vm260, %v624, 0
    %784 = vmatprep.subr.mxu0 0.0
    %785 = vmatpush1.msra.mxu0 %v779
    %786 = vmatprep.subr.mxu0 0.0
    %787 = vmatpush1.msra.mxu0 0.0
    %788 = vmatprep.subr.mxu0 0.0
    %789 = vmatpush1.msra.mxu0 0.0
    %790 = vmatprep.subr.mxu0 0.0
    %791 = vmatpush1.msra.mxu0 0.0
    %792 = vmatprep.subr.mxu0 0.0
    %793 = vmatpush1.msra.mxu0 0.0
    %794 = vmatprep.subr.mxu0 0.0
    %795 = vmatpush1.msra.mxu0 0.0
    %796 = vmatprep.subr.mxu0 0.0
    %797 = vmatpush1.msra.mxu0 0.0
    %798 = vmatprep.subr.mxu0 0.0
    %799 = vmatpush1.msra.mxu0 0.0
    %800 = vmatprep.subr.mxu0 0.0
    %801 = vmatpush1.msra.mxu0 0.0
    %802 = vmatprep.subr.mxu0 0.0
    %803 = vmatpush1.msra.mxu0 0.0
    %804 = vmatprep.subr.mxu0 0.0
    %805 = vmatpush1.msra.mxu0 0.0
    %806 = vmatprep.subr.mxu0 0.0
    %807 = vmatpush1.msra.mxu0 0.0
    %808 = vmatprep.subr.mxu0 0.0
    %809 = vmatpush1.msra.mxu0 0.0
    %810 = vmatprep.subr.mxu0 0.0
    %811 = vmatpush1.msra.mxu0 0.0
    %812 = vmatprep.subr.mxu0 0.0
    %813 = vmatpush1.msra.mxu0 0.0
    %814 = vmatprep.subr.mxu0 0.0
    %815 = vmatpush1.msra.mxu0 0.0
    %816 = vmatprep.subr.mxu0 0.0
    %817 = vmatpush1.msra.mxu0 0.0
    %818 = vmatprep.subr.mxu0 0.0
    %819 = vmatpush1.msra.mxu0 0.0
    %820 = vmatprep.subr.mxu0 0.0
    %821 = vmatpush1.msra.mxu0 0.0
    %822 = vmatprep.subr.mxu0 0.0
    %823 = vmatpush1.msra.mxu0 0.0
    %824 = vmatprep.subr.mxu0 0.0
    %825 = vmatpush1.msra.mxu0 0.0
    %826 = vmatprep.subr.mxu0 0.0
    %827 = vmatpush1.msra.mxu0 0.0
    %828 = vmatprep.subr.mxu0 0.0
    %829 = vmatpush1.msra.mxu0 0.0
    %830 = vmatprep.subr.mxu0 0.0
    %831 = vmatpush1.msra.mxu0 0.0
    %832 = vmatprep.subr.mxu0 0.0
    %833 = vmatpush1.msra.mxu0 0.0
    %834 = vmatprep.subr.mxu0 0.0
    %835 = vmatpush1.msra.mxu0 0.0
    %836 = vmatprep.subr.mxu0 0.0
    %837 = vmatpush1.msra.mxu0 0.0
    %838 = vmatprep.subr.mxu0 0.0
    %839 = vmatpush1.msra.mxu0 0.0
    %840 = vmatprep.subr.mxu0 0.0
    %841 = vmatpush1.msra.mxu0 0.0
    %842 = vmatprep.subr.mxu0 0.0
    %843 = vmatpush1.msra.mxu0 0.0
    %844 = vmatprep.subr.mxu0 0.0
    %845 = vmatpush1.msra.mxu0 0.0
    %846 = vmatprep.subr.mxu0 0.0
    %847 = vmatpush1.msra.mxu0 0.0
    %848 = vmatprep.mubr.f32.mxu0 0.0
    %849 = vmatmul.mubr.f32.gmra.mrb[0].mxu0 %v782
    %v850 = vpop.f32.mrb[0].mxu0
    %v851 = vadd.f32 0.0, %v850
    %v852 = vpop.f32.mrb[0].mxu0
    %853 = vdwg.mxu0
    %854 = vrot.lane.b32.xlu0 %v254, 64
    %v855 = vpop.permute.xlu0 %854
    %v858 = vsel %vm260, %v625, 0
    %860 = vmatprep.subr.mxu0 0.0
    %861 = vmatpush1.msra.mxu0 %v855
    %862 = vmatprep.subr.mxu0 0.0
    %863 = vmatpush1.msra.mxu0 0.0
    %864 = vmatprep.subr.mxu0 0.0
    %865 = vmatpush1.msra.mxu0 0.0
    %866 = vmatprep.subr.mxu0 0.0
    %867 = vmatpush1.msra.mxu0 0.0
    %868 = vmatprep.subr.mxu0 0.0
    %869 = vmatpush1.msra.mxu0 0.0
    %870 = vmatprep.subr.mxu0 0.0
    %871 = vmatpush1.msra.mxu0 0.0
    %872 = vmatprep.subr.mxu0 0.0
    %873 = vmatpush1.msra.mxu0 0.0
    %874 = vmatprep.subr.mxu0 0.0
    %875 = vmatpush1.msra.mxu0 0.0
    %876 = vmatprep.subr.mxu0 0.0
    %877 = vmatpush1.msra.mxu0 0.0
    %878 = vmatprep.subr.mxu0 0.0
    %879 = vmatpush1.msra.mxu0 0.0
    %880 = vmatprep.subr.mxu0 0.0
    %881 = vmatpush1.msra.mxu0 0.0
    %882 = vmatprep.subr.mxu0 0.0
    %883 = vmatpush1.msra.mxu0 0.0
    %884 = vmatprep.subr.mxu0 0.0
    %885 = vmatpush1.msra.mxu0 0.0
    %886 = vmatprep.subr.mxu0 0.0
    %887 = vmatpush1.msra.mxu0 0.0
    %888 = vmatprep.subr.mxu0 0.0
    %889 = vmatpush1.msra.mxu0 0.0
    %890 = vmatprep.subr.mxu0 0.0
    %891 = vmatpush1.msra.mxu0 0.0
    %892 = vmatprep.subr.mxu0 0.0
    %893 = vmatpush1.msra.mxu0 0.0
    %894 = vmatprep.subr.mxu0 0.0
    %895 = vmatpush1.msra.mxu0 0.0
    %896 = vmatprep.subr.mxu0 0.0
    %897 = vmatpush1.msra.mxu0 0.0
    %898 = vmatprep.subr.mxu0 0.0
    %899 = vmatpush1.msra.mxu0 0.0
    %900 = vmatprep.subr.mxu0 0.0
    %901 = vmatpush1.msra.mxu0 0.0
    %902 = vmatprep.subr.mxu0 0.0
    %903 = vmatpush1.msra.mxu0 0.0
    %904 = vmatprep.subr.mxu0 0.0
    %905 = vmatpush1.msra.mxu0 0.0
    %906 = vmatprep.subr.mxu0 0.0
    %907 = vmatpush1.msra.mxu0 0.0
    %908 = vmatprep.subr.mxu0 0.0
    %909 = vmatpush1.msra.mxu0 0.0
    %910 = vmatprep.subr.mxu0 0.0
    %911 = vmatpush1.msra.mxu0 0.0
    %912 = vmatprep.subr.mxu0 0.0
    %913 = vmatpush1.msra.mxu0 0.0
    %914 = vmatprep.subr.mxu0 0.0
    %915 = vmatpush1.msra.mxu0 0.0
    %916 = vmatprep.subr.mxu0 0.0
    %917 = vmatpush1.msra.mxu0 0.0
    %918 = vmatprep.subr.mxu0 0.0
    %919 = vmatpush1.msra.mxu0 0.0
    %920 = vmatprep.subr.mxu0 0.0
    %921 = vmatpush1.msra.mxu0 0.0
    %922 = vmatprep.subr.mxu0 0.0
    %923 = vmatpush1.msra.mxu0 0.0
    %924 = vmatprep.mubr.f32.mxu0 0.0
    %925 = vmatmul.mubr.f32.gmra.mrb[0].mxu0 %v858
    %v926 = vpop.f32.mrb[0].mxu0
    %v927 = vadd.f32 0.0, %v926
    %v928 = vpop.f32.mrb[0].mxu0
    %929 = vdwg.mxu0
    %930 = vrot.lane.b32.xlu0 %v239, 120
    %v931 = vpop.permute.xlu0 %930
    %932 = vrot.lane.b32.xlu0 %v239, 88
    %v933 = vpop.permute.xlu0 %932
    %v934 = vsel %vm260, %v931, 0
    %v936 = vsel %vm260, %v933, 0
    %938 = vmatprep.subr.mxu0 0.0
    %939 = vmatpush1.xpose.msra.mxu0 %v936
    %940 = vmatprep.subr.mxu0 0.0
    %941 = vmatpush1.xpose.msra.mxu0 0.0
    %942 = vmatprep.subr.mxu0 0.0
    %943 = vmatpush1.xpose.msra.mxu0 0.0
    %944 = vmatprep.subr.mxu0 0.0
    %945 = vmatpush1.xpose.msra.mxu0 0.0
    %946 = vmatprep.subr.mxu0 0.0
    %947 = vmatpush1.xpose.msra.mxu0 0.0
    %948 = vmatprep.subr.mxu0 0.0
    %949 = vmatpush1.xpose.msra.mxu0 0.0
    %950 = vmatprep.subr.mxu0 0.0
    %951 = vmatpush1.xpose.msra.mxu0 0.0
    %952 = vmatprep.subr.mxu0 0.0
    %953 = vmatpush1.xpose.msra.mxu0 0.0
    %954 = vmatprep.subr.mxu0 0.0
    %955 = vmatpush1.xpose.msra.mxu0 0.0
    %956 = vmatprep.subr.mxu0 0.0
    %957 = vmatpush1.xpose.msra.mxu0 0.0
    %958 = vmatprep.subr.mxu0 0.0
    %959 = vmatpush1.xpose.msra.mxu0 0.0
    %960 = vmatprep.subr.mxu0 0.0
    %961 = vmatpush1.xpose.msra.mxu0 0.0
    %962 = vmatprep.subr.mxu0 0.0
    %963 = vmatpush1.xpose.msra.mxu0 0.0
    %964 = vmatprep.subr.mxu0 0.0
    %965 = vmatpush1.xpose.msra.mxu0 0.0
    %966 = vmatprep.subr.mxu0 0.0
    %967 = vmatpush1.xpose.msra.mxu0 0.0
    %968 = vmatprep.subr.mxu0 0.0
    %969 = vmatpush1.xpose.msra.mxu0 0.0
    %970 = vmatprep.subr.mxu0 0.0
    %971 = vmatpush1.xpose.msra.mxu0 0.0
    %972 = vmatprep.subr.mxu0 0.0
    %973 = vmatpush1.xpose.msra.mxu0 0.0
    %974 = vmatprep.subr.mxu0 0.0
    %975 = vmatpush1.xpose.msra.mxu0 0.0
    %976 = vmatprep.subr.mxu0 0.0
    %977 = vmatpush1.xpose.msra.mxu0 0.0
    %978 = vmatprep.subr.mxu0 0.0
    %979 = vmatpush1.xpose.msra.mxu0 0.0
    %980 = vmatprep.subr.mxu0 0.0
    %981 = vmatpush1.xpose.msra.mxu0 0.0
    %982 = vmatprep.subr.mxu0 0.0
    %983 = vmatpush1.xpose.msra.mxu0 0.0
    %984 = vmatprep.subr.mxu0 0.0
    %985 = vmatpush1.xpose.msra.mxu0 0.0
    %986 = vmatprep.subr.mxu0 0.0
    %987 = vmatpush1.xpose.msra.mxu0 0.0
    %988 = vmatprep.subr.mxu0 0.0
    %989 = vmatpush1.xpose.msra.mxu0 0.0
    %990 = vmatprep.subr.mxu0 0.0
    %991 = vmatpush1.xpose.msra.mxu0 0.0
    %992 = vmatprep.subr.mxu0 0.0
    %993 = vmatpush1.xpose.msra.mxu0 0.0
    %994 = vmatprep.subr.mxu0 0.0
    %995 = vmatpush1.xpose.msra.mxu0 0.0
    %996 = vmatprep.subr.mxu0 0.0
    %997 = vmatpush1.xpose.msra.mxu0 0.0
    %998 = vmatprep.subr.mxu0 0.0
    %999 = vmatpush1.xpose.msra.mxu0 0.0
    %1000 = vmatprep.subr.mxu0 0.0
    %1001 = vmatpush1.xpose.msra.mxu0 0.0
    %1002 = vmatprep.mubr.f32.mxu0 0.0
    %1003 = vmatmul.mubr.f32.gmra.mrb[0].mxu0 %v934
    %v1004 = vpop.f32.mrb[0].mxu0
    %v1005 = vadd.f32 0.0, %v1004
    %v1006 = vpop.f32.mrb[0].mxu0
    %1007 = vdwg.mxu0
    %1008 = vrot.lane.b32.xlu0 %v244, 120
    %v1009 = vpop.permute.xlu0 %1008
    %1010 = vrot.lane.b32.xlu0 %v244, 88
    %v1011 = vpop.permute.xlu0 %1010
    %v1012 = vsel %vm260, %v1009, 0
    %v1014 = vsel %vm260, %v1011, 0
    %1016 = vmatprep.subr.mxu0 0.0
    %1017 = vmatpush1.xpose.msra.mxu0 %v1014
    %1018 = vmatprep.subr.mxu0 0.0
    %1019 = vmatpush1.xpose.msra.mxu0 0.0
    %1020 = vmatprep.subr.mxu0 0.0
    %1021 = vmatpush1.xpose.msra.mxu0 0.0
    %1022 = vmatprep.subr.mxu0 0.0
    %1023 = vmatpush1.xpose.msra.mxu0 0.0
    %1024 = vmatprep.subr.mxu0 0.0
    %1025 = vmatpush1.xpose.msra.mxu0 0.0
    %1026 = vmatprep.subr.mxu0 0.0
    %1027 = vmatpush1.xpose.msra.mxu0 0.0
    %1028 = vmatprep.subr.mxu0 0.0
    %1029 = vmatpush1.xpose.msra.mxu0 0.0
    %1030 = vmatprep.subr.mxu0 0.0
    %1031 = vmatpush1.xpose.msra.mxu0 0.0
    %1032 = vmatprep.subr.mxu0 0.0
    %1033 = vmatpush1.xpose.msra.mxu0 0.0
    %1034 = vmatprep.subr.mxu0 0.0
    %1035 = vmatpush1.xpose.msra.mxu0 0.0
    %1036 = vmatprep.subr.mxu0 0.0
    %1037 = vmatpush1.xpose.msra.mxu0 0.0
    %1038 = vmatprep.subr.mxu0 0.0
    %1039 = vmatpush1.xpose.msra.mxu0 0.0
    %1040 = vmatprep.subr.mxu0 0.0
    %1041 = vmatpush1.xpose.msra.mxu0 0.0
    %1042 = vmatprep.subr.mxu0 0.0
    %1043 = vmatpush1.xpose.msra.mxu0 0.0
    %1044 = vmatprep.subr.mxu0 0.0
    %1045 = vmatpush1.xpose.msra.mxu0 0.0
    %1046 = vmatprep.subr.mxu0 0.0
    %1047 = vmatpush1.xpose.msra.mxu0 0.0
    %1048 = vmatprep.subr.mxu0 0.0
    %1049 = vmatpush1.xpose.msra.mxu0 0.0
    %1050 = vmatprep.subr.mxu0 0.0
    %1051 = vmatpush1.xpose.msra.mxu0 0.0
    %1052 = vmatprep.subr.mxu0 0.0
    %1053 = vmatpush1.xpose.msra.mxu0 0.0
    %1054 = vmatprep.subr.mxu0 0.0
    %1055 = vmatpush1.xpose.msra.mxu0 0.0
    %1056 = vmatprep.subr.mxu0 0.0
    %1057 = vmatpush1.xpose.msra.mxu0 0.0
    %1058 = vmatprep.subr.mxu0 0.0
    %1059 = vmatpush1.xpose.msra.mxu0 0.0
    %1060 = vmatprep.subr.mxu0 0.0
    %1061 = vmatpush1.xpose.msra.mxu0 0.0
    %1062 = vmatprep.subr.mxu0 0.0
    %1063 = vmatpush1.xpose.msra.mxu0 0.0
    %1064 = vmatprep.subr.mxu0 0.0
    %1065 = vmatpush1.xpose.msra.mxu0 0.0
    %1066 = vmatprep.subr.mxu0 0.0
    %1067 = vmatpush1.xpose.msra.mxu0 0.0
    %1068 = vmatprep.subr.mxu0 0.0
    %1069 = vmatpush1.xpose.msra.mxu0 0.0
    %1070 = vmatprep.subr.mxu0 0.0
    %1071 = vmatpush1.xpose.msra.mxu0 0.0
    %1072 = vmatprep.subr.mxu0 0.0
    %1073 = vmatpush1.xpose.msra.mxu0 0.0
    %1074 = vmatprep.subr.mxu0 0.0
    %1075 = vmatpush1.xpose.msra.mxu0 0.0
    %1076 = vmatprep.subr.mxu0 0.0
    %1077 = vmatpush1.xpose.msra.mxu0 0.0
    %1078 = vmatprep.subr.mxu0 0.0
    %1079 = vmatpush1.xpose.msra.mxu0 0.0
    %1080 = vmatprep.mubr.f32.mxu0 0.0
    %1081 = vmatmul.mubr.f32.gmra.mrb[0].mxu0 %v1012
    %v1082 = vpop.f32.mrb[0].mxu0
    %v1083 = vadd.f32 0.0, %v1082
    %v1084 = vpop.f32.mrb[0].mxu0
    %1085 = vdwg.mxu0
    %1086 = vrot.lane.b32.xlu0 %v249, 120
    %v1087 = vpop.permute.xlu0 %1086
    %1088 = vrot.lane.b32.xlu0 %v249, 88
    %v1089 = vpop.permute.xlu0 %1088
    %v1090 = vsel %vm260, %v1087, 0
    %v1092 = vsel %vm260, %v1089, 0
    %1094 = vmatprep.subr.mxu0 0.0
    %1095 = vmatpush1.xpose.msra.mxu0 %v1092
    %1096 = vmatprep.subr.mxu0 0.0
    %1097 = vmatpush1.xpose.msra.mxu0 0.0
    %1098 = vmatprep.subr.mxu0 0.0
    %1099 = vmatpush1.xpose.msra.mxu0 0.0
    %1100 = vmatprep.subr.mxu0 0.0
    %1101 = vmatpush1.xpose.msra.mxu0 0.0
    %1102 = vmatprep.subr.mxu0 0.0
    %1103 = vmatpush1.xpose.msra.mxu0 0.0
    %1104 = vmatprep.subr.mxu0 0.0
    %1105 = vmatpush1.xpose.msra.mxu0 0.0
    %1106 = vmatprep.subr.mxu0 0.0
    %1107 = vmatpush1.xpose.msra.mxu0 0.0
    %1108 = vmatprep.subr.mxu0 0.0
    %1109 = vmatpush1.xpose.msra.mxu0 0.0
    %1110 = vmatprep.subr.mxu0 0.0
    %1111 = vmatpush1.xpose.msra.mxu0 0.0
    %1112 = vmatprep.subr.mxu0 0.0
    %1113 = vmatpush1.xpose.msra.mxu0 0.0
    %1114 = vmatprep.subr.mxu0 0.0
    %1115 = vmatpush1.xpose.msra.mxu0 0.0
    %1116 = vmatprep.subr.mxu0 0.0
    %1117 = vmatpush1.xpose.msra.mxu0 0.0
    %1118 = vmatprep.subr.mxu0 0.0
    %1119 = vmatpush1.xpose.msra.mxu0 0.0
    %1120 = vmatprep.subr.mxu0 0.0
    %1121 = vmatpush1.xpose.msra.mxu0 0.0
    %1122 = vmatprep.subr.mxu0 0.0
    %1123 = vmatpush1.xpose.msra.mxu0 0.0
    %1124 = vmatprep.subr.mxu0 0.0
    %1125 = vmatpush1.xpose.msra.mxu0 0.0
    %1126 = vmatprep.subr.mxu0 0.0
    %1127 = vmatpush1.xpose.msra.mxu0 0.0
    %1128 = vmatprep.subr.mxu0 0.0
    %1129 = vmatpush1.xpose.msra.mxu0 0.0
    %1130 = vmatprep.subr.mxu0 0.0
    %1131 = vmatpush1.xpose.msra.mxu0 0.0
    %1132 = vmatprep.subr.mxu0 0.0
    %1133 = vmatpush1.xpose.msra.mxu0 0.0
    %1134 = vmatprep.subr.mxu0 0.0
    %1135 = vmatpush1.xpose.msra.mxu0 0.0
    %1136 = vmatprep.subr.mxu0 0.0
    %1137 = vmatpush1.xpose.msra.mxu0 0.0
    %1138 = vmatprep.subr.mxu0 0.0
    %1139 = vmatpush1.xpose.msra.mxu0 0.0
    %1140 = vmatprep.subr.mxu0 0.0
    %1141 = vmatpush1.xpose.msra.mxu0 0.0
    %1142 = vmatprep.subr.mxu0 0.0
    %1143 = vmatpush1.xpose.msra.mxu0 0.0
    %1144 = vmatprep.subr.mxu0 0.0
    %1145 = vmatpush1.xpose.msra.mxu0 0.0
    %1146 = vmatprep.subr.mxu0 0.0
    %1147 = vmatpush1.xpose.msra.mxu0 0.0
    %1148 = vmatprep.subr.mxu0 0.0
    %1149 = vmatpush1.xpose.msra.mxu0 0.0
    %1150 = vmatprep.subr.mxu0 0.0
    %1151 = vmatpush1.xpose.msra.mxu0 0.0
    %1152 = vmatprep.subr.mxu0 0.0
    %1153 = vmatpush1.xpose.msra.mxu0 0.0
    %1154 = vmatprep.subr.mxu0 0.0
    %1155 = vmatpush1.xpose.msra.mxu0 0.0
    %1156 = vmatprep.subr.mxu0 0.0
    %1157 = vmatpush1.xpose.msra.mxu0 0.0
    %1158 = vmatprep.mubr.f32.mxu0 0.0
    %1159 = vmatmul.mubr.f32.gmra.mrb[0].mxu0 %v1090
    %v1160 = vpop.f32.mrb[0].mxu0
    %v1161 = vadd.f32 0.0, %v1160
    %v1162 = vpop.f32.mrb[0].mxu0
    %1163 = vdwg.mxu0
    %1164 = vrot.lane.b32.xlu0 %v254, 120
    %v1165 = vpop.permute.xlu0 %1164
    %1166 = vrot.lane.b32.xlu0 %v254, 88
    %v1167 = vpop.permute.xlu0 %1166
    %v1168 = vsel %vm260, %v1165, 0
    %v1170 = vsel %vm260, %v1167, 0
    %1172 = vmatprep.subr.mxu0 0.0
    %1173 = vmatpush1.xpose.msra.mxu0 %v1170
    %1174 = vmatprep.subr.mxu0 0.0
    %1175 = vmatpush1.xpose.msra.mxu0 0.0
    %1176 = vmatprep.subr.mxu0 0.0
    %1177 = vmatpush1.xpose.msra.mxu0 0.0
    %1178 = vmatprep.subr.mxu0 0.0
    %1179 = vmatpush1.xpose.msra.mxu0 0.0
    %1180 = vmatprep.subr.mxu0 0.0
    %1181 = vmatpush1.xpose.msra.mxu0 0.0
    %1182 = vmatprep.subr.mxu0 0.0
    %1183 = vmatpush1.xpose.msra.mxu0 0.0
    %1184 = vmatprep.subr.mxu0 0.0
    %1185 = vmatpush1.xpose.msra.mxu0 0.0
    %1186 = vmatprep.subr.mxu0 0.0
    %1187 = vmatpush1.xpose.msra.mxu0 0.0
    %1188 = vmatprep.subr.mxu0 0.0
    %1189 = vmatpush1.xpose.msra.mxu0 0.0
    %1190 = vmatprep.subr.mxu0 0.0
    %1191 = vmatpush1.xpose.msra.mxu0 0.0
    %1192 = vmatprep.subr.mxu0 0.0
    %1193 = vmatpush1.xpose.msra.mxu0 0.0
    %1194 = vmatprep.subr.mxu0 0.0
    %1195 = vmatpush1.xpose.msra.mxu0 0.0
    %1196 = vmatprep.subr.mxu0 0.0
    %1197 = vmatpush1.xpose.msra.mxu0 0.0
    %1198 = vmatprep.subr.mxu0 0.0
    %1199 = vmatpush1.xpose.msra.mxu0 0.0
    %1200 = vmatprep.subr.mxu0 0.0
    %1201 = vmatpush1.xpose.msra.mxu0 0.0
    %1202 = vmatprep.subr.mxu0 0.0
    %1203 = vmatpush1.xpose.msra.mxu0 0.0
    %1204 = vmatprep.subr.mxu0 0.0
    %1205 = vmatpush1.xpose.msra.mxu0 0.0
    %1206 = vmatprep.subr.mxu0 0.0
    %1207 = vmatpush1.xpose.msra.mxu0 0.0
    %1208 = vmatprep.subr.mxu0 0.0
    %1209 = vmatpush1.xpose.msra.mxu0 0.0
    %1210 = vmatprep.subr.mxu0 0.0
    %1211 = vmatpush1.xpose.msra.mxu0 0.0
    %1212 = vmatprep.subr.mxu0 0.0
    %1213 = vmatpush1.xpose.msra.mxu0 0.0
    %1214 = vmatprep.subr.mxu0 0.0
    %1215 = vmatpush1.xpose.msra.mxu0 0.0
    %1216 = vmatprep.subr.mxu0 0.0
    %1217 = vmatpush1.xpose.msra.mxu0 0.0
    %1218 = vmatprep.subr.mxu0 0.0
    %1219 = vmatpush1.xpose.msra.mxu0 0.0
    %1220 = vmatprep.subr.mxu0 0.0
    %1221 = vmatpush1.xpose.msra.mxu0 0.0
    %1222 = vmatprep.subr.mxu0 0.0
    %1223 = vmatpush1.xpose.msra.mxu0 0.0
    %1224 = vmatprep.subr.mxu0 0.0
    %1225 = vmatpush1.xpose.msra.mxu0 0.0
    %1226 = vmatprep.subr.mxu0 0.0
    %1227 = vmatpush1.xpose.msra.mxu0 0.0
    %1228 = vmatprep.subr.mxu0 0.0
    %1229 = vmatpush1.xpose.msra.mxu0 0.0
    %1230 = vmatprep.subr.mxu0 0.0
    %1231 = vmatpush1.xpose.msra.mxu0 0.0
    %1232 = vmatprep.subr.mxu0 0.0
    %1233 = vmatpush1.xpose.msra.mxu0 0.0
    %1234 = vmatprep.subr.mxu0 0.0
    %1235 = vmatpush1.xpose.msra.mxu0 0.0
    %1236 = vmatprep.mubr.f32.mxu0 0.0
    %1237 = vmatmul.mubr.f32.gmra.mrb[0].mxu0 %v1168
    %v1238 = vpop.f32.mrb[0].mxu0
    %v1239 = vadd.f32 0.0, %v1238
    %v1240 = vpop.f32.mrb[0].mxu0
    %1241 = vdwg.mxu0
    %v1242 = vmul.f32 %v1005, 0.35355338
    %v1243 = vmul.f32 %v1083, 0.35355338
    %v1244 = vmul.f32 %v1161, 0.35355338
    %v1245 = vmul.f32 %v1239, 0.35355338
    %v1246 = vsel %vm260, %v1242, -inf
    %1247 = vmax.xlane.f32.xlu0 %v1246
    %v1248 = vpop.xlane.xlu0 %1247
    %v1249 = vsel %vm260, %v1243, -inf
    %1250 = vmax.xlane.f32.xlu0 %v1249
    %v1251 = vpop.xlane.xlu0 %1250
    %v1252 = vsel %vm260, %v1244, -inf
    %1253 = vmax.xlane.f32.xlu0 %v1252
    %v1254 = vpop.xlane.xlu0 %1253
    %v1255 = vsel %vm260, %v1245, -inf
    %1256 = vmax.xlane.f32.xlu0 %v1255
    %v1257 = vpop.xlane.xlu0 %1256
    %v1258 = vsub.f32 %v1242, %v1248
    %v1259 = vsub.f32 %v1243, %v1251
    %v1260 = vsub.f32 %v1244, %v1254
    %v1261 = vsub.f32 %v1245, %v1257
    %v1262 = vmul.f32 %v1258, 1.442695
    %v1263 = vpow.pop %v1262
    %v1264 = vmul.f32 %v1259, 1.442695
    %v1265 = vpow.pop %v1264
    %v1266 = vmul.f32 %v1260, 1.442695
    %v1267 = vpow.pop %v1266
    %v1268 = vmul.f32 %v1261, 1.442695
    %v1269 = vpow.pop %v1268
    %v1270 = vsel %vm260, %v1263, 0.0
    %1271 = vadd.xlane.f32.xlu0 %v1270
    %v1272 = vpop.xlane.xlu0 %1271
    %v1273 = vsel %vm260, %v1265, 0.0
    %1274 = vadd.xlane.f32.xlu0 %v1273
    %v1275 = vpop.xlane.xlu0 %1274
    %v1276 = vsel %vm260, %v1267, 0.0
    %1277 = vadd.xlane.f32.xlu0 %v1276
    %v1278 = vpop.xlane.xlu0 %1277
    %v1279 = vsel %vm260, %v1269, 0.0
    %1280 = vadd.xlane.f32.xlu0 %v1279
    %v1281 = vpop.xlane.xlu0 %1280
    %v1282 = vrcp.pop %v1272
    %v1283 = vrcp.pop %v1275
    %v1284 = vrcp.pop %v1278
    %v1285 = vrcp.pop %v1281
    %v1286 = vmul.f32 %v1272, %v1282
    %v1287 = vmul.f32 %v1275, %v1283
    %v1288 = vmul.f32 %v1278, %v1284
    %v1289 = vmul.f32 %v1281, %v1285
    %v1290 = vsub.f32 2.0, %v1286
    %v1291 = vsub.f32 2.0, %v1287
    %v1292 = vsub.f32 2.0, %v1288
    %v1293 = vsub.f32 2.0, %v1289
    %v1294 = vmul.f32 %v1282, %v1290
    %v1295 = vmul.f32 %v1283, %v1291
    %v1296 = vmul.f32 %v1284, %v1292
    %v1297 = vmul.f32 %v1285, %v1293
    %v1298 = vmul.f32 %v1263, %v1294
    %v1299 = vmul.f32 %v1265, %v1295
    %v1300 = vmul.f32 %v1267, %v1296
    %v1301 = vmul.f32 %v1269, %v1297
    %1302 = vrot.lane.b32.xlu0 %v239, 56
    %v1303 = vpop.permute.xlu0 %1302
    %v1306 = vsel %vm260, %v1298, 0
    %1308 = vmatprep.subr.mxu0 0.0
    %1309 = vmatpush1.msra.mxu0 %v1303
    %1310 = vmatprep.subr.mxu0 0.0
    %1311 = vmatpush1.msra.mxu0 0.0
    %1312 = vmatprep.subr.mxu0 0.0
    %1313 = vmatpush1.msra.mxu0 0.0
    %1314 = vmatprep.subr.mxu0 0.0
    %1315 = vmatpush1.msra.mxu0 0.0
    %1316 = vmatprep.subr.mxu0 0.0
    %1317 = vmatpush1.msra.mxu0 0.0
    %1318 = vmatprep.subr.mxu0 0.0
    %1319 = vmatpush1.msra.mxu0 0.0
    %1320 = vmatprep.subr.mxu0 0.0
    %1321 = vmatpush1.msra.mxu0 0.0
    %1322 = vmatprep.subr.mxu0 0.0
    %1323 = vmatpush1.msra.mxu0 0.0
    %1324 = vmatprep.subr.mxu0 0.0
    %1325 = vmatpush1.msra.mxu0 0.0
    %1326 = vmatprep.subr.mxu0 0.0
    %1327 = vmatpush1.msra.mxu0 0.0
    %1328 = vmatprep.subr.mxu0 0.0
    %1329 = vmatpush1.msra.mxu0 0.0
    %1330 = vmatprep.subr.mxu0 0.0
    %1331 = vmatpush1.msra.mxu0 0.0
    %1332 = vmatprep.subr.mxu0 0.0
    %1333 = vmatpush1.msra.mxu0 0.0
    %1334 = vmatprep.subr.mxu0 0.0
    %1335 = vmatpush1.msra.mxu0 0.0
    %1336 = vmatprep.subr.mxu0 0.0
    %1337 = vmatpush1.msra.mxu0 0.0
    %1338 = vmatprep.subr.mxu0 0.0
    %1339 = vmatpush1.msra.mxu0 0.0
    %1340 = vmatprep.subr.mxu0 0.0
    %1341 = vmatpush1.msra.mxu0 0.0
    %1342 = vmatprep.subr.mxu0 0.0
    %1343 = vmatpush1.msra.mxu0 0.0
    %1344 = vmatprep.subr.mxu0 0.0
    %1345 = vmatpush1.msra.mxu0 0.0
    %1346 = vmatprep.subr.mxu0 0.0
    %1347 = vmatpush1.msra.mxu0 0.0
    %1348 = vmatprep.subr.mxu0 0.0
    %1349 = vmatpush1.msra.mxu0 0.0
    %1350 = vmatprep.subr.mxu0 0.0
    %1351 = vmatpush1.msra.mxu0 0.0
    %1352 = vmatprep.subr.mxu0 0.0
    %1353 = vmatpush1.msra.mxu0 0.0
    %1354 = vmatprep.subr.mxu0 0.0
    %1355 = vmatpush1.msra.mxu0 0.0
    %1356 = vmatprep.subr.mxu0 0.0
    %1357 = vmatpush1.msra.mxu0 0.0
    %1358 = vmatprep.subr.mxu0 0.0
    %1359 = vmatpush1.msra.mxu0 0.0
    %1360 = vmatprep.subr.mxu0 0.0
    %1361 = vmatpush1.msra.mxu0 0.0
    %1362 = vmatprep.subr.mxu0 0.0
    %1363 = vmatpush1.msra.mxu0 0.0
    %1364 = vmatprep.subr.mxu0 0.0
    %1365 = vmatpush1.msra.mxu0 0.0
    %1366 = vmatprep.subr.mxu0 0.0
    %1367 = vmatpush1.msra.mxu0 0.0
    %1368 = vmatprep.subr.mxu0 0.0
    %1369 = vmatpush1.msra.mxu0 0.0
    %1370 = vmatprep.subr.mxu0 0.0
    %1371 = vmatpush1.msra.mxu0 0.0
    %1372 = vmatprep.mubr.f32.mxu0 0.0
    %1373 = vmatmul.mubr.f32.gmra.mrb[0].mxu0 %v1306
    %v1374 = vpop.f32.mrb[0].mxu0
    %v1375 = vadd.f32 0.0, %v1374
    %v1376 = vpop.f32.mrb[0].mxu0
    %1377 = vdwg.mxu0
    %1378 = vrot.lane.b32.xlu0 %v244, 56
    %v1379 = vpop.permute.xlu0 %1378
    %v1382 = vsel %vm260, %v1299, 0
    %1384 = vmatprep.subr.mxu0 0.0
    %1385 = vmatpush1.msra.mxu0 %v1379
    %1386 = vmatprep.subr.mxu0 0.0
    %1387 = vmatpush1.msra.mxu0 0.0
    %1388 = vmatprep.subr.mxu0 0.0
    %1389 = vmatpush1.msra.mxu0 0.0
    %1390 = vmatprep.subr.mxu0 0.0
    %1391 = vmatpush1.msra.mxu0 0.0
    %1392 = vmatprep.subr.mxu0 0.0
    %1393 = vmatpush1.msra.mxu0 0.0
    %1394 = vmatprep.subr.mxu0 0.0
    %1395 = vmatpush1.msra.mxu0 0.0
    %1396 = vmatprep.subr.mxu0 0.0
    %1397 = vmatpush1.msra.mxu0 0.0
    %1398 = vmatprep.subr.mxu0 0.0
    %1399 = vmatpush1.msra.mxu0 0.0
    %1400 = vmatprep.subr.mxu0 0.0
    %1401 = vmatpush1.msra.mxu0 0.0
    %1402 = vmatprep.subr.mxu0 0.0
    %1403 = vmatpush1.msra.mxu0 0.0
    %1404 = vmatprep.subr.mxu0 0.0
    %1405 = vmatpush1.msra.mxu0 0.0
    %1406 = vmatprep.subr.mxu0 0.0
    %1407 = vmatpush1.msra.mxu0 0.0
    %1408 = vmatprep.subr.mxu0 0.0
    %1409 = vmatpush1.msra.mxu0 0.0
    %1410 = vmatprep.subr.mxu0 0.0
    %1411 = vmatpush1.msra.mxu0 0.0
    %1412 = vmatprep.subr.mxu0 0.0
    %1413 = vmatpush1.msra.mxu0 0.0
    %1414 = vmatprep.subr.mxu0 0.0
    %1415 = vmatpush1.msra.mxu0 0.0
    %1416 = vmatprep.subr.mxu0 0.0
    %1417 = vmatpush1.msra.mxu0 0.0
    %1418 = vmatprep.subr.mxu0 0.0
    %1419 = vmatpush1.msra.mxu0 0.0
    %1420 = vmatprep.subr.mxu0 0.0
    %1421 = vmatpush1.msra.mxu0 0.0
    %1422 = vmatprep.subr.mxu0 0.0
    %1423 = vmatpush1.msra.mxu0 0.0
    %1424 = vmatprep.subr.mxu0 0.0
    %1425 = vmatpush1.msra.mxu0 0.0
    %1426 = vmatprep.subr.mxu0 0.0
    %1427 = vmatpush1.msra.mxu0 0.0
    %1428 = vmatprep.subr.mxu0 0.0
    %1429 = vmatpush1.msra.mxu0 0.0
    %1430 = vmatprep.subr.mxu0 0.0
    %1431 = vmatpush1.msra.mxu0 0.0
    %1432 = vmatprep.subr.mxu0 0.0
    %1433 = vmatpush1.msra.mxu0 0.0
    %1434 = vmatprep.subr.mxu0 0.0
    %1435 = vmatpush1.msra.mxu0 0.0
    %1436 = vmatprep.subr.mxu0 0.0
    %1437 = vmatpush1.msra.mxu0 0.0
    %1438 = vmatprep.subr.mxu0 0.0
    %1439 = vmatpush1.msra.mxu0 0.0
    %1440 = vmatprep.subr.mxu0 0.0
    %1441 = vmatpush1.msra.mxu0 0.0
    %1442 = vmatprep.subr.mxu0 0.0
    %1443 = vmatpush1.msra.mxu0 0.0
    %1444 = vmatprep.subr.mxu0 0.0
    %1445 = vmatpush1.msra.mxu0 0.0
    %1446 = vmatprep.subr.mxu0 0.0
    %1447 = vmatpush1.msra.mxu0 0.0
    %1448 = vmatprep.mubr.f32.mxu0 0.0
    %1449 = vmatmul.mubr.f32.gmra.mrb[0].mxu0 %v1382
    %v1450 = vpop.f32.mrb[0].mxu0
    %v1451 = vadd.f32 0.0, %v1450
    %v1452 = vpop.f32.mrb[0].mxu0
    %1453 = vdwg.mxu0
    %1454 = vrot.lane.b32.xlu0 %v249, 56
    %v1455 = vpop.permute.xlu0 %1454
    %v1458 = vsel %vm260, %v1300, 0
    %1460 = vmatprep.subr.mxu0 0.0
    %1461 = vmatpush1.msra.mxu0 %v1455
    %1462 = vmatprep.subr.mxu0 0.0
    %1463 = vmatpush1.msra.mxu0 0.0
    %1464 = vmatprep.subr.mxu0 0.0
    %1465 = vmatpush1.msra.mxu0 0.0
    %1466 = vmatprep.subr.mxu0 0.0
    %1467 = vmatpush1.msra.mxu0 0.0
    %1468 = vmatprep.subr.mxu0 0.0
    %1469 = vmatpush1.msra.mxu0 0.0
    %1470 = vmatprep.subr.mxu0 0.0
    %1471 = vmatpush1.msra.mxu0 0.0
    %1472 = vmatprep.subr.mxu0 0.0
    %1473 = vmatpush1.msra.mxu0 0.0
    %1474 = vmatprep.subr.mxu0 0.0
    %1475 = vmatpush1.msra.mxu0 0.0
    %1476 = vmatprep.subr.mxu0 0.0
    %1477 = vmatpush1.msra.mxu0 0.0
    %1478 = vmatprep.subr.mxu0 0.0
    %1479 = vmatpush1.msra.mxu0 0.0
    %1480 = vmatprep.subr.mxu0 0.0
    %1481 = vmatpush1.msra.mxu0 0.0
    %1482 = vmatprep.subr.mxu0 0.0
    %1483 = vmatpush1.msra.mxu0 0.0
    %1484 = vmatprep.subr.mxu0 0.0
    %1485 = vmatpush1.msra.mxu0 0.0
    %1486 = vmatprep.subr.mxu0 0.0
    %1487 = vmatpush1.msra.mxu0 0.0
    %1488 = vmatprep.subr.mxu0 0.0
    %1489 = vmatpush1.msra.mxu0 0.0
    %1490 = vmatprep.subr.mxu0 0.0
    %1491 = vmatpush1.msra.mxu0 0.0
    %1492 = vmatprep.subr.mxu0 0.0
    %1493 = vmatpush1.msra.mxu0 0.0
    %1494 = vmatprep.subr.mxu0 0.0
    %1495 = vmatpush1.msra.mxu0 0.0
    %1496 = vmatprep.subr.mxu0 0.0
    %1497 = vmatpush1.msra.mxu0 0.0
    %1498 = vmatprep.subr.mxu0 0.0
    %1499 = vmatpush1.msra.mxu0 0.0
    %1500 = vmatprep.subr.mxu0 0.0
    %1501 = vmatpush1.msra.mxu0 0.0
    %1502 = vmatprep.subr.mxu0 0.0
    %1503 = vmatpush1.msra.mxu0 0.0
    %1504 = vmatprep.subr.mxu0 0.0
    %1505 = vmatpush1.msra.mxu0 0.0
    %1506 = vmatprep.subr.mxu0 0.0
    %1507 = vmatpush1.msra.mxu0 0.0
    %1508 = vmatprep.subr.mxu0 0.0
    %1509 = vmatpush1.msra.mxu0 0.0
    %1510 = vmatprep.subr.mxu0 0.0
    %1511 = vmatpush1.msra.mxu0 0.0
    %1512 = vmatprep.subr.mxu0 0.0
    %1513 = vmatpush1.msra.mxu0 0.0
    %1514 = vmatprep.subr.mxu0 0.0
    %1515 = vmatpush1.msra.mxu0 0.0
    %1516 = vmatprep.subr.mxu0 0.0
    %1517 = vmatpush1.msra.mxu0 0.0
    %1518 = vmatprep.subr.mxu0 0.0
    %1519 = vmatpush1.msra.mxu0 0.0
    %1520 = vmatprep.subr.mxu0 0.0
    %1521 = vmatpush1.msra.mxu0 0.0
    %1522 = vmatprep.subr.mxu0 0.0
    %1523 = vmatpush1.msra.mxu0 0.0
    %1524 = vmatprep.mubr.f32.mxu0 0.0
    %1525 = vmatmul.mubr.f32.gmra.mrb[0].mxu0 %v1458
    %v1526 = vpop.f32.mrb[0].mxu0
    %v1527 = vadd.f32 0.0, %v1526
    %v1528 = vpop.f32.mrb[0].mxu0
    %1529 = vdwg.mxu0
    %1530 = vrot.lane.b32.xlu0 %v254, 56
    %v1531 = vpop.permute.xlu0 %1530
    %v1534 = vsel %vm260, %v1301, 0
    %1536 = vmatprep.subr.mxu0 0.0
    %1537 = vmatpush1.msra.mxu0 %v1531
    %1538 = vmatprep.subr.mxu0 0.0
    %1539 = vmatpush1.msra.mxu0 0.0
    %1540 = vmatprep.subr.mxu0 0.0
    %1541 = vmatpush1.msra.mxu0 0.0
    %1542 = vmatprep.subr.mxu0 0.0
    %1543 = vmatpush1.msra.mxu0 0.0
    %1544 = vmatprep.subr.mxu0 0.0
    %1545 = vmatpush1.msra.mxu0 0.0
    %1546 = vmatprep.subr.mxu0 0.0
    %1547 = vmatpush1.msra.mxu0 0.0
    %1548 = vmatprep.subr.mxu0 0.0
    %1549 = vmatpush1.msra.mxu0 0.0
    %1550 = vmatprep.subr.mxu0 0.0
    %1551 = vmatpush1.msra.mxu0 0.0
    %1552 = vmatprep.subr.mxu0 0.0
    %1553 = vmatpush1.msra.mxu0 0.0
    %1554 = vmatprep.subr.mxu0 0.0
    %1555 = vmatpush1.msra.mxu0 0.0
    %1556 = vmatprep.subr.mxu0 0.0
    %1557 = vmatpush1.msra.mxu0 0.0
    %1558 = vmatprep.subr.mxu0 0.0
    %1559 = vmatpush1.msra.mxu0 0.0
    %1560 = vmatprep.subr.mxu0 0.0
    %1561 = vmatpush1.msra.mxu0 0.0
    %1562 = vmatprep.subr.mxu0 0.0
    %1563 = vmatpush1.msra.mxu0 0.0
    %1564 = vmatprep.subr.mxu0 0.0
    %1565 = vmatpush1.msra.mxu0 0.0
    %1566 = vmatprep.subr.mxu0 0.0
    %1567 = vmatpush1.msra.mxu0 0.0
    %1568 = vmatprep.subr.mxu0 0.0
    %1569 = vmatpush1.msra.mxu0 0.0
    %1570 = vmatprep.subr.mxu0 0.0
    %1571 = vmatpush1.msra.mxu0 0.0
    %1572 = vmatprep.subr.mxu0 0.0
    %1573 = vmatpush1.msra.mxu0 0.0
    %1574 = vmatprep.subr.mxu0 0.0
    %1575 = vmatpush1.msra.mxu0 0.0
    %1576 = vmatprep.subr.mxu0 0.0
    %1577 = vmatpush1.msra.mxu0 0.0
    %1578 = vmatprep.subr.mxu0 0.0
    %1579 = vmatpush1.msra.mxu0 0.0
    %1580 = vmatprep.subr.mxu0 0.0
    %1581 = vmatpush1.msra.mxu0 0.0
    %1582 = vmatprep.subr.mxu0 0.0
    %1583 = vmatpush1.msra.mxu0 0.0
    %1584 = vmatprep.subr.mxu0 0.0
    %1585 = vmatpush1.msra.mxu0 0.0
    %1586 = vmatprep.subr.mxu0 0.0
    %1587 = vmatpush1.msra.mxu0 0.0
    %1588 = vmatprep.subr.mxu0 0.0
    %1589 = vmatpush1.msra.mxu0 0.0
    %1590 = vmatprep.subr.mxu0 0.0
    %1591 = vmatpush1.msra.mxu0 0.0
    %1592 = vmatprep.subr.mxu0 0.0
    %1593 = vmatpush1.msra.mxu0 0.0
    %1594 = vmatprep.subr.mxu0 0.0
    %1595 = vmatpush1.msra.mxu0 0.0
    %1596 = vmatprep.subr.mxu0 0.0
    %1597 = vmatpush1.msra.mxu0 0.0
    %1598 = vmatprep.subr.mxu0 0.0
    %1599 = vmatpush1.msra.mxu0 0.0
    %1600 = vmatprep.mubr.f32.mxu0 0.0
    %1601 = vmatmul.mubr.f32.gmra.mrb[0].mxu0 %v1534
    %v1602 = vpop.f32.mrb[0].mxu0
    %v1603 = vadd.f32 0.0, %v1602
    %v1604 = vpop.f32.mrb[0].mxu0
    %1605 = vdwg.mxu0
    %1606 = vrot.lane.b32.xlu0 %v239, 112
    %v1607 = vpop.permute.xlu0 %1606
    %1608 = vrot.lane.b32.xlu0 %v239, 80
    %v1609 = vpop.permute.xlu0 %1608
    %v1610 = vsel %vm260, %v1607, 0
    %v1612 = vsel %vm260, %v1609, 0
    %1614 = vmatprep.subr.mxu0 0.0
    %1615 = vmatpush1.xpose.msra.mxu0 %v1612
    %1616 = vmatprep.subr.mxu0 0.0
    %1617 = vmatpush1.xpose.msra.mxu0 0.0
    %1618 = vmatprep.subr.mxu0 0.0
    %1619 = vmatpush1.xpose.msra.mxu0 0.0
    %1620 = vmatprep.subr.mxu0 0.0
    %1621 = vmatpush1.xpose.msra.mxu0 0.0
    %1622 = vmatprep.subr.mxu0 0.0
    %1623 = vmatpush1.xpose.msra.mxu0 0.0
    %1624 = vmatprep.subr.mxu0 0.0
    %1625 = vmatpush1.xpose.msra.mxu0 0.0
    %1626 = vmatprep.subr.mxu0 0.0
    %1627 = vmatpush1.xpose.msra.mxu0 0.0
    %1628 = vmatprep.subr.mxu0 0.0
    %1629 = vmatpush1.xpose.msra.mxu0 0.0
    %1630 = vmatprep.subr.mxu0 0.0
    %1631 = vmatpush1.xpose.msra.mxu0 0.0
    %1632 = vmatprep.subr.mxu0 0.0
    %1633 = vmatpush1.xpose.msra.mxu0 0.0
    %1634 = vmatprep.subr.mxu0 0.0
    %1635 = vmatpush1.xpose.msra.mxu0 0.0
    %1636 = vmatprep.subr.mxu0 0.0
    %1637 = vmatpush1.xpose.msra.mxu0 0.0
    %1638 = vmatprep.subr.mxu0 0.0
    %1639 = vmatpush1.xpose.msra.mxu0 0.0
    %1640 = vmatprep.subr.mxu0 0.0
    %1641 = vmatpush1.xpose.msra.mxu0 0.0
    %1642 = vmatprep.subr.mxu0 0.0
    %1643 = vmatpush1.xpose.msra.mxu0 0.0
    %1644 = vmatprep.subr.mxu0 0.0
    %1645 = vmatpush1.xpose.msra.mxu0 0.0
    %1646 = vmatprep.subr.mxu0 0.0
    %1647 = vmatpush1.xpose.msra.mxu0 0.0
    %1648 = vmatprep.subr.mxu0 0.0
    %1649 = vmatpush1.xpose.msra.mxu0 0.0
    %1650 = vmatprep.subr.mxu0 0.0
    %1651 = vmatpush1.xpose.msra.mxu0 0.0
    %1652 = vmatprep.subr.mxu0 0.0
    %1653 = vmatpush1.xpose.msra.mxu0 0.0
    %1654 = vmatprep.subr.mxu0 0.0
    %1655 = vmatpush1.xpose.msra.mxu0 0.0
    %1656 = vmatprep.subr.mxu0 0.0
    %1657 = vmatpush1.xpose.msra.mxu0 0.0
    %1658 = vmatprep.subr.mxu0 0.0
    %1659 = vmatpush1.xpose.msra.mxu0 0.0
    %1660 = vmatprep.subr.mxu0 0.0
    %1661 = vmatpush1.xpose.msra.mxu0 0.0
    %1662 = vmatprep.subr.mxu0 0.0
    %1663 = vmatpush1.xpose.msra.mxu0 0.0
    %1664 = vmatprep.subr.mxu0 0.0
    %1665 = vmatpush1.xpose.msra.mxu0 0.0
    %1666 = vmatprep.subr.mxu0 0.0
    %1667 = vmatpush1.xpose.msra.mxu0 0.0
    %1668 = vmatprep.subr.mxu0 0.0
    %1669 = vmatpush1.xpose.msra.mxu0 0.0
    %1670 = vmatprep.subr.mxu0 0.0
    %1671 = vmatpush1.xpose.msra.mxu0 0.0
    %1672 = vmatprep.subr.mxu0 0.0
    %1673 = vmatpush1.xpose.msra.mxu0 0.0
    %1674 = vmatprep.subr.mxu0 0.0
    %1675 = vmatpush1.xpose.msra.mxu0 0.0
    %1676 = vmatprep.subr.mxu0 0.0
    %1677 = vmatpush1.xpose.msra.mxu0 0.0
    %1678 = vmatprep.mubr.f32.mxu0 0.0
    %1679 = vmatmul.mubr.f32.gmra.mrb[0].mxu0 %v1610
    %v1680 = vpop.f32.mrb[0].mxu0
    %v1681 = vadd.f32 0.0, %v1680
    %v1682 = vpop.f32.mrb[0].mxu0
    %1683 = vdwg.mxu0
    %1684 = vrot.lane.b32.xlu0 %v244, 112
    %v1685 = vpop.permute.xlu0 %1684
    %1686 = vrot.lane.b32.xlu0 %v244, 80
    %v1687 = vpop.permute.xlu0 %1686
    %v1688 = vsel %vm260, %v1685, 0
    %v1690 = vsel %vm260, %v1687, 0
    %1692 = vmatprep.subr.mxu0 0.0
    %1693 = vmatpush1.xpose.msra.mxu0 %v1690
    %1694 = vmatprep.subr.mxu0 0.0
    %1695 = vmatpush1.xpose.msra.mxu0 0.0
    %1696 = vmatprep.subr.mxu0 0.0
    %1697 = vmatpush1.xpose.msra.mxu0 0.0
    %1698 = vmatprep.subr.mxu0 0.0
    %1699 = vmatpush1.xpose.msra.mxu0 0.0
    %1700 = vmatprep.subr.mxu0 0.0
    %1701 = vmatpush1.xpose.msra.mxu0 0.0
    %1702 = vmatprep.subr.mxu0 0.0
    %1703 = vmatpush1.xpose.msra.mxu0 0.0
    %1704 = vmatprep.subr.mxu0 0.0
    %1705 = vmatpush1.xpose.msra.mxu0 0.0
    %1706 = vmatprep.subr.mxu0 0.0
    %1707 = vmatpush1.xpose.msra.mxu0 0.0
    %1708 = vmatprep.subr.mxu0 0.0
    %1709 = vmatpush1.xpose.msra.mxu0 0.0
    %1710 = vmatprep.subr.mxu0 0.0
    %1711 = vmatpush1.xpose.msra.mxu0 0.0
    %1712 = vmatprep.subr.mxu0 0.0
    %1713 = vmatpush1.xpose.msra.mxu0 0.0
    %1714 = vmatprep.subr.mxu0 0.0
    %1715 = vmatpush1.xpose.msra.mxu0 0.0
    %1716 = vmatprep.subr.mxu0 0.0
    %1717 = vmatpush1.xpose.msra.mxu0 0.0
    %1718 = vmatprep.subr.mxu0 0.0
    %1719 = vmatpush1.xpose.msra.mxu0 0.0
    %1720 = vmatprep.subr.mxu0 0.0
    %1721 = vmatpush1.xpose.msra.mxu0 0.0
    %1722 = vmatprep.subr.mxu0 0.0
    %1723 = vmatpush1.xpose.msra.mxu0 0.0
    %1724 = vmatprep.subr.mxu0 0.0
    %1725 = vmatpush1.xpose.msra.mxu0 0.0
    %1726 = vmatprep.subr.mxu0 0.0
    %1727 = vmatpush1.xpose.msra.mxu0 0.0
    %1728 = vmatprep.subr.mxu0 0.0
    %1729 = vmatpush1.xpose.msra.mxu0 0.0
    %1730 = vmatprep.subr.mxu0 0.0
    %1731 = vmatpush1.xpose.msra.mxu0 0.0
    %1732 = vmatprep.subr.mxu0 0.0
    %1733 = vmatpush1.xpose.msra.mxu0 0.0
    %1734 = vmatprep.subr.mxu0 0.0
    %1735 = vmatpush1.xpose.msra.mxu0 0.0
    %1736 = vmatprep.subr.mxu0 0.0
    %1737 = vmatpush1.xpose.msra.mxu0 0.0
    %1738 = vmatprep.subr.mxu0 0.0
    %1739 = vmatpush1.xpose.msra.mxu0 0.0
    %1740 = vmatprep.subr.mxu0 0.0
    %1741 = vmatpush1.xpose.msra.mxu0 0.0
    %1742 = vmatprep.subr.mxu0 0.0
    %1743 = vmatpush1.xpose.msra.mxu0 0.0
    %1744 = vmatprep.subr.mxu0 0.0
    %1745 = vmatpush1.xpose.msra.mxu0 0.0
    %1746 = vmatprep.subr.mxu0 0.0
    %1747 = vmatpush1.xpose.msra.mxu0 0.0
    %1748 = vmatprep.subr.mxu0 0.0
    %1749 = vmatpush1.xpose.msra.mxu0 0.0
    %1750 = vmatprep.subr.mxu0 0.0
    %1751 = vmatpush1.xpose.msra.mxu0 0.0
    %1752 = vmatprep.subr.mxu0 0.0
    %1753 = vmatpush1.xpose.msra.mxu0 0.0
    %1754 = vmatprep.subr.mxu0 0.0
    %1755 = vmatpush1.xpose.msra.mxu0 0.0
    %1756 = vmatprep.mubr.f32.mxu0 0.0
    %1757 = vmatmul.mubr.f32.gmra.mrb[0].mxu0 %v1688
    %v1758 = vpop.f32.mrb[0].mxu0
    %v1759 = vadd.f32 0.0, %v1758
    %v1760 = vpop.f32.mrb[0].mxu0
    %1761 = vdwg.mxu0
    %1762 = vrot.lane.b32.xlu0 %v249, 112
    %v1763 = vpop.permute.xlu0 %1762
    %1764 = vrot.lane.b32.xlu0 %v249, 80
    %v1765 = vpop.permute.xlu0 %1764
    %v1766 = vsel %vm260, %v1763, 0
    %v1768 = vsel %vm260, %v1765, 0
    %1770 = vmatprep.subr.mxu0 0.0
    %1771 = vmatpush1.xpose.msra.mxu0 %v1768
    %1772 = vmatprep.subr.mxu0 0.0
    %1773 = vmatpush1.xpose.msra.mxu0 0.0
    %1774 = vmatprep.subr.mxu0 0.0
    %1775 = vmatpush1.xpose.msra.mxu0 0.0
    %1776 = vmatprep.subr.mxu0 0.0
    %1777 = vmatpush1.xpose.msra.mxu0 0.0
    %1778 = vmatprep.subr.mxu0 0.0
    %1779 = vmatpush1.xpose.msra.mxu0 0.0
    %1780 = vmatprep.subr.mxu0 0.0
    %1781 = vmatpush1.xpose.msra.mxu0 0.0
    %1782 = vmatprep.subr.mxu0 0.0
    %1783 = vmatpush1.xpose.msra.mxu0 0.0
    %1784 = vmatprep.subr.mxu0 0.0
    %1785 = vmatpush1.xpose.msra.mxu0 0.0
    %1786 = vmatprep.subr.mxu0 0.0
    %1787 = vmatpush1.xpose.msra.mxu0 0.0
    %1788 = vmatprep.subr.mxu0 0.0
    %1789 = vmatpush1.xpose.msra.mxu0 0.0
    %1790 = vmatprep.subr.mxu0 0.0
    %1791 = vmatpush1.xpose.msra.mxu0 0.0
    %1792 = vmatprep.subr.mxu0 0.0
    %1793 = vmatpush1.xpose.msra.mxu0 0.0
    %1794 = vmatprep.subr.mxu0 0.0
    %1795 = vmatpush1.xpose.msra.mxu0 0.0
    %1796 = vmatprep.subr.mxu0 0.0
    %1797 = vmatpush1.xpose.msra.mxu0 0.0
    %1798 = vmatprep.subr.mxu0 0.0
    %1799 = vmatpush1.xpose.msra.mxu0 0.0
    %1800 = vmatprep.subr.mxu0 0.0
    %1801 = vmatpush1.xpose.msra.mxu0 0.0
    %1802 = vmatprep.subr.mxu0 0.0
    %1803 = vmatpush1.xpose.msra.mxu0 0.0
    %1804 = vmatprep.subr.mxu0 0.0
    %1805 = vmatpush1.xpose.msra.mxu0 0.0
    %1806 = vmatprep.subr.mxu0 0.0
    %1807 = vmatpush1.xpose.msra.mxu0 0.0
    %1808 = vmatprep.subr.mxu0 0.0
    %1809 = vmatpush1.xpose.msra.mxu0 0.0
    %1810 = vmatprep.subr.mxu0 0.0
    %1811 = vmatpush1.xpose.msra.mxu0 0.0
    %1812 = vmatprep.subr.mxu0 0.0
    %1813 = vmatpush1.xpose.msra.mxu0 0.0
    %1814 = vmatprep.subr.mxu0 0.0
    %1815 = vmatpush1.xpose.msra.mxu0 0.0
    %1816 = vmatprep.subr.mxu0 0.0
    %1817 = vmatpush1.xpose.msra.mxu0 0.0
    %1818 = vmatprep.subr.mxu0 0.0
    %1819 = vmatpush1.xpose.msra.mxu0 0.0
    %1820 = vmatprep.subr.mxu0 0.0
    %1821 = vmatpush1.xpose.msra.mxu0 0.0
    %1822 = vmatprep.subr.mxu0 0.0
    %1823 = vmatpush1.xpose.msra.mxu0 0.0
    %1824 = vmatprep.subr.mxu0 0.0
    %1825 = vmatpush1.xpose.msra.mxu0 0.0
    %1826 = vmatprep.subr.mxu0 0.0
    %1827 = vmatpush1.xpose.msra.mxu0 0.0
    %1828 = vmatprep.subr.mxu0 0.0
    %1829 = vmatpush1.xpose.msra.mxu0 0.0
    %1830 = vmatprep.subr.mxu0 0.0
    %1831 = vmatpush1.xpose.msra.mxu0 0.0
    %1832 = vmatprep.subr.mxu0 0.0
    %1833 = vmatpush1.xpose.msra.mxu0 0.0
    %1834 = vmatprep.mubr.f32.mxu0 0.0
    %1835 = vmatmul.mubr.f32.gmra.mrb[0].mxu0 %v1766
    %v1836 = vpop.f32.mrb[0].mxu0
    %v1837 = vadd.f32 0.0, %v1836
    %v1838 = vpop.f32.mrb[0].mxu0
    %1839 = vdwg.mxu0
    %1840 = vrot.lane.b32.xlu0 %v254, 112
    %v1841 = vpop.permute.xlu0 %1840
    %1842 = vrot.lane.b32.xlu0 %v254, 80
    %v1843 = vpop.permute.xlu0 %1842
    %v1844 = vsel %vm260, %v1841, 0
    %v1846 = vsel %vm260, %v1843, 0
    %1848 = vmatprep.subr.mxu0 0.0
    %1849 = vmatpush1.xpose.msra.mxu0 %v1846
    %1850 = vmatprep.subr.mxu0 0.0
    %1851 = vmatpush1.xpose.msra.mxu0 0.0
    %1852 = vmatprep.subr.mxu0 0.0
    %1853 = vmatpush1.xpose.msra.mxu0 0.0
    %1854 = vmatprep.subr.mxu0 0.0
    %1855 = vmatpush1.xpose.msra.mxu0 0.0
    %1856 = vmatprep.subr.mxu0 0.0
    %1857 = vmatpush1.xpose.msra.mxu0 0.0
    %1858 = vmatprep.subr.mxu0 0.0
    %1859 = vmatpush1.xpose.msra.mxu0 0.0
    %1860 = vmatprep.subr.mxu0 0.0
    %1861 = vmatpush1.xpose.msra.mxu0 0.0
    %1862 = vmatprep.subr.mxu0 0.0
    %1863 = vmatpush1.xpose.msra.mxu0 0.0
    %1864 = vmatprep.subr.mxu0 0.0
    %1865 = vmatpush1.xpose.msra.mxu0 0.0
    %1866 = vmatprep.subr.mxu0 0.0
    %1867 = vmatpush1.xpose.msra.mxu0 0.0
    %1868 = vmatprep.subr.mxu0 0.0
    %1869 = vmatpush1.xpose.msra.mxu0 0.0
    %1870 = vmatprep.subr.mxu0 0.0
    %1871 = vmatpush1.xpose.msra.mxu0 0.0
    %1872 = vmatprep.subr.mxu0 0.0
    %1873 = vmatpush1.xpose.msra.mxu0 0.0
    %1874 = vmatprep.subr.mxu0 0.0
    %1875 = vmatpush1.xpose.msra.mxu0 0.0
    %1876 = vmatprep.subr.mxu0 0.0
    %1877 = vmatpush1.xpose.msra.mxu0 0.0
    %1878 = vmatprep.subr.mxu0 0.0
    %1879 = vmatpush1.xpose.msra.mxu0 0.0
    %1880 = vmatprep.subr.mxu0 0.0
    %1881 = vmatpush1.xpose.msra.mxu0 0.0
    %1882 = vmatprep.subr.mxu0 0.0
    %1883 = vmatpush1.xpose.msra.mxu0 0.0
    %1884 = vmatprep.subr.mxu0 0.0
    %1885 = vmatpush1.xpose.msra.mxu0 0.0
    %1886 = vmatprep.subr.mxu0 0.0
    %1887 = vmatpush1.xpose.msra.mxu0 0.0
    %1888 = vmatprep.subr.mxu0 0.0
    %1889 = vmatpush1.xpose.msra.mxu0 0.0
    %1890 = vmatprep.subr.mxu0 0.0
    %1891 = vmatpush1.xpose.msra.mxu0 0.0
    %1892 = vmatprep.subr.mxu0 0.0
    %1893 = vmatpush1.xpose.msra.mxu0 0.0
    %1894 = vmatprep.subr.mxu0 0.0
    %1895 = vmatpush1.xpose.msra.mxu0 0.0
    %1896 = vmatprep.subr.mxu0 0.0
    %1897 = vmatpush1.xpose.msra.mxu0 0.0
    %1898 = vmatprep.subr.mxu0 0.0
    %1899 = vmatpush1.xpose.msra.mxu0 0.0
    %1900 = vmatprep.subr.mxu0 0.0
    %1901 = vmatpush1.xpose.msra.mxu0 0.0
    %1902 = vmatprep.subr.mxu0 0.0
    %1903 = vmatpush1.xpose.msra.mxu0 0.0
    %1904 = vmatprep.subr.mxu0 0.0
    %1905 = vmatpush1.xpose.msra.mxu0 0.0
    %1906 = vmatprep.subr.mxu0 0.0
    %1907 = vmatpush1.xpose.msra.mxu0 0.0
    %1908 = vmatprep.subr.mxu0 0.0
    %1909 = vmatpush1.xpose.msra.mxu0 0.0
    %1910 = vmatprep.subr.mxu0 0.0
    %1911 = vmatpush1.xpose.msra.mxu0 0.0
    %1912 = vmatprep.mubr.f32.mxu0 0.0
    %1913 = vmatmul.mubr.f32.gmra.mrb[0].mxu0 %v1844
    %v1914 = vpop.f32.mrb[0].mxu0
    %v1915 = vadd.f32 0.0, %v1914
    %v1916 = vpop.f32.mrb[0].mxu0
    %1917 = vdwg.mxu0
    %v1918 = vmul.f32 %v1681, 0.35355338
    %v1919 = vmul.f32 %v1759, 0.35355338
    %v1920 = vmul.f32 %v1837, 0.35355338
    %v1921 = vmul.f32 %v1915, 0.35355338
    %v1922 = vsel %vm260, %v1918, -inf
    %1923 = vmax.xlane.f32.xlu0 %v1922
    %v1924 = vpop.xlane.xlu0 %1923
    %v1925 = vsel %vm260, %v1919, -inf
    %1926 = vmax.xlane.f32.xlu0 %v1925
    %v1927 = vpop.xlane.xlu0 %1926
    %v1928 = vsel %vm260, %v1920, -inf
    %1929 = vmax.xlane.f32.xlu0 %v1928
    %v1930 = vpop.xlane.xlu0 %1929
    %v1931 = vsel %vm260, %v1921, -inf
    %1932 = vmax.xlane.f32.xlu0 %v1931
    %v1933 = vpop.xlane.xlu0 %1932
    %v1934 = vsub.f32 %v1918, %v1924
    %v1935 = vsub.f32 %v1919, %v1927
    %v1936 = vsub.f32 %v1920, %v1930
    %v1937 = vsub.f32 %v1921, %v1933
    %v1938 = vmul.f32 %v1934, 1.442695
    %v1939 = vpow.pop %v1938
    %v1940 = vmul.f32 %v1935, 1.442695
    %v1941 = vpow.pop %v1940
    %v1942 = vmul.f32 %v1936, 1.442695
    %v1943 = vpow.pop %v1942
    %v1944 = vmul.f32 %v1937, 1.442695
    %v1945 = vpow.pop %v1944
    %v1946 = vsel %vm260, %v1939, 0.0
    %1947 = vadd.xlane.f32.xlu0 %v1946
    %v1948 = vpop.xlane.xlu0 %1947
    %v1949 = vsel %vm260, %v1941, 0.0
    %1950 = vadd.xlane.f32.xlu0 %v1949
    %v1951 = vpop.xlane.xlu0 %1950
    %v1952 = vsel %vm260, %v1943, 0.0
    %1953 = vadd.xlane.f32.xlu0 %v1952
    %v1954 = vpop.xlane.xlu0 %1953
    %v1955 = vsel %vm260, %v1945, 0.0
    %1956 = vadd.xlane.f32.xlu0 %v1955
    %v1957 = vpop.xlane.xlu0 %1956
    %v1958 = vrcp.pop %v1948
    %v1959 = vrcp.pop %v1951
    %v1960 = vrcp.pop %v1954
    %v1961 = vrcp.pop %v1957
    %v1962 = vmul.f32 %v1948, %v1958
    %v1963 = vmul.f32 %v1951, %v1959
    %v1964 = vmul.f32 %v1954, %v1960
    %v1965 = vmul.f32 %v1957, %v1961
    %v1966 = vsub.f32 2.0, %v1962
    %v1967 = vsub.f32 2.0, %v1963
    %v1968 = vsub.f32 2.0, %v1964
    %v1969 = vsub.f32 2.0, %v1965
    %v1970 = vmul.f32 %v1958, %v1966
    %v1971 = vmul.f32 %v1959, %v1967
    %v1972 = vmul.f32 %v1960, %v1968
    %v1973 = vmul.f32 %v1961, %v1969
    %v1974 = vmul.f32 %v1939, %v1970
    %v1975 = vmul.f32 %v1941, %v1971
    %v1976 = vmul.f32 %v1943, %v1972
    %v1977 = vmul.f32 %v1945, %v1973
    %1978 = vrot.lane.b32.xlu0 %v239, 48
    %v1979 = vpop.permute.xlu0 %1978
    %v1982 = vsel %vm260, %v1974, 0
    %1984 = vmatprep.subr.mxu0 0.0
    %1985 = vmatpush1.msra.mxu0 %v1979
    %1986 = vmatprep.subr.mxu0 0.0
    %1987 = vmatpush1.msra.mxu0 0.0
    %1988 = vmatprep.subr.mxu0 0.0
    %1989 = vmatpush1.msra.mxu0 0.0
    %1990 = vmatprep.subr.mxu0 0.0
    %1991 = vmatpush1.msra.mxu0 0.0
    %1992 = vmatprep.subr.mxu0 0.0
    %1993 = vmatpush1.msra.mxu0 0.0
    %1994 = vmatprep.subr.mxu0 0.0
    %1995 = vmatpush1.msra.mxu0 0.0
    %1996 = vmatprep.subr.mxu0 0.0
    %1997 = vmatpush1.msra.mxu0 0.0
    %1998 = vmatprep.subr.mxu0 0.0
    %1999 = vmatpush1.msra.mxu0 0.0
    %2000 = vmatprep.subr.mxu0 0.0
    %2001 = vmatpush1.msra.mxu0 0.0
    %2002 = vmatprep.subr.mxu0 0.0
    %2003 = vmatpush1.msra.mxu0 0.0
    %2004 = vmatprep.subr.mxu0 0.0
    %2005 = vmatpush1.msra.mxu0 0.0
    %2006 = vmatprep.subr.mxu0 0.0
    %2007 = vmatpush1.msra.mxu0 0.0
    %2008 = vmatprep.subr.mxu0 0.0
    %2009 = vmatpush1.msra.mxu0 0.0
    %2010 = vmatprep.subr.mxu0 0.0
    %2011 = vmatpush1.msra.mxu0 0.0
    %2012 = vmatprep.subr.mxu0 0.0
    %2013 = vmatpush1.msra.mxu0 0.0
    %2014 = vmatprep.subr.mxu0 0.0
    %2015 = vmatpush1.msra.mxu0 0.0
    %2016 = vmatprep.subr.mxu0 0.0
    %2017 = vmatpush1.msra.mxu0 0.0
    %2018 = vmatprep.subr.mxu0 0.0
    %2019 = vmatpush1.msra.mxu0 0.0
    %2020 = vmatprep.subr.mxu0 0.0
    %2021 = vmatpush1.msra.mxu0 0.0
    %2022 = vmatprep.subr.mxu0 0.0
    %2023 = vmatpush1.msra.mxu0 0.0
    %2024 = vmatprep.subr.mxu0 0.0
    %2025 = vmatpush1.msra.mxu0 0.0
    %2026 = vmatprep.subr.mxu0 0.0
    %2027 = vmatpush1.msra.mxu0 0.0
    %2028 = vmatprep.subr.mxu0 0.0
    %2029 = vmatpush1.msra.mxu0 0.0
    %2030 = vmatprep.subr.mxu0 0.0
    %2031 = vmatpush1.msra.mxu0 0.0
    %2032 = vmatprep.subr.mxu0 0.0
    %2033 = vmatpush1.msra.mxu0 0.0
    %2034 = vmatprep.subr.mxu0 0.0
    %2035 = vmatpush1.msra.mxu0 0.0
    %2036 = vmatprep.subr.mxu0 0.0
    %2037 = vmatpush1.msra.mxu0 0.0
    %2038 = vmatprep.subr.mxu0 0.0
    %2039 = vmatpush1.msra.mxu0 0.0
    %2040 = vmatprep.subr.mxu0 0.0
    %2041 = vmatpush1.msra.mxu0 0.0
    %2042 = vmatprep.subr.mxu0 0.0
    %2043 = vmatpush1.msra.mxu0 0.0
    %2044 = vmatprep.subr.mxu0 0.0
    %2045 = vmatpush1.msra.mxu0 0.0
    %2046 = vmatprep.subr.mxu0 0.0
    %2047 = vmatpush1.msra.mxu0 0.0
    %2048 = vmatprep.mubr.f32.mxu0 0.0
    %2049 = vmatmul.mubr.f32.gmra.mrb[0].mxu0 %v1982
    %v2050 = vpop.f32.mrb[0].mxu0
    %v2051 = vadd.f32 0.0, %v2050
    %v2052 = vpop.f32.mrb[0].mxu0
    %2053 = vdwg.mxu0
    %2054 = vrot.lane.b32.xlu0 %v244, 48
    %v2055 = vpop.permute.xlu0 %2054
    %v2058 = vsel %vm260, %v1975, 0
    %2060 = vmatprep.subr.mxu0 0.0
    %2061 = vmatpush1.msra.mxu0 %v2055
    %2062 = vmatprep.subr.mxu0 0.0
    %2063 = vmatpush1.msra.mxu0 0.0
    %2064 = vmatprep.subr.mxu0 0.0
    %2065 = vmatpush1.msra.mxu0 0.0
    %2066 = vmatprep.subr.mxu0 0.0
    %2067 = vmatpush1.msra.mxu0 0.0
    %2068 = vmatprep.subr.mxu0 0.0
    %2069 = vmatpush1.msra.mxu0 0.0
    %2070 = vmatprep.subr.mxu0 0.0
    %2071 = vmatpush1.msra.mxu0 0.0
    %2072 = vmatprep.subr.mxu0 0.0
    %2073 = vmatpush1.msra.mxu0 0.0
    %2074 = vmatprep.subr.mxu0 0.0
    %2075 = vmatpush1.msra.mxu0 0.0
    %2076 = vmatprep.subr.mxu0 0.0
    %2077 = vmatpush1.msra.mxu0 0.0
    %2078 = vmatprep.subr.mxu0 0.0
    %2079 = vmatpush1.msra.mxu0 0.0
    %2080 = vmatprep.subr.mxu0 0.0
    %2081 = vmatpush1.msra.mxu0 0.0
    %2082 = vmatprep.subr.mxu0 0.0
    %2083 = vmatpush1.msra.mxu0 0.0
    %2084 = vmatprep.subr.mxu0 0.0
    %2085 = vmatpush1.msra.mxu0 0.0
    %2086 = vmatprep.subr.mxu0 0.0
    %2087 = vmatpush1.msra.mxu0 0.0
    %2088 = vmatprep.subr.mxu0 0.0
    %2089 = vmatpush1.msra.mxu0 0.0
    %2090 = vmatprep.subr.mxu0 0.0
    %2091 = vmatpush1.msra.mxu0 0.0
    %2092 = vmatprep.subr.mxu0 0.0
    %2093 = vmatpush1.msra.mxu0 0.0
    %2094 = vmatprep.subr.mxu0 0.0
    %2095 = vmatpush1.msra.mxu0 0.0
    %2096 = vmatprep.subr.mxu0 0.0
    %2097 = vmatpush1.msra.mxu0 0.0
    %2098 = vmatprep.subr.mxu0 0.0
    %2099 = vmatpush1.msra.mxu0 0.0
    %2100 = vmatprep.subr.mxu0 0.0
    %2101 = vmatpush1.msra.mxu0 0.0
    %2102 = vmatprep.subr.mxu0 0.0
    %2103 = vmatpush1.msra.mxu0 0.0
    %2104 = vmatprep.subr.mxu0 0.0
    %2105 = vmatpush1.msra.mxu0 0.0
    %2106 = vmatprep.subr.mxu0 0.0
    %2107 = vmatpush1.msra.mxu0 0.0
    %2108 = vmatprep.subr.mxu0 0.0
    %2109 = vmatpush1.msra.mxu0 0.0
    %2110 = vmatprep.subr.mxu0 0.0
    %2111 = vmatpush1.msra.mxu0 0.0
    %2112 = vmatprep.subr.mxu0 0.0
    %2113 = vmatpush1.msra.mxu0 0.0
    %2114 = vmatprep.subr.mxu0 0.0
    %2115 = vmatpush1.msra.mxu0 0.0
    %2116 = vmatprep.subr.mxu0 0.0
    %2117 = vmatpush1.msra.mxu0 0.0
    %2118 = vmatprep.subr.mxu0 0.0
    %2119 = vmatpush1.msra.mxu0 0.0
    %2120 = vmatprep.subr.mxu0 0.0
    %2121 = vmatpush1.msra.mxu0 0.0
    %2122 = vmatprep.subr.mxu0 0.0
    %2123 = vmatpush1.msra.mxu0 0.0
    %2124 = vmatprep.mubr.f32.mxu0 0.0
    %2125 = vmatmul.mubr.f32.gmra.mrb[0].mxu0 %v2058
    %v2126 = vpop.f32.mrb[0].mxu0
    %v2127 = vadd.f32 0.0, %v2126
    %v2128 = vpop.f32.mrb[0].mxu0
    %2129 = vdwg.mxu0
    %2130 = vrot.lane.b32.xlu0 %v249, 48
    %v2131 = vpop.permute.xlu0 %2130
    %v2134 = vsel %vm260, %v1976, 0
    %2136 = vmatprep.subr.mxu0 0.0
    %2137 = vmatpush1.msra.mxu0 %v2131
    %2138 = vmatprep.subr.mxu0 0.0
    %2139 = vmatpush1.msra.mxu0 0.0
    %2140 = vmatprep.subr.mxu0 0.0
    %2141 = vmatpush1.msra.mxu0 0.0
    %2142 = vmatprep.subr.mxu0 0.0
    %2143 = vmatpush1.msra.mxu0 0.0
    %2144 = vmatprep.subr.mxu0 0.0
    %2145 = vmatpush1.msra.mxu0 0.0
    %2146 = vmatprep.subr.mxu0 0.0
    %2147 = vmatpush1.msra.mxu0 0.0
    %2148 = vmatprep.subr.mxu0 0.0
    %2149 = vmatpush1.msra.mxu0 0.0
    %2150 = vmatprep.subr.mxu0 0.0
    %2151 = vmatpush1.msra.mxu0 0.0
    %2152 = vmatprep.subr.mxu0 0.0
    %2153 = vmatpush1.msra.mxu0 0.0
    %2154 = vmatprep.subr.mxu0 0.0
    %2155 = vmatpush1.msra.mxu0 0.0
    %2156 = vmatprep.subr.mxu0 0.0
    %2157 = vmatpush1.msra.mxu0 0.0
    %2158 = vmatprep.subr.mxu0 0.0
    %2159 = vmatpush1.msra.mxu0 0.0
    %2160 = vmatprep.subr.mxu0 0.0
    %2161 = vmatpush1.msra.mxu0 0.0
    %2162 = vmatprep.subr.mxu0 0.0
    %2163 = vmatpush1.msra.mxu0 0.0
    %2164 = vmatprep.subr.mxu0 0.0
    %2165 = vmatpush1.msra.mxu0 0.0
    %2166 = vmatprep.subr.mxu0 0.0
    %2167 = vmatpush1.msra.mxu0 0.0
    %2168 = vmatprep.subr.mxu0 0.0
    %2169 = vmatpush1.msra.mxu0 0.0
    %2170 = vmatprep.subr.mxu0 0.0
    %2171 = vmatpush1.msra.mxu0 0.0
    %2172 = vmatprep.subr.mxu0 0.0
    %2173 = vmatpush1.msra.mxu0 0.0
    %2174 = vmatprep.subr.mxu0 0.0
    %2175 = vmatpush1.msra.mxu0 0.0
    %2176 = vmatprep.subr.mxu0 0.0
    %2177 = vmatpush1.msra.mxu0 0.0
    %2178 = vmatprep.subr.mxu0 0.0
    %2179 = vmatpush1.msra.mxu0 0.0
    %2180 = vmatprep.subr.mxu0 0.0
    %2181 = vmatpush1.msra.mxu0 0.0
    %2182 = vmatprep.subr.mxu0 0.0
    %2183 = vmatpush1.msra.mxu0 0.0
    %2184 = vmatprep.subr.mxu0 0.0
    %2185 = vmatpush1.msra.mxu0 0.0
    %2186 = vmatprep.subr.mxu0 0.0
    %2187 = vmatpush1.msra.mxu0 0.0
    %2188 = vmatprep.subr.mxu0 0.0
    %2189 = vmatpush1.msra.mxu0 0.0
    %2190 = vmatprep.subr.mxu0 0.0
    %2191 = vmatpush1.msra.mxu0 0.0
    %2192 = vmatprep.subr.mxu0 0.0
    %2193 = vmatpush1.msra.mxu0 0.0
    %2194 = vmatprep.subr.mxu0 0.0
    %2195 = vmatpush1.msra.mxu0 0.0
    %2196 = vmatprep.subr.mxu0 0.0
    %2197 = vmatpush1.msra.mxu0 0.0
    %2198 = vmatprep.subr.mxu0 0.0
    %2199 = vmatpush1.msra.mxu0 0.0
    %2200 = vmatprep.mubr.f32.mxu0 0.0
    %2201 = vmatmul.mubr.f32.gmra.mrb[0].mxu0 %v2134
    %v2202 = vpop.f32.mrb[0].mxu0
    %v2203 = vadd.f32 0.0, %v2202
    %v2204 = vpop.f32.mrb[0].mxu0
    %2205 = vdwg.mxu0
    %2206 = vrot.lane.b32.xlu0 %v254, 48
    %v2207 = vpop.permute.xlu0 %2206
    %v2210 = vsel %vm260, %v1977, 0
    %2212 = vmatprep.subr.mxu0 0.0
    %2213 = vmatpush1.msra.mxu0 %v2207
    %2214 = vmatprep.subr.mxu0 0.0
    %2215 = vmatpush1.msra.mxu0 0.0
    %2216 = vmatprep.subr.mxu0 0.0
    %2217 = vmatpush1.msra.mxu0 0.0
    %2218 = vmatprep.subr.mxu0 0.0
    %2219 = vmatpush1.msra.mxu0 0.0
    %2220 = vmatprep.subr.mxu0 0.0
    %2221 = vmatpush1.msra.mxu0 0.0
    %2222 = vmatprep.subr.mxu0 0.0
    %2223 = vmatpush1.msra.mxu0 0.0
    %2224 = vmatprep.subr.mxu0 0.0
    %2225 = vmatpush1.msra.mxu0 0.0
    %2226 = vmatprep.subr.mxu0 0.0
    %2227 = vmatpush1.msra.mxu0 0.0
    %2228 = vmatprep.subr.mxu0 0.0
    %2229 = vmatpush1.msra.mxu0 0.0
    %2230 = vmatprep.subr.mxu0 0.0
    %2231 = vmatpush1.msra.mxu0 0.0
    %2232 = vmatprep.subr.mxu0 0.0
    %2233 = vmatpush1.msra.mxu0 0.0
    %2234 = vmatprep.subr.mxu0 0.0
    %2235 = vmatpush1.msra.mxu0 0.0
    %2236 = vmatprep.subr.mxu0 0.0
    %2237 = vmatpush1.msra.mxu0 0.0
    %2238 = vmatprep.subr.mxu0 0.0
    %2239 = vmatpush1.msra.mxu0 0.0
    %2240 = vmatprep.subr.mxu0 0.0
    %2241 = vmatpush1.msra.mxu0 0.0
    %2242 = vmatprep.subr.mxu0 0.0
    %2243 = vmatpush1.msra.mxu0 0.0
    %2244 = vmatprep.subr.mxu0 0.0
    %2245 = vmatpush1.msra.mxu0 0.0
    %2246 = vmatprep.subr.mxu0 0.0
    %2247 = vmatpush1.msra.mxu0 0.0
    %2248 = vmatprep.subr.mxu0 0.0
    %2249 = vmatpush1.msra.mxu0 0.0
    %2250 = vmatprep.subr.mxu0 0.0
    %2251 = vmatpush1.msra.mxu0 0.0
    %2252 = vmatprep.subr.mxu0 0.0
    %2253 = vmatpush1.msra.mxu0 0.0
    %2254 = vmatprep.subr.mxu0 0.0
    %2255 = vmatpush1.msra.mxu0 0.0
    %2256 = vmatprep.subr.mxu0 0.0
    %2257 = vmatpush1.msra.mxu0 0.0
    %2258 = vmatprep.subr.mxu0 0.0
    %2259 = vmatpush1.msra.mxu0 0.0
    %2260 = vmatprep.subr.mxu0 0.0
    %2261 = vmatpush1.msra.mxu0 0.0
    %2262 = vmatprep.subr.mxu0 0.0
    %2263 = vmatpush1.msra.mxu0 0.0
    %2264 = vmatprep.subr.mxu0 0.0
    %2265 = vmatpush1.msra.mxu0 0.0
    %2266 = vmatprep.subr.mxu0 0.0
    %2267 = vmatpush1.msra.mxu0 0.0
    %2268 = vmatprep.subr.mxu0 0.0
    %2269 = vmatpush1.msra.mxu0 0.0
    %2270 = vmatprep.subr.mxu0 0.0
    %2271 = vmatpush1.msra.mxu0 0.0
    %2272 = vmatprep.subr.mxu0 0.0
    %2273 = vmatpush1.msra.mxu0 0.0
    %2274 = vmatprep.subr.mxu0 0.0
    %2275 = vmatpush1.msra.mxu0 0.0
    %2276 = vmatprep.mubr.f32.mxu0 0.0
    %2277 = vmatmul.mubr.f32.gmra.mrb[0].mxu0 %v2210
    %v2278 = vpop.f32.mrb[0].mxu0
    %v2279 = vadd.f32 0.0, %v2278
    %v2280 = vpop.f32.mrb[0].mxu0
    %2281 = vdwg.mxu0
    %2282 = vrot.lane.b32.xlu0 %v239, 104
    %v2283 = vpop.permute.xlu0 %2282
    %2284 = vrot.lane.b32.xlu0 %v239, 72
    %v2285 = vpop.permute.xlu0 %2284
    %v2286 = vsel %vm260, %v2283, 0
    %v2288 = vsel %vm260, %v2285, 0
    %2290 = vmatprep.subr.mxu0 0.0
    %2291 = vmatpush1.xpose.msra.mxu0 %v2288
    %2292 = vmatprep.subr.mxu0 0.0
    %2293 = vmatpush1.xpose.msra.mxu0 0.0
    %2294 = vmatprep.subr.mxu0 0.0
    %2295 = vmatpush1.xpose.msra.mxu0 0.0
    %2296 = vmatprep.subr.mxu0 0.0
    %2297 = vmatpush1.xpose.msra.mxu0 0.0
    %2298 = vmatprep.subr.mxu0 0.0
    %2299 = vmatpush1.xpose.msra.mxu0 0.0
    %2300 = vmatprep.subr.mxu0 0.0
    %2301 = vmatpush1.xpose.msra.mxu0 0.0
    %2302 = vmatprep.subr.mxu0 0.0
    %2303 = vmatpush1.xpose.msra.mxu0 0.0
    %2304 = vmatprep.subr.mxu0 0.0
    %2305 = vmatpush1.xpose.msra.mxu0 0.0
    %2306 = vmatprep.subr.mxu0 0.0
    %2307 = vmatpush1.xpose.msra.mxu0 0.0
    %2308 = vmatprep.subr.mxu0 0.0
    %2309 = vmatpush1.xpose.msra.mxu0 0.0
    %2310 = vmatprep.subr.mxu0 0.0
    %2311 = vmatpush1.xpose.msra.mxu0 0.0
    %2312 = vmatprep.subr.mxu0 0.0
    %2313 = vmatpush1.xpose.msra.mxu0 0.0
    %2314 = vmatprep.subr.mxu0 0.0
    %2315 = vmatpush1.xpose.msra.mxu0 0.0
    %2316 = vmatprep.subr.mxu0 0.0
    %2317 = vmatpush1.xpose.msra.mxu0 0.0
    %2318 = vmatprep.subr.mxu0 0.0
    %2319 = vmatpush1.xpose.msra.mxu0 0.0
    %2320 = vmatprep.subr.mxu0 0.0
    %2321 = vmatpush1.xpose.msra.mxu0 0.0
    %2322 = vmatprep.subr.mxu0 0.0
    %2323 = vmatpush1.xpose.msra.mxu0 0.0
    %2324 = vmatprep.subr.mxu0 0.0
    %2325 = vmatpush1.xpose.msra.mxu0 0.0
    %2326 = vmatprep.subr.mxu0 0.0
    %2327 = vmatpush1.xpose.msra.mxu0 0.0
    %2328 = vmatprep.subr.mxu0 0.0
    %2329 = vmatpush1.xpose.msra.mxu0 0.0
    %2330 = vmatprep.subr.mxu0 0.0
    %2331 = vmatpush1.xpose.msra.mxu0 0.0
    %2332 = vmatprep.subr.mxu0 0.0
    %2333 = vmatpush1.xpose.msra.mxu0 0.0
    %2334 = vmatprep.subr.mxu0 0.0
    %2335 = vmatpush1.xpose.msra.mxu0 0.0
    %2336 = vmatprep.subr.mxu0 0.0
    %2337 = vmatpush1.xpose.msra.mxu0 0.0
    %2338 = vmatprep.subr.mxu0 0.0
    %2339 = vmatpush1.xpose.msra.mxu0 0.0
    %2340 = vmatprep.subr.mxu0 0.0
    %2341 = vmatpush1.xpose.msra.mxu0 0.0
    %2342 = vmatprep.subr.mxu0 0.0
    %2343 = vmatpush1.xpose.msra.mxu0 0.0
    %2344 = vmatprep.subr.mxu0 0.0
    %2345 = vmatpush1.xpose.msra.mxu0 0.0
    %2346 = vmatprep.subr.mxu0 0.0
    %2347 = vmatpush1.xpose.msra.mxu0 0.0
    %2348 = vmatprep.subr.mxu0 0.0
    %2349 = vmatpush1.xpose.msra.mxu0 0.0
    %2350 = vmatprep.subr.mxu0 0.0
    %2351 = vmatpush1.xpose.msra.mxu0 0.0
    %2352 = vmatprep.subr.mxu0 0.0
    %2353 = vmatpush1.xpose.msra.mxu0 0.0
    %2354 = vmatprep.mubr.f32.mxu0 0.0
    %2355 = vmatmul.mubr.f32.gmra.mrb[0].mxu0 %v2286
    %v2356 = vpop.f32.mrb[0].mxu0
    %v2357 = vadd.f32 0.0, %v2356
    %v2358 = vpop.f32.mrb[0].mxu0
    %2359 = vdwg.mxu0
    %2360 = vrot.lane.b32.xlu0 %v244, 104
    %v2361 = vpop.permute.xlu0 %2360
    %2362 = vrot.lane.b32.xlu0 %v244, 72
    %v2363 = vpop.permute.xlu0 %2362
    %v2364 = vsel %vm260, %v2361, 0
    %v2366 = vsel %vm260, %v2363, 0
    %2368 = vmatprep.subr.mxu0 0.0
    %2369 = vmatpush1.xpose.msra.mxu0 %v2366
    %2370 = vmatprep.subr.mxu0 0.0
    %2371 = vmatpush1.xpose.msra.mxu0 0.0
    %2372 = vmatprep.subr.mxu0 0.0
    %2373 = vmatpush1.xpose.msra.mxu0 0.0
    %2374 = vmatprep.subr.mxu0 0.0
    %2375 = vmatpush1.xpose.msra.mxu0 0.0
    %2376 = vmatprep.subr.mxu0 0.0
    %2377 = vmatpush1.xpose.msra.mxu0 0.0
    %2378 = vmatprep.subr.mxu0 0.0
    %2379 = vmatpush1.xpose.msra.mxu0 0.0
    %2380 = vmatprep.subr.mxu0 0.0
    %2381 = vmatpush1.xpose.msra.mxu0 0.0
    %2382 = vmatprep.subr.mxu0 0.0
    %2383 = vmatpush1.xpose.msra.mxu0 0.0
    %2384 = vmatprep.subr.mxu0 0.0
    %2385 = vmatpush1.xpose.msra.mxu0 0.0
    %2386 = vmatprep.subr.mxu0 0.0
    %2387 = vmatpush1.xpose.msra.mxu0 0.0
    %2388 = vmatprep.subr.mxu0 0.0
    %2389 = vmatpush1.xpose.msra.mxu0 0.0
    %2390 = vmatprep.subr.mxu0 0.0
    %2391 = vmatpush1.xpose.msra.mxu0 0.0
    %2392 = vmatprep.subr.mxu0 0.0
    %2393 = vmatpush1.xpose.msra.mxu0 0.0
    %2394 = vmatprep.subr.mxu0 0.0
    %2395 = vmatpush1.xpose.msra.mxu0 0.0
    %2396 = vmatprep.subr.mxu0 0.0
    %2397 = vmatpush1.xpose.msra.mxu0 0.0
    %2398 = vmatprep.subr.mxu0 0.0
    %2399 = vmatpush1.xpose.msra.mxu0 0.0
    %2400 = vmatprep.subr.mxu0 0.0
    %2401 = vmatpush1.xpose.msra.mxu0 0.0
    %2402 = vmatprep.subr.mxu0 0.0
    %2403 = vmatpush1.xpose.msra.mxu0 0.0
    %2404 = vmatprep.subr.mxu0 0.0
    %2405 = vmatpush1.xpose.msra.mxu0 0.0
    %2406 = vmatprep.subr.mxu0 0.0
    %2407 = vmatpush1.xpose.msra.mxu0 0.0
    %2408 = vmatprep.subr.mxu0 0.0
    %2409 = vmatpush1.xpose.msra.mxu0 0.0
    %2410 = vmatprep.subr.mxu0 0.0
    %2411 = vmatpush1.xpose.msra.mxu0 0.0
    %2412 = vmatprep.subr.mxu0 0.0
    %2413 = vmatpush1.xpose.msra.mxu0 0.0
    %2414 = vmatprep.subr.mxu0 0.0
    %2415 = vmatpush1.xpose.msra.mxu0 0.0
    %2416 = vmatprep.subr.mxu0 0.0
    %2417 = vmatpush1.xpose.msra.mxu0 0.0
    %2418 = vmatprep.subr.mxu0 0.0
    %2419 = vmatpush1.xpose.msra.mxu0 0.0
    %2420 = vmatprep.subr.mxu0 0.0
    %2421 = vmatpush1.xpose.msra.mxu0 0.0
    %2422 = vmatprep.subr.mxu0 0.0
    %2423 = vmatpush1.xpose.msra.mxu0 0.0
    %2424 = vmatprep.subr.mxu0 0.0
    %2425 = vmatpush1.xpose.msra.mxu0 0.0
    %2426 = vmatprep.subr.mxu0 0.0
    %2427 = vmatpush1.xpose.msra.mxu0 0.0
    %2428 = vmatprep.subr.mxu0 0.0
    %2429 = vmatpush1.xpose.msra.mxu0 0.0
    %2430 = vmatprep.subr.mxu0 0.0
    %2431 = vmatpush1.xpose.msra.mxu0 0.0
    %2432 = vmatprep.mubr.f32.mxu0 0.0
    %2433 = vmatmul.mubr.f32.gmra.mrb[0].mxu0 %v2364
    %v2434 = vpop.f32.mrb[0].mxu0
    %v2435 = vadd.f32 0.0, %v2434
    %v2436 = vpop.f32.mrb[0].mxu0
    %2437 = vdwg.mxu0
    %2438 = vrot.lane.b32.xlu0 %v249, 104
    %v2439 = vpop.permute.xlu0 %2438
    %2440 = vrot.lane.b32.xlu0 %v249, 72
    %v2441 = vpop.permute.xlu0 %2440
    %v2442 = vsel %vm260, %v2439, 0
    %v2444 = vsel %vm260, %v2441, 0
    %2446 = vmatprep.subr.mxu0 0.0
    %2447 = vmatpush1.xpose.msra.mxu0 %v2444
    %2448 = vmatprep.subr.mxu0 0.0
    %2449 = vmatpush1.xpose.msra.mxu0 0.0
    %2450 = vmatprep.subr.mxu0 0.0
    %2451 = vmatpush1.xpose.msra.mxu0 0.0
    %2452 = vmatprep.subr.mxu0 0.0
    %2453 = vmatpush1.xpose.msra.mxu0 0.0
    %2454 = vmatprep.subr.mxu0 0.0
    %2455 = vmatpush1.xpose.msra.mxu0 0.0
    %2456 = vmatprep.subr.mxu0 0.0
    %2457 = vmatpush1.xpose.msra.mxu0 0.0
    %2458 = vmatprep.subr.mxu0 0.0
    %2459 = vmatpush1.xpose.msra.mxu0 0.0
    %2460 = vmatprep.subr.mxu0 0.0
    %2461 = vmatpush1.xpose.msra.mxu0 0.0
    %2462 = vmatprep.subr.mxu0 0.0
    %2463 = vmatpush1.xpose.msra.mxu0 0.0
    %2464 = vmatprep.subr.mxu0 0.0
    %2465 = vmatpush1.xpose.msra.mxu0 0.0
    %2466 = vmatprep.subr.mxu0 0.0
    %2467 = vmatpush1.xpose.msra.mxu0 0.0
    %2468 = vmatprep.subr.mxu0 0.0
    %2469 = vmatpush1.xpose.msra.mxu0 0.0
    %2470 = vmatprep.subr.mxu0 0.0
    %2471 = vmatpush1.xpose.msra.mxu0 0.0
    %2472 = vmatprep.subr.mxu0 0.0
    %2473 = vmatpush1.xpose.msra.mxu0 0.0
    %2474 = vmatprep.subr.mxu0 0.0
    %2475 = vmatpush1.xpose.msra.mxu0 0.0
    %2476 = vmatprep.subr.mxu0 0.0
    %2477 = vmatpush1.xpose.msra.mxu0 0.0
    %2478 = vmatprep.subr.mxu0 0.0
    %2479 = vmatpush1.xpose.msra.mxu0 0.0
    %2480 = vmatprep.subr.mxu0 0.0
    %2481 = vmatpush1.xpose.msra.mxu0 0.0
    %2482 = vmatprep.subr.mxu0 0.0
    %2483 = vmatpush1.xpose.msra.mxu0 0.0
    %2484 = vmatprep.subr.mxu0 0.0
    %2485 = vmatpush1.xpose.msra.mxu0 0.0
    %2486 = vmatprep.subr.mxu0 0.0
    %2487 = vmatpush1.xpose.msra.mxu0 0.0
    %2488 = vmatprep.subr.mxu0 0.0
    %2489 = vmatpush1.xpose.msra.mxu0 0.0
    %2490 = vmatprep.subr.mxu0 0.0
    %2491 = vmatpush1.xpose.msra.mxu0 0.0
    %2492 = vmatprep.subr.mxu0 0.0
    %2493 = vmatpush1.xpose.msra.mxu0 0.0
    %2494 = vmatprep.subr.mxu0 0.0
    %2495 = vmatpush1.xpose.msra.mxu0 0.0
    %2496 = vmatprep.subr.mxu0 0.0
    %2497 = vmatpush1.xpose.msra.mxu0 0.0
    %2498 = vmatprep.subr.mxu0 0.0
    %2499 = vmatpush1.xpose.msra.mxu0 0.0
    %2500 = vmatprep.subr.mxu0 0.0
    %2501 = vmatpush1.xpose.msra.mxu0 0.0
    %2502 = vmatprep.subr.mxu0 0.0
    %2503 = vmatpush1.xpose.msra.mxu0 0.0
    %2504 = vmatprep.subr.mxu0 0.0
    %2505 = vmatpush1.xpose.msra.mxu0 0.0
    %2506 = vmatprep.subr.mxu0 0.0
    %2507 = vmatpush1.xpose.msra.mxu0 0.0
    %2508 = vmatprep.subr.mxu0 0.0
    %2509 = vmatpush1.xpose.msra.mxu0 0.0
    %2510 = vmatprep.mubr.f32.mxu0 0.0
    %2511 = vmatmul.mubr.f32.gmra.mrb[0].mxu0 %v2442
    %v2512 = vpop.f32.mrb[0].mxu0
    %v2513 = vadd.f32 0.0, %v2512
    %v2514 = vpop.f32.mrb[0].mxu0
    %2515 = vdwg.mxu0
    %2516 = vrot.lane.b32.xlu0 %v254, 104
    %v2517 = vpop.permute.xlu0 %2516
    %2518 = vrot.lane.b32.xlu0 %v254, 72
    %v2519 = vpop.permute.xlu0 %2518
    %v2520 = vsel %vm260, %v2517, 0
    %v2522 = vsel %vm260, %v2519, 0
    %2524 = vmatprep.subr.mxu0 0.0
    %2525 = vmatpush1.xpose.msra.mxu0 %v2522
    %2526 = vmatprep.subr.mxu0 0.0
    %2527 = vmatpush1.xpose.msra.mxu0 0.0
    %2528 = vmatprep.subr.mxu0 0.0
    %2529 = vmatpush1.xpose.msra.mxu0 0.0
    %2530 = vmatprep.subr.mxu0 0.0
    %2531 = vmatpush1.xpose.msra.mxu0 0.0
    %2532 = vmatprep.subr.mxu0 0.0
    %2533 = vmatpush1.xpose.msra.mxu0 0.0
    %2534 = vmatprep.subr.mxu0 0.0
    %2535 = vmatpush1.xpose.msra.mxu0 0.0
    %2536 = vmatprep.subr.mxu0 0.0
    %2537 = vmatpush1.xpose.msra.mxu0 0.0
    %2538 = vmatprep.subr.mxu0 0.0
    %2539 = vmatpush1.xpose.msra.mxu0 0.0
    %2540 = vmatprep.subr.mxu0 0.0
    %2541 = vmatpush1.xpose.msra.mxu0 0.0
    %2542 = vmatprep.subr.mxu0 0.0
    %2543 = vmatpush1.xpose.msra.mxu0 0.0
    %2544 = vmatprep.subr.mxu0 0.0
    %2545 = vmatpush1.xpose.msra.mxu0 0.0
    %2546 = vmatprep.subr.mxu0 0.0
    %2547 = vmatpush1.xpose.msra.mxu0 0.0
    %2548 = vmatprep.subr.mxu0 0.0
    %2549 = vmatpush1.xpose.msra.mxu0 0.0
    %2550 = vmatprep.subr.mxu0 0.0
    %2551 = vmatpush1.xpose.msra.mxu0 0.0
    %2552 = vmatprep.subr.mxu0 0.0
    %2553 = vmatpush1.xpose.msra.mxu0 0.0
    %2554 = vmatprep.subr.mxu0 0.0
    %2555 = vmatpush1.xpose.msra.mxu0 0.0
    %2556 = vmatprep.subr.mxu0 0.0
    %2557 = vmatpush1.xpose.msra.mxu0 0.0
    %2558 = vmatprep.subr.mxu0 0.0
    %2559 = vmatpush1.xpose.msra.mxu0 0.0
    %2560 = vmatprep.subr.mxu0 0.0
    %2561 = vmatpush1.xpose.msra.mxu0 0.0
    %2562 = vmatprep.subr.mxu0 0.0
    %2563 = vmatpush1.xpose.msra.mxu0 0.0
    %2564 = vmatprep.subr.mxu0 0.0
    %2565 = vmatpush1.xpose.msra.mxu0 0.0
    %2566 = vmatprep.subr.mxu0 0.0
    %2567 = vmatpush1.xpose.msra.mxu0 0.0
    %2568 = vmatprep.subr.mxu0 0.0
    %2569 = vmatpush1.xpose.msra.mxu0 0.0
    %2570 = vmatprep.subr.mxu0 0.0
    %2571 = vmatpush1.xpose.msra.mxu0 0.0
    %2572 = vmatprep.subr.mxu0 0.0
    %2573 = vmatpush1.xpose.msra.mxu0 0.0
    %2574 = vmatprep.subr.mxu0 0.0
    %2575 = vmatpush1.xpose.msra.mxu0 0.0
    %2576 = vmatprep.subr.mxu0 0.0
    %2577 = vmatpush1.xpose.msra.mxu0 0.0
    %2578 = vmatprep.subr.mxu0 0.0
    %2579 = vmatpush1.xpose.msra.mxu0 0.0
    %2580 = vmatprep.subr.mxu0 0.0
    %2581 = vmatpush1.xpose.msra.mxu0 0.0
    %2582 = vmatprep.subr.mxu0 0.0
    %2583 = vmatpush1.xpose.msra.mxu0 0.0
    %2584 = vmatprep.subr.mxu0 0.0
    %2585 = vmatpush1.xpose.msra.mxu0 0.0
    %2586 = vmatprep.subr.mxu0 0.0
    %2587 = vmatpush1.xpose.msra.mxu0 0.0
    %2588 = vmatprep.mubr.f32.mxu0 0.0
    %2589 = vmatmul.mubr.f32.gmra.mrb[0].mxu0 %v2520
    %v2590 = vpop.f32.mrb[0].mxu0
    %v2591 = vadd.f32 0.0, %v2590
    %v2592 = vpop.f32.mrb[0].mxu0
    %2593 = vdwg.mxu0
    %v2594 = vmul.f32 %v2357, 0.35355338
    %v2595 = vmul.f32 %v2435, 0.35355338
    %v2596 = vmul.f32 %v2513, 0.35355338
    %v2597 = vmul.f32 %v2591, 0.35355338
    %v2598 = vsel %vm260, %v2594, -inf
    %2599 = vmax.xlane.f32.xlu0 %v2598
    %v2600 = vpop.xlane.xlu0 %2599
    %v2601 = vsel %vm260, %v2595, -inf
    %2602 = vmax.xlane.f32.xlu0 %v2601
    %v2603 = vpop.xlane.xlu0 %2602
    %v2604 = vsel %vm260, %v2596, -inf
    %2605 = vmax.xlane.f32.xlu0 %v2604
    %v2606 = vpop.xlane.xlu0 %2605
    %v2607 = vsel %vm260, %v2597, -inf
    %2608 = vmax.xlane.f32.xlu0 %v2607
    %v2609 = vpop.xlane.xlu0 %2608
    %v2610 = vsub.f32 %v2594, %v2600
    %v2611 = vsub.f32 %v2595, %v2603
    %v2612 = vsub.f32 %v2596, %v2606
    %v2613 = vsub.f32 %v2597, %v2609
    %v2614 = vmul.f32 %v2610, 1.442695
    %v2615 = vpow.pop %v2614
    %v2616 = vmul.f32 %v2611, 1.442695
    %v2617 = vpow.pop %v2616
    %v2618 = vmul.f32 %v2612, 1.442695
    %v2619 = vpow.pop %v2618
    %v2620 = vmul.f32 %v2613, 1.442695
    %v2621 = vpow.pop %v2620
    %v2622 = vsel %vm260, %v2615, 0.0
    %2623 = vadd.xlane.f32.xlu0 %v2622
    %v2624 = vpop.xlane.xlu0 %2623
    %v2625 = vsel %vm260, %v2617, 0.0
    %2626 = vadd.xlane.f32.xlu0 %v2625
    %v2627 = vpop.xlane.xlu0 %2626
    %v2628 = vsel %vm260, %v2619, 0.0
    %2629 = vadd.xlane.f32.xlu0 %v2628
    %v2630 = vpop.xlane.xlu0 %2629
    %v2631 = vsel %vm260, %v2621, 0.0
    %2632 = vadd.xlane.f32.xlu0 %v2631
    %v2633 = vpop.xlane.xlu0 %2632
    %v2634 = vrcp.pop %v2624
    %v2635 = vrcp.pop %v2627
    %v2636 = vrcp.pop %v2630
    %v2637 = vrcp.pop %v2633
    %v2638 = vmul.f32 %v2624, %v2634
    %v2639 = vmul.f32 %v2627, %v2635
    %v2640 = vmul.f32 %v2630, %v2636
    %v2641 = vmul.f32 %v2633, %v2637
    %v2642 = vsub.f32 2.0, %v2638
    %v2643 = vsub.f32 2.0, %v2639
    %v2644 = vsub.f32 2.0, %v2640
    %v2645 = vsub.f32 2.0, %v2641
    %v2646 = vmul.f32 %v2634, %v2642
    %v2647 = vmul.f32 %v2635, %v2643
    %v2648 = vmul.f32 %v2636, %v2644
    %v2649 = vmul.f32 %v2637, %v2645
    %v2650 = vmul.f32 %v2615, %v2646
    %v2651 = vmul.f32 %v2617, %v2647
    %v2652 = vmul.f32 %v2619, %v2648
    %v2653 = vmul.f32 %v2621, %v2649
    %2654 = vrot.lane.b32.xlu0 %v239, 40
    %v2655 = vpop.permute.xlu0 %2654
    %v2658 = vsel %vm260, %v2650, 0
    %2660 = vmatprep.subr.mxu0 0.0
    %2661 = vmatpush1.msra.mxu0 %v2655
    %2662 = vmatprep.subr.mxu0 0.0
    %2663 = vmatpush1.msra.mxu0 0.0
    %2664 = vmatprep.subr.mxu0 0.0
    %2665 = vmatpush1.msra.mxu0 0.0
    %2666 = vmatprep.subr.mxu0 0.0
    %2667 = vmatpush1.msra.mxu0 0.0
    %2668 = vmatprep.subr.mxu0 0.0
    %2669 = vmatpush1.msra.mxu0 0.0
    %2670 = vmatprep.subr.mxu0 0.0
    %2671 = vmatpush1.msra.mxu0 0.0
    %2672 = vmatprep.subr.mxu0 0.0
    %2673 = vmatpush1.msra.mxu0 0.0
    %2674 = vmatprep.subr.mxu0 0.0
    %2675 = vmatpush1.msra.mxu0 0.0
    %2676 = vmatprep.subr.mxu0 0.0
    %2677 = vmatpush1.msra.mxu0 0.0
    %2678 = vmatprep.subr.mxu0 0.0
    %2679 = vmatpush1.msra.mxu0 0.0
    %2680 = vmatprep.subr.mxu0 0.0
    %2681 = vmatpush1.msra.mxu0 0.0
    %2682 = vmatprep.subr.mxu0 0.0
    %2683 = vmatpush1.msra.mxu0 0.0
    %2684 = vmatprep.subr.mxu0 0.0
    %2685 = vmatpush1.msra.mxu0 0.0
    %2686 = vmatprep.subr.mxu0 0.0
    %2687 = vmatpush1.msra.mxu0 0.0
    %2688 = vmatprep.subr.mxu0 0.0
    %2689 = vmatpush1.msra.mxu0 0.0
    %2690 = vmatprep.subr.mxu0 0.0
    %2691 = vmatpush1.msra.mxu0 0.0
    %2692 = vmatprep.subr.mxu0 0.0
    %2693 = vmatpush1.msra.mxu0 0.0
    %2694 = vmatprep.subr.mxu0 0.0
    %2695 = vmatpush1.msra.mxu0 0.0
    %2696 = vmatprep.subr.mxu0 0.0
    %2697 = vmatpush1.msra.mxu0 0.0
    %2698 = vmatprep.subr.mxu0 0.0
    %2699 = vmatpush1.msra.mxu0 0.0
    %2700 = vmatprep.subr.mxu0 0.0
    %2701 = vmatpush1.msra.mxu0 0.0
    %2702 = vmatprep.subr.mxu0 0.0
    %2703 = vmatpush1.msra.mxu0 0.0
    %2704 = vmatprep.subr.mxu0 0.0
    %2705 = vmatpush1.msra.mxu0 0.0
    %2706 = vmatprep.subr.mxu0 0.0
    %2707 = vmatpush1.msra.mxu0 0.0
    %2708 = vmatprep.subr.mxu0 0.0
    %2709 = vmatpush1.msra.mxu0 0.0
    %2710 = vmatprep.subr.mxu0 0.0
    %2711 = vmatpush1.msra.mxu0 0.0
    %2712 = vmatprep.subr.mxu0 0.0
    %2713 = vmatpush1.msra.mxu0 0.0
    %2714 = vmatprep.subr.mxu0 0.0
    %2715 = vmatpush1.msra.mxu0 0.0
    %2716 = vmatprep.subr.mxu0 0.0
    %2717 = vmatpush1.msra.mxu0 0.0
    %2718 = vmatprep.subr.mxu0 0.0
    %2719 = vmatpush1.msra.mxu0 0.0
    %2720 = vmatprep.subr.mxu0 0.0
    %2721 = vmatpush1.msra.mxu0 0.0
    %2722 = vmatprep.subr.mxu0 0.0
    %2723 = vmatpush1.msra.mxu0 0.0
    %2724 = vmatprep.mubr.f32.mxu0 0.0
    %2725 = vmatmul.mubr.f32.gmra.mrb[0].mxu0 %v2658
    %v2726 = vpop.f32.mrb[0].mxu0
    %v2727 = vadd.f32 0.0, %v2726
    %v2728 = vpop.f32.mrb[0].mxu0
    %2729 = vdwg.mxu0
    %2730 = vrot.lane.b32.xlu0 %v244, 40
    %v2731 = vpop.permute.xlu0 %2730
    %v2734 = vsel %vm260, %v2651, 0
    %2736 = vmatprep.subr.mxu0 0.0
    %2737 = vmatpush1.msra.mxu0 %v2731
    %2738 = vmatprep.subr.mxu0 0.0
    %2739 = vmatpush1.msra.mxu0 0.0
    %2740 = vmatprep.subr.mxu0 0.0
    %2741 = vmatpush1.msra.mxu0 0.0
    %2742 = vmatprep.subr.mxu0 0.0
    %2743 = vmatpush1.msra.mxu0 0.0
    %2744 = vmatprep.subr.mxu0 0.0
    %2745 = vmatpush1.msra.mxu0 0.0
    %2746 = vmatprep.subr.mxu0 0.0
    %2747 = vmatpush1.msra.mxu0 0.0
    %2748 = vmatprep.subr.mxu0 0.0
    %2749 = vmatpush1.msra.mxu0 0.0
    %2750 = vmatprep.subr.mxu0 0.0
    %2751 = vmatpush1.msra.mxu0 0.0
    %2752 = vmatprep.subr.mxu0 0.0
    %2753 = vmatpush1.msra.mxu0 0.0
    %2754 = vmatprep.subr.mxu0 0.0
    %2755 = vmatpush1.msra.mxu0 0.0
    %2756 = vmatprep.subr.mxu0 0.0
    %2757 = vmatpush1.msra.mxu0 0.0
    %2758 = vmatprep.subr.mxu0 0.0
    %2759 = vmatpush1.msra.mxu0 0.0
    %2760 = vmatprep.subr.mxu0 0.0
    %2761 = vmatpush1.msra.mxu0 0.0
    %2762 = vmatprep.subr.mxu0 0.0
    %2763 = vmatpush1.msra.mxu0 0.0
    %2764 = vmatprep.subr.mxu0 0.0
    %2765 = vmatpush1.msra.mxu0 0.0
    %2766 = vmatprep.subr.mxu0 0.0
    %2767 = vmatpush1.msra.mxu0 0.0
    %2768 = vmatprep.subr.mxu0 0.0
    %2769 = vmatpush1.msra.mxu0 0.0
    %2770 = vmatprep.subr.mxu0 0.0
    %2771 = vmatpush1.msra.mxu0 0.0
    %2772 = vmatprep.subr.mxu0 0.0
    %2773 = vmatpush1.msra.mxu0 0.0
    %2774 = vmatprep.subr.mxu0 0.0
    %2775 = vmatpush1.msra.mxu0 0.0
    %2776 = vmatprep.subr.mxu0 0.0
    %2777 = vmatpush1.msra.mxu0 0.0
    %2778 = vmatprep.subr.mxu0 0.0
    %2779 = vmatpush1.msra.mxu0 0.0
    %2780 = vmatprep.subr.mxu0 0.0
    %2781 = vmatpush1.msra.mxu0 0.0
    %2782 = vmatprep.subr.mxu0 0.0
    %2783 = vmatpush1.msra.mxu0 0.0
    %2784 = vmatprep.subr.mxu0 0.0
    %2785 = vmatpush1.msra.mxu0 0.0
    %2786 = vmatprep.subr.mxu0 0.0
    %2787 = vmatpush1.msra.mxu0 0.0
    %2788 = vmatprep.subr.mxu0 0.0
    %2789 = vmatpush1.msra.mxu0 0.0
    %2790 = vmatprep.subr.mxu0 0.0
    %2791 = vmatpush1.msra.mxu0 0.0
    %2792 = vmatprep.subr.mxu0 0.0
    %2793 = vmatpush1.msra.mxu0 0.0
    %2794 = vmatprep.subr.mxu0 0.0
    %2795 = vmatpush1.msra.mxu0 0.0
    %2796 = vmatprep.subr.mxu0 0.0
    %2797 = vmatpush1.msra.mxu0 0.0
    %2798 = vmatprep.subr.mxu0 0.0
    %2799 = vmatpush1.msra.mxu0 0.0
    %2800 = vmatprep.mubr.f32.mxu0 0.0
    %2801 = vmatmul.mubr.f32.gmra.mrb[0].mxu0 %v2734
    %v2802 = vpop.f32.mrb[0].mxu0
    %v2803 = vadd.f32 0.0, %v2802
    %v2804 = vpop.f32.mrb[0].mxu0
    %2805 = vdwg.mxu0
    %2806 = vrot.lane.b32.xlu0 %v249, 40
    %v2807 = vpop.permute.xlu0 %2806
    %v2810 = vsel %vm260, %v2652, 0
    %2812 = vmatprep.subr.mxu0 0.0
    %2813 = vmatpush1.msra.mxu0 %v2807
    %2814 = vmatprep.subr.mxu0 0.0
    %2815 = vmatpush1.msra.mxu0 0.0
    %2816 = vmatprep.subr.mxu0 0.0
    %2817 = vmatpush1.msra.mxu0 0.0
    %2818 = vmatprep.subr.mxu0 0.0
    %2819 = vmatpush1.msra.mxu0 0.0
    %2820 = vmatprep.subr.mxu0 0.0
    %2821 = vmatpush1.msra.mxu0 0.0
    %2822 = vmatprep.subr.mxu0 0.0
    %2823 = vmatpush1.msra.mxu0 0.0
    %2824 = vmatprep.subr.mxu0 0.0
    %2825 = vmatpush1.msra.mxu0 0.0
    %2826 = vmatprep.subr.mxu0 0.0
    %2827 = vmatpush1.msra.mxu0 0.0
    %2828 = vmatprep.subr.mxu0 0.0
    %2829 = vmatpush1.msra.mxu0 0.0
    %2830 = vmatprep.subr.mxu0 0.0
    %2831 = vmatpush1.msra.mxu0 0.0
    %2832 = vmatprep.subr.mxu0 0.0
    %2833 = vmatpush1.msra.mxu0 0.0
    %2834 = vmatprep.subr.mxu0 0.0
    %2835 = vmatpush1.msra.mxu0 0.0
    %2836 = vmatprep.subr.mxu0 0.0
    %2837 = vmatpush1.msra.mxu0 0.0
    %2838 = vmatprep.subr.mxu0 0.0
    %2839 = vmatpush1.msra.mxu0 0.0
    %2840 = vmatprep.subr.mxu0 0.0
    %2841 = vmatpush1.msra.mxu0 0.0
    %2842 = vmatprep.subr.mxu0 0.0
    %2843 = vmatpush1.msra.mxu0 0.0
    %2844 = vmatprep.subr.mxu0 0.0
    %2845 = vmatpush1.msra.mxu0 0.0
    %2846 = vmatprep.subr.mxu0 0.0
    %2847 = vmatpush1.msra.mxu0 0.0
    %2848 = vmatprep.subr.mxu0 0.0
    %2849 = vmatpush1.msra.mxu0 0.0
    %2850 = vmatprep.subr.mxu0 0.0
    %2851 = vmatpush1.msra.mxu0 0.0
    %2852 = vmatprep.subr.mxu0 0.0
    %2853 = vmatpush1.msra.mxu0 0.0
    %2854 = vmatprep.subr.mxu0 0.0
    %2855 = vmatpush1.msra.mxu0 0.0
    %2856 = vmatprep.subr.mxu0 0.0
    %2857 = vmatpush1.msra.mxu0 0.0
    %2858 = vmatprep.subr.mxu0 0.0
    %2859 = vmatpush1.msra.mxu0 0.0
    %2860 = vmatprep.subr.mxu0 0.0
    %2861 = vmatpush1.msra.mxu0 0.0
    %2862 = vmatprep.subr.mxu0 0.0
    %2863 = vmatpush1.msra.mxu0 0.0
    %2864 = vmatprep.subr.mxu0 0.0
    %2865 = vmatpush1.msra.mxu0 0.0
    %2866 = vmatprep.subr.mxu0 0.0
    %2867 = vmatpush1.msra.mxu0 0.0
    %2868 = vmatprep.subr.mxu0 0.0
    %2869 = vmatpush1.msra.mxu0 0.0
    %2870 = vmatprep.subr.mxu0 0.0
    %2871 = vmatpush1.msra.mxu0 0.0
    %2872 = vmatprep.subr.mxu0 0.0
    %2873 = vmatpush1.msra.mxu0 0.0
    %2874 = vmatprep.subr.mxu0 0.0
    %2875 = vmatpush1.msra.mxu0 0.0
    %2876 = vmatprep.mubr.f32.mxu0 0.0
    %2877 = vmatmul.mubr.f32.gmra.mrb[0].mxu0 %v2810
    %v2878 = vpop.f32.mrb[0].mxu0
    %v2879 = vadd.f32 0.0, %v2878
    %v2880 = vpop.f32.mrb[0].mxu0
    %2881 = vdwg.mxu0
    %2882 = vrot.lane.b32.xlu0 %v254, 40
    %v2883 = vpop.permute.xlu0 %2882
    %v2886 = vsel %vm260, %v2653, 0
    %2888 = vmatprep.subr.mxu0 0.0
    %2889 = vmatpush1.msra.mxu0 %v2883
    %2890 = vmatprep.subr.mxu0 0.0
    %2891 = vmatpush1.msra.mxu0 0.0
    %2892 = vmatprep.subr.mxu0 0.0
    %2893 = vmatpush1.msra.mxu0 0.0
    %2894 = vmatprep.subr.mxu0 0.0
    %2895 = vmatpush1.msra.mxu0 0.0
    %2896 = vmatprep.subr.mxu0 0.0
    %2897 = vmatpush1.msra.mxu0 0.0
    %2898 = vmatprep.subr.mxu0 0.0
    %2899 = vmatpush1.msra.mxu0 0.0
    %2900 = vmatprep.subr.mxu0 0.0
    %2901 = vmatpush1.msra.mxu0 0.0
    %2902 = vmatprep.subr.mxu0 0.0
    %2903 = vmatpush1.msra.mxu0 0.0
    %2904 = vmatprep.subr.mxu0 0.0
    %2905 = vmatpush1.msra.mxu0 0.0
    %2906 = vmatprep.subr.mxu0 0.0
    %2907 = vmatpush1.msra.mxu0 0.0
    %2908 = vmatprep.subr.mxu0 0.0
    %2909 = vmatpush1.msra.mxu0 0.0
    %2910 = vmatprep.subr.mxu0 0.0
    %2911 = vmatpush1.msra.mxu0 0.0
    %2912 = vmatprep.subr.mxu0 0.0
    %2913 = vmatpush1.msra.mxu0 0.0
    %2914 = vmatprep.subr.mxu0 0.0
    %2915 = vmatpush1.msra.mxu0 0.0
    %2916 = vmatprep.subr.mxu0 0.0
    %2917 = vmatpush1.msra.mxu0 0.0
    %2918 = vmatprep.subr.mxu0 0.0
    %2919 = vmatpush1.msra.mxu0 0.0
    %2920 = vmatprep.subr.mxu0 0.0
    %2921 = vmatpush1.msra.mxu0 0.0
    %2922 = vmatprep.subr.mxu0 0.0
    %2923 = vmatpush1.msra.mxu0 0.0
    %2924 = vmatprep.subr.mxu0 0.0
    %2925 = vmatpush1.msra.mxu0 0.0
    %2926 = vmatprep.subr.mxu0 0.0
    %2927 = vmatpush1.msra.mxu0 0.0
    %2928 = vmatprep.subr.mxu0 0.0
    %2929 = vmatpush1.msra.mxu0 0.0
    %2930 = vmatprep.subr.mxu0 0.0
    %2931 = vmatpush1.msra.mxu0 0.0
    %2932 = vmatprep.subr.mxu0 0.0
    %2933 = vmatpush1.msra.mxu0 0.0
    %2934 = vmatprep.subr.mxu0 0.0
    %2935 = vmatpush1.msra.mxu0 0.0
    %2936 = vmatprep.subr.mxu0 0.0
    %2937 = vmatpush1.msra.mxu0 0.0
    %2938 = vmatprep.subr.mxu0 0.0
    %2939 = vmatpush1.msra.mxu0 0.0
    %2940 = vmatprep.subr.mxu0 0.0
    %2941 = vmatpush1.msra.mxu0 0.0
    %2942 = vmatprep.subr.mxu0 0.0
    %2943 = vmatpush1.msra.mxu0 0.0
    %2944 = vmatprep.subr.mxu0 0.0
    %2945 = vmatpush1.msra.mxu0 0.0
    %2946 = vmatprep.subr.mxu0 0.0
    %2947 = vmatpush1.msra.mxu0 0.0
    %2948 = vmatprep.subr.mxu0 0.0
    %2949 = vmatpush1.msra.mxu0 0.0
    %2950 = vmatprep.subr.mxu0 0.0
    %2951 = vmatpush1.msra.mxu0 0.0
    %2952 = vmatprep.mubr.f32.mxu0 0.0
    %2953 = vmatmul.mubr.f32.gmra.mrb[0].mxu0 %v2886
    %v2954 = vpop.f32.mrb[0].mxu0
    %v2955 = vadd.f32 0.0, %v2954
    %v2956 = vpop.f32.mrb[0].mxu0
    %2957 = vdwg.mxu0
    %2962 = vrot.lane.b32.xlu0 %v1375, 8
    %v2963 = vpop.permute.xlu0 %2962
    %2964 = vrot.lane.b32.xlu0 %v1451, 8
    %v2965 = vpop.permute.xlu0 %2964
    %2966 = vrot.lane.b32.xlu0 %v1527, 8
    %v2967 = vpop.permute.xlu0 %2966
    %2968 = vrot.lane.b32.xlu0 %v1603, 8
    %v2969 = vpop.permute.xlu0 %2968
    %2978 = vrot.lane.b32.xlu0 %v2051, 16
    %v2979 = vpop.permute.xlu0 %2978
    %2980 = vrot.lane.b32.xlu0 %v2127, 16
    %v2981 = vpop.permute.xlu0 %2980
    %2982 = vrot.lane.b32.xlu0 %v2203, 16
    %v2983 = vpop.permute.xlu0 %2982
    %2984 = vrot.lane.b32.xlu0 %v2279, 16
    %v2985 = vpop.permute.xlu0 %2984
    %2994 = vrot.lane.b32.xlu0 %v2727, 24
    %v2995 = vpop.permute.xlu0 %2994
    %2996 = vrot.lane.b32.xlu0 %v2803, 24
    %v2997 = vpop.permute.xlu0 %2996
    %2998 = vrot.lane.b32.xlu0 %v2879, 24
    %v2999 = vpop.permute.xlu0 %2998
    %3000 = vrot.lane.b32.xlu0 %v2955, 24
    %v3001 = vpop.permute.xlu0 %3000
    %v3006 = vsel %vm260, %v699, %v2963
    %v3007 = vsel %vm260, %v775, %v2965
    %v3008 = vsel %vm260, %v851, %v2967
    %v3009 = vsel %vm260, %v927, %v2969
    %v3010 = vsel %vm45, %v3006, %v2979
    %v3011 = vsel %vm45, %v3007, %v2981
    %v3012 = vsel %vm45, %v3008, %v2983
    %v3013 = vsel %vm45, %v3009, %v2985
    %vm3014 = vcmask 195584
    %v3015 = vsel %vm3014, %v3010, %v2995
    %v3016 = vsel %vm3014, %v3011, %v2997
    %v3017 = vsel %vm3014, %v3012, %v2999
    %v3018 = vsel %vm3014, %v3013, %v3001
    %v3019 = vld [vmem:[%s4] sm:$0xff]
    %v3020 = vld [vmem:[%s4 + $0x8] sm:$0xff]
    %v3021 = vld [vmem:[%s4 + $0x10] sm:$0xff]
    %v3022 = vld [vmem:[%s4 + $0x18] sm:$0xff]
    %v3023 = vlaneseq
    %v3024 = vshrl.u32 %v3023, 7
    %v3025 = vsub.s32 2, %v3024
    %v3026 = vrot.slane %v37, %v3025
    %v3028 = vsel %vm159, %v3015, 0
    %v3031 = vsel %vm159, %v3016, 0
    %v3034 = vsel %vm159, %v3017, 0
    %v3037 = vsel %vm159, %v3018, 0
    %3039 = vmatprep.subr.mxu0 0.0
    %3040 = vmatpush1.msra.mxu0 %v3019
    %3041 = vmatprep.subr.mxu0 0.0
    %3042 = vmatpush1.msra.mxu0 %v3020
    %3043 = vmatprep.subr.mxu0 0.0
    %3044 = vmatpush1.msra.mxu0 %v3021
    %3045 = vmatprep.subr.mxu0 0.0
    %3046 = vmatpush1.msra.mxu0 %v3022
    %3047 = vmatprep.subr.mxu0 0.0
    %3048 = vmatpush1.msra.mxu0 0.0
    %3049 = vmatprep.subr.mxu0 0.0
    %3050 = vmatpush1.msra.mxu0 0.0
    %3051 = vmatprep.subr.mxu0 0.0
    %3052 = vmatpush1.msra.mxu0 0.0
    %3053 = vmatprep.subr.mxu0 0.0
    %3054 = vmatpush1.msra.mxu0 0.0
    %3055 = vmatprep.subr.mxu0 0.0
    %3056 = vmatpush1.msra.mxu0 0.0
    %3057 = vmatprep.subr.mxu0 0.0
    %3058 = vmatpush1.msra.mxu0 0.0
    %3059 = vmatprep.subr.mxu0 0.0
    %3060 = vmatpush1.msra.mxu0 0.0
    %3061 = vmatprep.subr.mxu0 0.0
    %3062 = vmatpush1.msra.mxu0 0.0
    %3063 = vmatprep.subr.mxu0 0.0
    %3064 = vmatpush1.msra.mxu0 0.0
    %3065 = vmatprep.subr.mxu0 0.0
    %3066 = vmatpush1.msra.mxu0 0.0
    %3067 = vmatprep.subr.mxu0 0.0
    %3068 = vmatpush1.msra.mxu0 0.0
    %3069 = vmatprep.subr.mxu0 0.0
    %3070 = vmatpush1.msra.mxu0 0.0
    %3071 = vmatprep.subr.mxu0 0.0
    %3072 = vmatpush1.msra.mxu0 0.0
    %3073 = vmatprep.subr.mxu0 0.0
    %3074 = vmatpush1.msra.mxu0 0.0
    %3075 = vmatprep.subr.mxu0 0.0
    %3076 = vmatpush1.msra.mxu0 0.0
    %3077 = vmatprep.subr.mxu0 0.0
    %3078 = vmatpush1.msra.mxu0 0.0
    %3079 = vmatprep.subr.mxu0 0.0
    %3080 = vmatpush1.msra.mxu0 0.0
    %3081 = vmatprep.subr.mxu0 0.0
    %3082 = vmatpush1.msra.mxu0 0.0
    %3083 = vmatprep.subr.mxu0 0.0
    %3084 = vmatpush1.msra.mxu0 0.0
    %3085 = vmatprep.subr.mxu0 0.0
    %3086 = vmatpush1.msra.mxu0 0.0
    %3087 = vmatprep.subr.mxu0 0.0
    %3088 = vmatpush1.msra.mxu0 0.0
    %3089 = vmatprep.subr.mxu0 0.0
    %3090 = vmatpush1.msra.mxu0 0.0
    %3091 = vmatprep.subr.mxu0 0.0
    %3092 = vmatpush1.msra.mxu0 0.0
    %3093 = vmatprep.subr.mxu0 0.0
    %3094 = vmatpush1.msra.mxu0 0.0
    %3095 = vmatprep.subr.mxu0 0.0
    %3096 = vmatpush1.msra.mxu0 0.0
    %3097 = vmatprep.subr.mxu0 0.0
    %3098 = vmatpush1.msra.mxu0 0.0
    %3099 = vmatprep.subr.mxu0 0.0
    %3100 = vmatpush1.msra.mxu0 0.0
    %3101 = vmatprep.subr.mxu0 0.0
    %3102 = vmatpush1.msra.mxu0 0.0
    %3103 = vmatprep.mubr.f32.mxu0 0.0
    %3104 = vmatmul.mubr.f32.gmra.mrb[0].mxu0 %v3028
    %v3105 = vpop.f32.mrb[0].mxu0
    %v3106 = vadd.f32 %v3026, %v3105
    %v3107 = vpop.f32.mrb[0].mxu0
    %3108 = vmatprep.mubr.f32.mxu0 0.0
    %3109 = vmatmul.mubr.f32.gmra.mrb[0].mxu0 %v3031
    %v3110 = vpop.f32.mrb[0].mxu0
    %v3111 = vadd.f32 %v3026, %v3110
    %v3112 = vpop.f32.mrb[0].mxu0
    %3113 = vmatprep.mubr.f32.mxu0 0.0
    %3114 = vmatmul.mubr.f32.gmra.mrb[0].mxu0 %v3034
    %v3115 = vpop.f32.mrb[0].mxu0
    %v3116 = vadd.f32 %v3026, %v3115
    %v3117 = vpop.f32.mrb[0].mxu0
    %3118 = vmatprep.mubr.f32.mxu0 0.0
    %3119 = vmatmul.mubr.f32.gmra.mrb[0].mxu0 %v3037
    %v3120 = vpop.f32.mrb[0].mxu0
    %v3121 = vadd.f32 %v3026, %v3120
    %v3122 = vpop.f32.mrb[0].mxu0
    %3123 = vdwg.mxu0
    %v3124 = vadd.f32 %v147, %v3106
    %v3125 = vadd.f32 %v148, %v3111
    %v3126 = vadd.f32 %v149, %v3116
    %v3127 = vadd.f32 %v150, %v3121
    %v3128 = vsel %vm159, %v3124, 0.0
    %3129 = vadd.xlane.f32.xlu0 %v3128
    %v3130 = vpop.xlane.xlu0 %3129
    %v3131 = vsel %vm159, %v3125, 0.0
    %3132 = vadd.xlane.f32.xlu0 %v3131
    %v3133 = vpop.xlane.xlu0 %3132
    %v3134 = vsel %vm159, %v3126, 0.0
    %3135 = vadd.xlane.f32.xlu0 %v3134
    %v3136 = vpop.xlane.xlu0 %3135
    %v3137 = vsel %vm159, %v3127, 0.0
    %3138 = vadd.xlane.f32.xlu0 %v3137
    %v3139 = vpop.xlane.xlu0 %3138
    %v3140 = vrcp.pop 32.0
    %v3141 = vmul.f32 %v3130, %v3140
    %v3142 = vmul.f32 %v3133, %v3140
    %v3143 = vmul.f32 %v3136, %v3140
    %v3144 = vmul.f32 %v3139, %v3140
    %v3145 = vsub.f32 %v3124, %v3141
    %v3146 = vsub.f32 %v3125, %v3142
    %v3147 = vsub.f32 %v3126, %v3143
    %v3148 = vsub.f32 %v3127, %v3144
    %v3149 = vmul.f32 %v3145, %v3145
    %v3150 = vmul.f32 %v3146, %v3146
    %v3151 = vmul.f32 %v3147, %v3147
    %v3152 = vmul.f32 %v3148, %v3148
    %v3153 = vsel %vm159, %v3149, 0.0
    %3154 = vadd.xlane.f32.xlu0 %v3153
    %v3155 = vpop.xlane.xlu0 %3154
    %v3156 = vsel %vm159, %v3150, 0.0
    %3157 = vadd.xlane.f32.xlu0 %v3156
    %v3158 = vpop.xlane.xlu0 %3157
    %v3159 = vsel %vm159, %v3151, 0.0
    %3160 = vadd.xlane.f32.xlu0 %v3159
    %v3161 = vpop.xlane.xlu0 %3160
    %v3162 = vsel %vm159, %v3152, 0.0
    %3163 = vadd.xlane.f32.xlu0 %v3162
    %v3164 = vpop.xlane.xlu0 %3163
    %v3165 = vmul.f32 %v3155, %v3140
    %v3166 = vmul.f32 %v3158, %v3140
    %v3167 = vmul.f32 %v3161, %v3140
    %v3168 = vmul.f32 %v3164, %v3140
    %v3169 = vadd.f32 %v3165, 1e-05
    %v3170 = vadd.f32 %v3166, 1e-05
    %v3171 = vadd.f32 %v3167, 1e-05
    %v3172 = vadd.f32 %v3168, 1e-05
    %v3173 = vrsqrt.pop %v3169
    %v3174 = vrsqrt.pop %v3170
    %v3175 = vrsqrt.pop %v3171
    %v3176 = vrsqrt.pop %v3172
    %v3177 = vmul.f32 %v3145, %v3173
    %v3178 = vmul.f32 %v3146, %v3174
    %v3179 = vmul.f32 %v3147, %v3175
    %v3180 = vmul.f32 %v3148, %v3176
    %v3181 = vlaneseq
    %v3182 = vshrl.u32 %v3181, 7
    %v3183 = vsub.s32 3, %v3182
    %v3184 = vrot.slane %v37, %v3183
    %v3185 = vmul.f32 %v3177, %v3184
    %v3186 = vmul.f32 %v3178, %v3184
    %v3187 = vmul.f32 %v3179, %v3184
    %v3188 = vmul.f32 %v3180, %v3184
    %v3189 = vlaneseq
    %v3190 = vshrl.u32 %v3189, 7
    %v3191 = vsub.s32 4, %v3190
    %v3192 = vrot.slane %v37, %v3191
    %v3193 = vadd.f32 %v3185, %v3192
    %v3194 = vadd.f32 %v3186, %v3192
    %v3195 = vadd.f32 %v3187, %v3192
    %v3196 = vadd.f32 %v3188, %v3192
    %v3197 = vld [vmem:[%s5] sm:$0xff]
    %v3198 = vld [vmem:[%s5 + $0x8] sm:$0xff]
    %v3199 = vld [vmem:[%s5 + $0x10] sm:$0xff]
    %v3200 = vld [vmem:[%s5 + $0x18] sm:$0xff]
    %v3201 = vlaneseq
    %v3202 = vshrl.u32 %v3201, 7
    %v3203 = vsub.s32 5, %v3202
    %v3204 = vrot.slane %v37, %v3203
    %v3206 = vsel %vm159, %v3193, 0
    %v3209 = vsel %vm159, %v3194, 0
    %v3212 = vsel %vm159, %v3195, 0
    %v3215 = vsel %vm159, %v3196, 0
    %3217 = vmatprep.subr.mxu0 0.0
    %3218 = vmatpush1.msra.mxu0 %v3197
    %3219 = vmatprep.subr.mxu0 0.0
    %3220 = vmatpush1.msra.mxu0 %v3198
    %3221 = vmatprep.subr.mxu0 0.0
    %3222 = vmatpush1.msra.mxu0 %v3199
    %3223 = vmatprep.subr.mxu0 0.0
    %3224 = vmatpush1.msra.mxu0 %v3200
    %3225 = vmatprep.subr.mxu0 0.0
    %3226 = vmatpush1.msra.mxu0 0.0
    %3227 = vmatprep.subr.mxu0 0.0
    %3228 = vmatpush1.msra.mxu0 0.0
    %3229 = vmatprep.subr.mxu0 0.0
    %3230 = vmatpush1.msra.mxu0 0.0
    %3231 = vmatprep.subr.mxu0 0.0
    %3232 = vmatpush1.msra.mxu0 0.0
    %3233 = vmatprep.subr.mxu0 0.0
    %3234 = vmatpush1.msra.mxu0 0.0
    %3235 = vmatprep.subr.mxu0 0.0
    %3236 = vmatpush1.msra.mxu0 0.0
    %3237 = vmatprep.subr.mxu0 0.0
    %3238 = vmatpush1.msra.mxu0 0.0
    %3239 = vmatprep.subr.mxu0 0.0
    %3240 = vmatpush1.msra.mxu0 0.0
    %3241 = vmatprep.subr.mxu0 0.0
    %3242 = vmatpush1.msra.mxu0 0.0
    %3243 = vmatprep.subr.mxu0 0.0
    %3244 = vmatpush1.msra.mxu0 0.0
    %3245 = vmatprep.subr.mxu0 0.0
    %3246 = vmatpush1.msra.mxu0 0.0
    %3247 = vmatprep.subr.mxu0 0.0
    %3248 = vmatpush1.msra.mxu0 0.0
    %3249 = vmatprep.subr.mxu0 0.0
    %3250 = vmatpush1.msra.mxu0 0.0
    %3251 = vmatprep.subr.mxu0 0.0
    %3252 = vmatpush1.msra.mxu0 0.0
    %3253 = vmatprep.subr.mxu0 0.0
    %3254 = vmatpush1.msra.mxu0 0.0
    %3255 = vmatprep.subr.mxu0 0.0
    %3256 = vmatpush1.msra.mxu0 0.0
    %3257 = vmatprep.subr.mxu0 0.0
    %3258 = vmatpush1.msra.mxu0 0.0
    %3259 = vmatprep.subr.mxu0 0.0
    %3260 = vmatpush1.msra.mxu0 0.0
    %3261 = vmatprep.subr.mxu0 0.0
    %3262 = vmatpush1.msra.mxu0 0.0
    %3263 = vmatprep.subr.mxu0 0.0
    %3264 = vmatpush1.msra.mxu0 0.0
    %3265 = vmatprep.subr.mxu0 0.0
    %3266 = vmatpush1.msra.mxu0 0.0
    %3267 = vmatprep.subr.mxu0 0.0
    %3268 = vmatpush1.msra.mxu0 0.0
    %3269 = vmatprep.subr.mxu0 0.0
    %3270 = vmatpush1.msra.mxu0 0.0
    %3271 = vmatprep.subr.mxu0 0.0
    %3272 = vmatpush1.msra.mxu0 0.0
    %3273 = vmatprep.subr.mxu0 0.0
    %3274 = vmatpush1.msra.mxu0 0.0
    %3275 = vmatprep.subr.mxu0 0.0
    %3276 = vmatpush1.msra.mxu0 0.0
    %3277 = vmatprep.subr.mxu0 0.0
    %3278 = vmatpush1.msra.mxu0 0.0
    %3279 = vmatprep.subr.mxu0 0.0
    %3280 = vmatpush1.msra.mxu0 0.0
    %3281 = vmatprep.mubr.f32.mxu0 0.0
    %3282 = vmatmul.mubr.f32.gmra.mrb[0].mxu0 %v3206
    %v3283 = vpop.f32.mrb[0].mxu0
    %v3284 = vadd.f32 %v3204, %v3283
    %v3285 = vpop.f32.mrb[0].mxu0
    %3286 = vmatprep.mubr.f32.mxu0 0.0
    %3287 = vmatmul.mubr.f32.gmra.mrb[0].mxu0 %v3209
    %v3288 = vpop.f32.mrb[0].mxu0
    %v3289 = vadd.f32 %v3204, %v3288
    %v3290 = vpop.f32.mrb[0].mxu0
    %3291 = vmatprep.mubr.f32.mxu0 0.0
    %3292 = vmatmul.mubr.f32.gmra.mrb[0].mxu0 %v3212
    %v3293 = vpop.f32.mrb[0].mxu0
    %v3294 = vadd.f32 %v3204, %v3293
    %v3295 = vpop.f32.mrb[0].mxu0
    %3296 = vmatprep.mubr.f32.mxu0 0.0
    %3297 = vmatmul.mubr.f32.gmra.mrb[0].mxu0 %v3215
    %v3298 = vpop.f32.mrb[0].mxu0
    %v3299 = vadd.f32 %v3204, %v3298
    %v3300 = vpop.f32.mrb[0].mxu0
    %3301 = vdwg.mxu0
    %v3302 = vmax.f32 %v3284, 0.0
    %v3303 = vmax.f32 %v3289, 0.0
    %v3304 = vmax.f32 %v3294, 0.0
    %v3305 = vmax.f32 %v3299, 0.0
    %v3306 = vld [vmem:[%s6] sm:$0xff]
    %v3307 = vld [vmem:[%s6 + $0x8] sm:$0xff]
    %v3308 = vld [vmem:[%s6 + $0x10] sm:$0xff]
    %v3309 = vld [vmem:[%s6 + $0x18] sm:$0xff]
    %v3310 = vld [vmem:[%s6 + $0x20] sm:$0xff]
    %v3311 = vld [vmem:[%s6 + $0x28] sm:$0xff]
    %v3312 = vld [vmem:[%s6 + $0x30] sm:$0xff]
    %v3313 = vld [vmem:[%s6 + $0x38] sm:$0xff]
    %v3314 = vlaneseq
    %v3315 = vshrl.u32 %v3314, 7
    %v3316 = vsub.s32 6, %v3315
    %v3317 = vrot.slane %v37, %v3316
    %vm3318 = vcmask 523264
    %v3320 = vsel %vm3318, %v3302, 0
    %v3323 = vsel %vm3318, %v3303, 0
    %v3326 = vsel %vm3318, %v3304, 0
    %v3329 = vsel %vm3318, %v3305, 0
    %3331 = vmatprep.subr.mxu0 0.0
    %3332 = vmatpush1.msra.mxu0 %v3306
    %3333 = vmatprep.subr.mxu0 0.0
    %3334 = vmatpush1.msra.mxu0 %v3307
    %3335 = vmatprep.subr.mxu0 0.0
    %3336 = vmatpush1.msra.mxu0 %v3308
    %3337 = vmatprep.subr.mxu0 0.0
    %3338 = vmatpush1.msra.mxu0 %v3309
    %3339 = vmatprep.subr.mxu0 0.0
    %3340 = vmatpush1.msra.mxu0 %v3310
    %3341 = vmatprep.subr.mxu0 0.0
    %3342 = vmatpush1.msra.mxu0 %v3311
    %3343 = vmatprep.subr.mxu0 0.0
    %3344 = vmatpush1.msra.mxu0 %v3312
    %3345 = vmatprep.subr.mxu0 0.0
    %3346 = vmatpush1.msra.mxu0 %v3313
    %3347 = vmatprep.subr.mxu0 0.0
    %3348 = vmatpush1.msra.mxu0 0.0
    %3349 = vmatprep.subr.mxu0 0.0
    %3350 = vmatpush1.msra.mxu0 0.0
    %3351 = vmatprep.subr.mxu0 0.0
    %3352 = vmatpush1.msra.mxu0 0.0
    %3353 = vmatprep.subr.mxu0 0.0
    %3354 = vmatpush1.msra.mxu0 0.0
    %3355 = vmatprep.subr.mxu0 0.0
    %3356 = vmatpush1.msra.mxu0 0.0
    %3357 = vmatprep.subr.mxu0 0.0
    %3358 = vmatpush1.msra.mxu0 0.0
    %3359 = vmatprep.subr.mxu0 0.0
    %3360 = vmatpush1.msra.mxu0 0.0
    %3361 = vmatprep.subr.mxu0 0.0
    %3362 = vmatpush1.msra.mxu0 0.0
    %3363 = vmatprep.subr.mxu0 0.0
    %3364 = vmatpush1.msra.mxu0 0.0
    %3365 = vmatprep.subr.mxu0 0.0
    %3366 = vmatpush1.msra.mxu0 0.0
    %3367 = vmatprep.subr.mxu0 0.0
    %3368 = vmatpush1.msra.mxu0 0.0
    %3369 = vmatprep.subr.mxu0 0.0
    %3370 = vmatpush1.msra.mxu0 0.0
    %3371 = vmatprep.subr.mxu0 0.0
    %3372 = vmatpush1.msra.mxu0 0.0
    %3373 = vmatprep.subr.mxu0 0.0
    %3374 = vmatpush1.msra.mxu0 0.0
    %3375 = vmatprep.subr.mxu0 0.0
    %3376 = vmatpush1.msra.mxu0 0.0
    %3377 = vmatprep.subr.mxu0 0.0
    %3378 = vmatpush1.msra.mxu0 0.0
    %3379 = vmatprep.subr.mxu0 0.0
    %3380 = vmatpush1.msra.mxu0 0.0
    %3381 = vmatprep.subr.mxu0 0.0
    %3382 = vmatpush1.msra.mxu0 0.0
    %3383 = vmatprep.subr.mxu0 0.0
    %3384 = vmatpush1.msra.mxu0 0.0
    %3385 = vmatprep.subr.mxu0 0.0
    %3386 = vmatpush1.msra.mxu0 0.0
    %3387 = vmatprep.subr.mxu0 0.0
    %3388 = vmatpush1.msra.mxu0 0.0
    %3389 = vmatprep.subr.mxu0 0.0
    %3390 = vmatpush1.msra.mxu0 0.0
    %3391 = vmatprep.subr.mxu0 0.0
    %3392 = vmatpush1.msra.mxu0 0.0
    %3393 = vmatprep.subr.mxu0 0.0
    %3394 = vmatpush1.msra.mxu0 0.0
    %3395 = vmatprep.mubr.f32.mxu0 0.0
    %3396 = vmatmul.mubr.f32.gmra.mrb[0].mxu0 %v3320
    %v3397 = vpop.f32.mrb[0].mxu0
    %v3398 = vadd.f32 %v3317, %v3397
    %v3399 = vpop.f32.mrb[0].mxu0
    %3400 = vmatprep.mubr.f32.mxu0 0.0
    %3401 = vmatmul.mubr.f32.gmra.mrb[0].mxu0 %v3323
    %v3402 = vpop.f32.mrb[0].mxu0
    %v3403 = vadd.f32 %v3317, %v3402
    %v3404 = vpop.f32.mrb[0].mxu0
    %3405 = vmatprep.mubr.f32.mxu0 0.0
    %3406 = vmatmul.mubr.f32.gmra.mrb[0].mxu0 %v3326
    %v3407 = vpop.f32.mrb[0].mxu0
    %v3408 = vadd.f32 %v3317, %v3407
    %v3409 = vpop.f32.mrb[0].mxu0
    %3410 = vmatprep.mubr.f32.mxu0 0.0
    %3411 = vmatmul.mubr.f32.gmra.mrb[0].mxu0 %v3329
    %v3412 = vpop.f32.mrb[0].mxu0
    %v3413 = vadd.f32 %v3317, %v3412
    %v3414 = vpop.f32.mrb[0].mxu0
    %3415 = vdwg.mxu0
    %v3416 = vadd.f32 %v3193, %v3398
    %v3417 = vadd.f32 %v3194, %v3403
    %v3418 = vadd.f32 %v3195, %v3408
    %v3419 = vadd.f32 %v3196, %v3413
    %v3420 = vsel %vm159, %v3416, 0.0
    %3421 = vadd.xlane.f32.xlu0 %v3420
    %v3422 = vpop.xlane.xlu0 %3421
    %v3423 = vsel %vm159, %v3417, 0.0
    %3424 = vadd.xlane.f32.xlu0 %v3423
    %v3425 = vpop.xlane.xlu0 %3424
    %v3426 = vsel %vm159, %v3418, 0.0
    %3427 = vadd.xlane.f32.xlu0 %v3426
    %v3428 = vpop.xlane.xlu0 %3427
    %v3429 = vsel %vm159, %v3419, 0.0
    %3430 = vadd.xlane.f32.xlu0 %v3429
    %v3431 = vpop.xlane.xlu0 %3430
    %v3432 = vmul.f32 %v3422, %v3140
    %v3433 = vmul.f32 %v3425, %v3140
    %v3434 = vmul.f32 %v3428, %v3140
    %v3435 = vmul.f32 %v3431, %v3140
    %v3436 = vsub.f32 %v3416, %v3432
    %v3437 = vsub.f32 %v3417, %v3433
    %v3438 = vsub.f32 %v3418, %v3434
    %v3439 = vsub.f32 %v3419, %v3435
    %v3440 = vmul.f32 %v3436, %v3436
    %v3441 = vmul.f32 %v3437, %v3437
    %v3442 = vmul.f32 %v3438, %v3438
    %v3443 = vmul.f32 %v3439, %v3439
    %v3444 = vsel %vm159, %v3440, 0.0
    %3445 = vadd.xlane.f32.xlu0 %v3444
    %v3446 = vpop.xlane.xlu0 %3445
    %v3447 = vsel %vm159, %v3441, 0.0
    %3448 = vadd.xlane.f32.xlu0 %v3447
    %v3449 = vpop.xlane.xlu0 %3448
    %v3450 = vsel %vm159, %v3442, 0.0
    %3451 = vadd.xlane.f32.xlu0 %v3450
    %v3452 = vpop.xlane.xlu0 %3451
    %v3453 = vsel %vm159, %v3443, 0.0
    %3454 = vadd.xlane.f32.xlu0 %v3453
    %v3455 = vpop.xlane.xlu0 %3454
    %v3456 = vmul.f32 %v3446, %v3140
    %v3457 = vmul.f32 %v3449, %v3140
    %v3458 = vmul.f32 %v3452, %v3140
    %v3459 = vmul.f32 %v3455, %v3140
    %v3460 = vadd.f32 %v3456, 1e-05
    %v3461 = vadd.f32 %v3457, 1e-05
    %v3462 = vadd.f32 %v3458, 1e-05
    %v3463 = vadd.f32 %v3459, 1e-05
    %v3464 = vrsqrt.pop %v3460
    %v3465 = vrsqrt.pop %v3461
    %v3466 = vrsqrt.pop %v3462
    %v3467 = vrsqrt.pop %v3463
    %v3468 = vmul.f32 %v3436, %v3464
    %v3469 = vmul.f32 %v3437, %v3465
    %v3470 = vmul.f32 %v3438, %v3466
    %v3471 = vmul.f32 %v3439, %v3467
    %v3472 = vlaneseq
    %v3473 = vshrl.u32 %v3472, 7
    %v3474 = vsub.s32 7, %v3473
    %v3475 = vrot.slane %v37, %v3474
    %v3476 = vmul.f32 %v3468, %v3475
    %v3477 = vmul.f32 %v3469, %v3475
    %v3478 = vmul.f32 %v3470, %v3475
    %v3479 = vmul.f32 %v3471, %v3475
    %v3480 = vlaneseq
    %v3481 = vshrl.u32 %v3480, 7
    %v3482 = vsub.s32 0, %v3481
    %v3483 = vrot.slane %v38, %v3482
    %v3484 = vadd.f32 %v3476, %v3483
    %v3485 = vadd.f32 %v3477, %v3483
    %v3486 = vadd.f32 %v3478, %v3483
    %v3487 = vadd.f32 %v3479, %v3483
    %v3488 = vld [vmem:[%s7] sm:$0xff]
    %v3489 = vld [vmem:[%s7 + $0x8] sm:$0xff]
    %v3490 = vld [vmem:[%s7 + $0x10] sm:$0xff]
    %v3491 = vld [vmem:[%s7 + $0x18] sm:$0xff]
    %v3492 = vlaneseq
    %v3493 = vshrl.u32 %v3492, 7
    %v3494 = vsub.s32 1, %v3493
    %v3495 = vrot.slane %v38, %v3494
    %v3497 = vsel %vm159, %v3484, 0
    %v3500 = vsel %vm159, %v3485, 0
    %v3503 = vsel %vm159, %v3486, 0
    %v3506 = vsel %vm159, %v3487, 0
    %3508 = vmatprep.subr.mxu0 0.0
    %3509 = vmatpush1.msra.mxu0 %v3488
    %3510 = vmatprep.subr.mxu0 0.0
    %3511 = vmatpush1.msra.mxu0 %v3489
    %3512 = vmatprep.subr.mxu0 0.0
    %3513 = vmatpush1.msra.mxu0 %v3490
    %3514 = vmatprep.subr.mxu0 0.0
    %3515 = vmatpush1.msra.mxu0 %v3491
    %3516 = vmatprep.subr.mxu0 0.0
    %3517 = vmatpush1.msra.mxu0 0.0
    %3518 = vmatprep.subr.mxu0 0.0
    %3519 = vmatpush1.msra.mxu0 0.0
    %3520 = vmatprep.subr.mxu0 0.0
    %3521 = vmatpush1.msra.mxu0 0.0
    %3522 = vmatprep.subr.mxu0 0.0
    %3523 = vmatpush1.msra.mxu0 0.0
    %3524 = vmatprep.subr.mxu0 0.0
    %3525 = vmatpush1.msra.mxu0 0.0
    %3526 = vmatprep.subr.mxu0 0.0
    %3527 = vmatpush1.msra.mxu0 0.0
    %3528 = vmatprep.subr.mxu0 0.0
    %3529 = vmatpush1.msra.mxu0 0.0
    %3530 = vmatprep.subr.mxu0 0.0
    %3531 = vmatpush1.msra.mxu0 0.0
    %3532 = vmatprep.subr.mxu0 0.0
    %3533 = vmatpush1.msra.mxu0 0.0
    %3534 = vmatprep.subr.mxu0 0.0
    %3535 = vmatpush1.msra.mxu0 0.0
    %3536 = vmatprep.subr.mxu0 0.0
    %3537 = vmatpush1.msra.mxu0 0.0
    %3538 = vmatprep.subr.mxu0 0.0
    %3539 = vmatpush1.msra.mxu0 0.0
    %3540 = vmatprep.subr.mxu0 0.0
    %3541 = vmatpush1.msra.mxu0 0.0
    %3542 = vmatprep.subr.mxu0 0.0
    %3543 = vmatpush1.msra.mxu0 0.0
    %3544 = vmatprep.subr.mxu0 0.0
    %3545 = vmatpush1.msra.mxu0 0.0
    %3546 = vmatprep.subr.mxu0 0.0
    %3547 = vmatpush1.msra.mxu0 0.0
    %3548 = vmatprep.subr.mxu0 0.0
    %3549 = vmatpush1.msra.mxu0 0.0
    %3550 = vmatprep.subr.mxu0 0.0
    %3551 = vmatpush1.msra.mxu0 0.0
    %3552 = vmatprep.subr.mxu0 0.0
    %3553 = vmatpush1.msra.mxu0 0.0
    %3554 = vmatprep.subr.mxu0 0.0
    %3555 = vmatpush1.msra.mxu0 0.0
    %3556 = vmatprep.subr.mxu0 0.0
    %3557 = vmatpush1.msra.mxu0 0.0
    %3558 = vmatprep.subr.mxu0 0.0
    %3559 = vmatpush1.msra.mxu0 0.0
    %3560 = vmatprep.subr.mxu0 0.0
    %3561 = vmatpush1.msra.mxu0 0.0
    %3562 = vmatprep.subr.mxu0 0.0
    %3563 = vmatpush1.msra.mxu0 0.0
    %3564 = vmatprep.subr.mxu0 0.0
    %3565 = vmatpush1.msra.mxu0 0.0
    %3566 = vmatprep.subr.mxu0 0.0
    %3567 = vmatpush1.msra.mxu0 0.0
    %3568 = vmatprep.subr.mxu0 0.0
    %3569 = vmatpush1.msra.mxu0 0.0
    %3570 = vmatprep.subr.mxu0 0.0
    %3571 = vmatpush1.msra.mxu0 0.0
    %3572 = vmatprep.mubr.f32.mxu0 0.0
    %3573 = vmatmul.mubr.f32.gmra.mrb[0].mxu0 %v3497
    %v3574 = vpop.f32.mrb[0].mxu0
    %v3575 = vadd.f32 %v3495, %v3574
    %v3576 = vpop.f32.mrb[0].mxu0
    %3577 = vmatprep.mubr.f32.mxu0 0.0
    %3578 = vmatmul.mubr.f32.gmra.mrb[0].mxu0 %v3500
    %v3579 = vpop.f32.mrb[0].mxu0
    %v3580 = vadd.f32 %v3495, %v3579
    %v3581 = vpop.f32.mrb[0].mxu0
    %3582 = vmatprep.mubr.f32.mxu0 0.0
    %3583 = vmatmul.mubr.f32.gmra.mrb[0].mxu0 %v3503
    %v3584 = vpop.f32.mrb[0].mxu0
    %v3585 = vadd.f32 %v3495, %v3584
    %v3586 = vpop.f32.mrb[0].mxu0
    %3587 = vmatprep.mubr.f32.mxu0 0.0
    %3588 = vmatmul.mubr.f32.gmra.mrb[0].mxu0 %v3506
    %v3589 = vpop.f32.mrb[0].mxu0
    %v3590 = vadd.f32 %v3495, %v3589
    %v3591 = vpop.f32.mrb[0].mxu0
    %3592 = vdwg.mxu0
    %v3593 = vsub.f32 %v3575, %v3585
    %v3594 = vsub.f32 %v3580, %v3590
    %v3595 = vmul.f32 %v3593, %v3593
    %v3596 = vmul.f32 %v3594, %v3594
    %vm3597 = vcmask 31744
    %v3598 = vsel %vm3597, %v3595, 0.0
    %3599 = vadd.xlane.f32.xlu0 %v3598
    %v3600 = vpop.xlane.xlu0 %3599
    %v3601 = vsel %vm3597, %v3596, 0.0
    %3602 = vadd.xlane.f32.xlu0 %v3601
    %v3603 = vpop.xlane.xlu0 %3602
    %v3604 = vadd.f32 %v3600, %v3603
    %v3605 = vrot.slane %v3604, 4
    %v3606 = vadd.f32 %v3604, %v3605
    %v3607 = vrot.slane %v3606, 2
    %v3608 = vadd.f32 %v3606, %v3607
    %v3609 = vrot.slane %v3608, 1
    %v3610 = vadd.f32 %v3608, %v3609
    %v3611 = vmul.f32 %v3610, 0.015625
    %vm3612 = vcmask 0
    %3613 = vst.msk [vmem:[#allocation2] sm:$0x1] %vm3612, %v3611
    // Predicated region
    $region38: #{transformer_formant_mse_loss.1} parent=1 // pred_check
      _
    $region39: #{transformer_formant_mse_loss.1} parent=1 // pred_check_branch
      %3615 = sbr.rel (0) target = $region41
    $region40: #{transformer_formant_mse_loss.1} parent=1 // pred_region
      %s3617 = ssub.s32 16, 16
      %3618 = vsyncadd [#allocation3], %s3617
      %s3620 = sshll.u32 [#allocation2], 4
      %s3621 = int_to_ptr.vmem [resolvable:$true] %s3620
      %3623 = dma.vmem_to_hbm [thread:$0]  %s3621, 16, %s9, [#allocation3]
    $region41: #{transformer_formant_mse_loss.1} parent=1 // pred_fallthru
      _
    // Predicated region
    $region42: #{transformer_formant_mse_loss.1} parent=1 // pred_check
      _
    $region43: #{transformer_formant_mse_loss.1} parent=1 // pred_check_branch
      %3625 = sbr.rel (0) target = $region45
    $region44: #{transformer_formant_mse_loss.1} parent=1 // pred_region
      %3626 = dma.done [#allocation3], 16
    $region45: #{transformer_formant_mse_loss.1} parent=1 // pred_fallthru
      _
    %3627 = vsyncpa [#allocation3], 1

</llo_original>
